<compile_context>
chip_gen: v7x
topology: tpu7x:2x2x1
jax: 0.10.0
libtpu: 0.0.40
codegen_flags: <defaults>
</compile_context>

<pallas_src>
import functools

import jax
import jax.numpy as jnp
from jax.experimental import pallas as pl
from jax.experimental.pallas import tpu as pltpu

EPS = 1e-5  # ttnn.layer_norm epsilon in the module


def _round_up(x, m):
    return ((x + m - 1) // m) * m


def _pick_tile(dim, target, granularity):
    """Largest t <= target with t % granularity == 0 and dim % t == 0; else full dim."""
    if dim <= target:
        return dim
    t = (target // granularity) * granularity
    while t >= granularity:
        if dim % t == 0:
            return t
        t -= granularity
    # TODO(synk): pad awkward dims in glue instead of falling back to one full-dim block.
    return dim


def _head_group(num_heads, head_dim):
    """Smallest head group whose lane width is a multiple of 256 (v6e/v7x MXU width),
    falling back to 128, else all heads (full-embed block is still legal)."""
    for lane_target in (256, 128):
        for g in range(1, num_heads + 1):
            if num_heads % g == 0 and (g * head_dim) % lane_target == 0:
                return g
    return num_heads


def _tpu_cfg():
    vmem_cap = None
    try:
        vmem_cap = getattr(pltpu.get_tpu_info(), "vmem_capacity_bytes", None)
    except Exception:
        vmem_cap = None
    if vmem_cap is not None and vmem_cap >= 100 * 1024 * 1024:
        # v5e / v6e: 128 MiB physical VMEM -> bigger tiles, higher scoped limit.
        return dict(vmem=80 * 1024 * 1024, tm=512, tn=1024, tf=1024, tq=256, tk=512)
    # v7x (64 MiB physical) or unknown hardware: conservative tiles, bounded budget.
    return dict(vmem=44 * 1024 * 1024, tm=256, tn=512, tf=512, tq=256, tk=512)


_CFG = _tpu_cfg()


def _compiler_params(dim_sem):
    return pltpu.CompilerParams(
        dimension_semantics=dim_sem, vmem_limit_bytes=_CFG["vmem"])


# ----------------------------------------------------------------------------
# Kernels
# ----------------------------------------------------------------------------
def _layernorm_f32(x, g, b):
    mean = jnp.mean(x, axis=-1, keepdims=True)
    xc = x - mean
    var = jnp.mean(xc * xc, axis=-1, keepdims=True)
    return xc * jax.lax.rsqrt(var + EPS) * g + b


def _ln_qkv_kernel(x_ref, g_ref, b_ref, wq_ref, bq_ref, wk_ref, wv_ref, bv_ref,
                   q_ref, k_ref, v_ref, ln_ref):
    # Fused LayerNorm prologue + three projections; LN computed once per row tile and
    # cached in VMEM across the output-feature ("arbitrary") axis.
    @pl.when(pl.program_id(1) == 0)
    def _():
        ln = _layernorm_f32(x_ref[...].astype(jnp.float32), g_ref[...], b_ref[...])
        ln_ref[...] = ln.astype(ln_ref.dtype)

    ln = ln_ref[...]
    q = jnp.dot(ln, wq_ref[...], preferred_element_type=jnp.float32) + bq_ref[...]
    k = jnp.dot(ln, wk_ref[...], preferred_element_type=jnp.float32)          # no bias
    v = jnp.dot(ln, wv_ref[...], preferred_element_type=jnp.float32) + bv_ref[...]
    q_ref[...] = q.astype(q_ref.dtype)
    k_ref[...] = k.astype(k_ref.dtype)
    v_ref[...] = v.astype(v_ref.dtype)


def _ln_matmul_kernel(x_ref, g_ref, b_ref, w_ref, bias_ref, o_ref, ln_ref):
    # Fused LayerNorm prologue + single projection (cross-attn Q), LN cached in VMEM.
    @pl.when(pl.program_id(1) == 0)
    def _():
        ln = _layernorm_f32(x_ref[...].astype(jnp.float32), g_ref[...], b_ref[...])
        ln_ref[...] = ln.astype(ln_ref.dtype)

    y = jnp.dot(ln_ref[...], w_ref[...],
                preferred_element_type=jnp.float32) + bias_ref[...]
    o_ref[...] = y.astype(o_ref.dtype)


def _kv_proj_kernel(x_ref, wk_ref, wv_ref, bv_ref, k_ref, v_ref):
    # Cross-attention K/V projection from encoder states (k has no bias).
    xb = x_ref[...].astype(jnp.bfloat16)
    k = jnp.dot(xb, wk_ref[...], preferred_element_type=jnp.float32)
    v = jnp.dot(xb, wv_ref[...], preferred_element_type=jnp.float32) + bv_ref[...]
    k_ref[...] = k.astype(k_ref.dtype)
    v_ref[...] = v.astype(v_ref.dtype)


def _matmul_residual_kernel(x_ref, w_ref, b_ref, r_ref, o_ref):
    # out_proj: y = x @ W^T + b + residual  (fused residual add)
    y = jnp.dot(x_ref[...].astype(jnp.bfloat16), w_ref[...],
                preferred_element_type=jnp.float32)
    y = y + b_ref[...] + r_ref[...].astype(jnp.float32)
    o_ref[...] = y.astype(o_ref.dtype)


def _ffn_kernel(x_ref, xr_ref, g_ref, b_ref, w1_ref, b1_ref, w2_ref, b2_ref,
                o_ref, acc_ref, ln_ref):
    # Fused FFN: LN -> fc1 -> GELU -> fc2 -> +residual.
    # Grid = (row tiles, out-E tiles, ffn tiles); the (tm, tf) GELU activation lives
    # only in registers/VMEM and fc2 is accumulated per (tm, tn_e) output block.
    j = pl.program_id(2)

    @pl.when(j == 0)
    def _():
        ln = _layernorm_f32(x_ref[...].astype(jnp.float32), g_ref[...], b_ref[...])
        ln_ref[...] = ln.astype(ln_ref.dtype)
        acc_ref[...] = jnp.zeros_like(acc_ref)

    h1 = jnp.dot(ln_ref[...], w1_ref[...], preferred_element_type=jnp.float32)
    h1 = h1 + b1_ref[...]
    # TODO(synk): torch.nn.functional.gelu (use_torch_gelu=True) is the exact erf GELU;
    # tanh approximation is used since erf lowering in Mosaic is not guaranteed.
    h1 = jax.nn.gelu(h1, approximate=True).astype(jnp.bfloat16)
    acc_ref[...] += jnp.dot(h1, w2_ref[...], preferred_element_type=jnp.float32)

    @pl.when(j == pl.num_programs(2) - 1)
    def _():
        out = acc_ref[...] + b2_ref[...] + xr_ref[...].astype(jnp.float32)
        o_ref[...] = out.astype(o_ref.dtype)


def _attention_kernel(*refs, group, head_dim, has_mask, kv_valid, tk):
    # Flash-style streaming softmax over the KV grid axis; one (batch, head-group,
    # q-tile) owns f32 running-max / denom / PV-accumulator scratch of shape (tq, gw).
    if has_mask:
        q_ref, k_ref, v_ref, m_ref, o_ref, m_sc, l_sc, acc_sc = refs
    else:
        q_ref, k_ref, v_ref, o_ref, m_sc, l_sc, acc_sc = refs
        m_ref = None

    kv = pl.program_id(3)

    @pl.when(kv == 0)
    def _():
        m_sc[...] = jnp.full_like(m_sc, -1e30)
        l_sc[...] = jnp.zeros_like(l_sc)
        acc_sc[...] = jnp.zeros_like(acc_sc)

    qb = q_ref[0].astype(jnp.bfloat16)   # (tq, gw) -- 1/sqrt(dh) folded into wq
    kb = k_ref[0].astype(jnp.bfloat16)   # (tk, gw)
    vb = v_ref[0].astype(jnp.bfloat16)   # (tk, gw)
    tq = qb.shape[0]

    bias = m_ref[0].astype(jnp.float32) if has_mask else None   # (tq, tk)
    if kv_valid is not None:
        # Neutralize keys past the true sequence length (glue pads K/V to 128-multiples).
        col = kv * tk + jax.lax.broadcasted_iota(jnp.int32, (tq, tk), 1)
        pad_bias = jnp.where(col < kv_valid, 0.0, -1e9).astype(jnp.float32)
        bias = pad_bias if bias is None else bias + pad_bias

    for h in range(group):
        sl = slice(h * head_dim, (h + 1) * head_dim)
        # Contract last dims directly on the MXU (no explicit K transpose).
        s = jax.lax.dot_general(qb[:, sl], kb[:, sl], (((1,), (1,)), ((), ())),
                                preferred_element_type=jnp.float32)    # (tq, tk)
        if bias is not None:
            s = s + bias
        m_prev = m_sc[:, sl]                                           # (tq, dh)
        m_new = jnp.maximum(m_prev, jnp.max(s, axis=-1, keepdims=True))
        alpha = jnp.exp(m_prev - m_new)
        p = jnp.exp(s - m_new[:, :1])                                  # (tq, tk)
        l_sc[:, sl] = alpha * l_sc[:, sl] + jnp.sum(p, axis=-1, keepdims=True)
        acc_sc[:, sl] = alpha * acc_sc[:, sl] + jnp.dot(
            p.astype(jnp.bfloat16), vb[:, sl], preferred_element_type=jnp.float32)
        m_sc[:, sl] = m_new

    @pl.when(kv == pl.num_programs(3) - 1)
    def _():
        # Single lane-dense (tq, gw) store; per-head denominators were replicated
        # across each head's dh lanes so normalization is one elementwise multiply.
        o_ref[0] = (acc_sc[...] *
                    pl.reciprocal(l_sc[...], approx=True)).astype(o_ref.dtype)


# ----------------------------------------------------------------------------
# pallas_call wrappers (glue)
# ----------------------------------------------------------------------------
def ln_qkv_proj(x2d, gamma, beta, p):
    M, E = x2d.shape
    tm = _pick_tile(M, _CFG["tm"], 16)
    tn = _pick_tile(E, _CFG["tn"], 128)
    out = jax.ShapeDtypeStruct((M, E), jnp.bfloat16)   # bf16 intermediates
    return pl.pallas_call(
        _ln_qkv_kernel,
        out_shape=(out, out, out),
        grid=(M // tm, E // tn),
        in_specs=[
            pl.BlockSpec((tm, E), lambda i, j: (i, 0)),   # x (LN input)
            pl.BlockSpec((1, E), lambda i, j: (0, 0)),    # gamma
            pl.BlockSpec((1, E), lambda i, j: (0, 0)),    # beta
            pl.BlockSpec((E, tn), lambda i, j: (0, j)),   # wq (pre-scaled, bf16)
            pl.BlockSpec((1, tn), lambda i, j: (0, j)),   # bq (pre-scaled)
            pl.BlockSpec((E, tn), lambda i, j: (0, j)),   # wk (bf16, no bias)
            pl.BlockSpec((E, tn), lambda i, j: (0, j)),   # wv (bf16)
            pl.BlockSpec((1, tn), lambda i, j: (0, j)),   # bv
        ],
        out_specs=(
            pl.BlockSpec((tm, tn), lambda i, j: (i, j)),
            pl.BlockSpec((tm, tn), lambda i, j: (i, j)),
            pl.BlockSpec((tm, tn), lambda i, j: (i, j)),
        ),
        scratch_shapes=[pltpu.VMEM((tm, E), jnp.bfloat16)],   # cached LN(x)
        compiler_params=_compiler_params(("parallel", "arbitrary")),
    )(x2d, gamma, beta, p["wq_t"], p["bq"], p["wk_t"], p["wv_t"], p["bv"])


def ln_matmul(x2d, gamma, beta, w_t, bias):
    M, E = x2d.shape
    N = w_t.shape[1]
    tm = _pick_tile(M, _CFG["tm"], 16)
    tn = _pick_tile(N, _CFG["tn"], 128)
    return pl.pallas_call(
        _ln_matmul_kernel,
        out_shape=jax.ShapeDtypeStruct((M, N), jnp.bfloat16),
        grid=(M // tm, N // tn),
        in_specs=[
            pl.BlockSpec((tm, E), lambda i, j: (i, 0)),
            pl.BlockSpec((1, E), lambda i, j: (0, 0)),
            pl.BlockSpec((1, E), lambda i, j: (0, 0)),
            pl.BlockSpec((E, tn), lambda i, j: (0, j)),
            pl.BlockSpec((1, tn), lambda i, j: (0, j)),
        ],
        out_specs=pl.BlockSpec((tm, tn), lambda i, j: (i, j)),
        scratch_shapes=[pltpu.VMEM((tm, E), jnp.bfloat16)],   # cached LN(x)
        compiler_params=_compiler_params(("parallel", "arbitrary")),
    )(x2d, gamma, beta, w_t, bias)


def kv_proj(x2d, wk_t, wv_t, bv):
    M, E = x2d.shape
    tm = _pick_tile(M, _CFG["tm"], 16)
    tn = _pick_tile(E, _CFG["tn"], 128)
    out = jax.ShapeDtypeStruct((M, E), jnp.bfloat16)
    return pl.pallas_call(
        _kv_proj_kernel,
        out_shape=(out, out),
        grid=(M // tm, E // tn),
        in_specs=[
            pl.BlockSpec((tm, E), lambda i, j: (i, 0)),
            pl.BlockSpec((E, tn), lambda i, j: (0, j)),
            pl.BlockSpec((E, tn), lambda i, j: (0, j)),
            pl.BlockSpec((1, tn), lambda i, j: (0, j)),
        ],
        out_specs=(
            pl.BlockSpec((tm, tn), lambda i, j: (i, j)),
            pl.BlockSpec((tm, tn), lambda i, j: (i, j)),
        ),
        compiler_params=_compiler_params(("parallel", "parallel")),
    )(x2d, wk_t, wv_t, bv)


def matmul_residual(x2d, w_t, bias, residual2d):
    M, K = x2d.shape
    N = w_t.shape[1]
    tm = _pick_tile(M, _CFG["tm"], 16)
    tn = _pick_tile(N, _CFG["tn"], 128)
    return pl.pallas_call(
        _matmul_residual_kernel,
        out_shape=jax.ShapeDtypeStruct((M, N), residual2d.dtype),
        grid=(M // tm, N // tn),
        in_specs=[
            pl.BlockSpec((tm, K), lambda i, j: (i, 0)),
            pl.BlockSpec((K, tn), lambda i, j: (0, j)),
            pl.BlockSpec((1, tn), lambda i, j: (0, j)),
            pl.BlockSpec((tm, tn), lambda i, j: (i, j)),
        ],
        out_specs=pl.BlockSpec((tm, tn), lambda i, j: (i, j)),
        compiler_params=_compiler_params(("parallel", "parallel")),
    )(x2d, w_t, bias, residual2d)


def ffn(x2d, gamma, beta, w1_t, b1, w2_t, b2):
    M, E = x2d.shape
    F = w1_t.shape[1]
    tm = _pick_tile(M, _CFG["tm"], 16)
    tf = _pick_tile(F, _CFG["tf"], 128)
    tn = _pick_tile(E, _CFG["tn"], 128)
    return pl.pallas_call(
        _ffn_kernel,
        out_shape=jax.ShapeDtypeStruct((M, E), x2d.dtype),
        grid=(M // tm, E // tn, F // tf),
        in_specs=[
            pl.BlockSpec((tm, E), lambda i, n, j: (i, 0)),    # x (LN input)
            pl.BlockSpec((tm, tn), lambda i, n, j: (i, n)),   # x residual slice
            pl.BlockSpec((1, E), lambda i, n, j: (0, 0)),     # gamma
            pl.BlockSpec((1, E), lambda i, n, j: (0, 0)),     # beta
            pl.BlockSpec((E, tf), lambda i, n, j: (0, j)),    # fc1 weight tile
            pl.BlockSpec((1, tf), lambda i, n, j: (0, j)),    # fc1 bias tile
            pl.BlockSpec((tf, tn), lambda i, n, j: (j, n)),   # fc2 weight tile
            pl.BlockSpec((1, tn), lambda i, n, j: (0, n)),    # fc2 bias tile
        ],
        out_specs=pl.BlockSpec((tm, tn), lambda i, n, j: (i, n)),
        scratch_shapes=[
            pltpu.VMEM((tm, tn), jnp.float32),    # fc2 accumulator
            pltpu.VMEM((tm, E), jnp.bfloat16),    # LN(x) reused across ffn tiles
        ],
        compiler_params=_compiler_params(("parallel", "parallel", "arbitrary")),
    )(x2d, x2d, gamma, beta, w1_t, b1, w2_t, b2)


def attention(q, k, v, mask, num_heads):
    """softmax(Q K^T + mask) V with Q pre-scaled; q:(B,T,E), k/v:(B,S,E)."""
    B, T, E = q.shape
    S = k.shape[1]
    dh = E // num_heads
    group = _head_group(num_heads, dh)
    ngroups = num_heads // group
    gw = group * dh

    # Pad the key/value sequence to a 128-multiple so KV tiles and the mask's lane dim
    # are aligned; padded keys are neutralized in-kernel (additive -1e9 bias).
    S_pad = _round_up(S, 128) if S > 128 else S
    if S_pad != S:
        k = jnp.pad(k, ((0, 0), (0, S_pad - S), (0, 0)))
        v = jnp.pad(v, ((0, 0), (0, S_pad - S), (0, 0)))
        if mask is not None:
            mask = jnp.pad(mask, ((0, 0), (0, 0), (0, S_pad - S)))

    tq = _pick_tile(T, _CFG["tq"], 8)
    tk = _pick_tile(S_pad, _CFG["tk"], 128)

    in_specs = [
        pl.BlockSpec((1, tq, gw), lambda b, g, qi, ki: (b, qi, g)),
        pl.BlockSpec((1, tk, gw), lambda b, g, qi, ki: (b, ki, g)),
        pl.BlockSpec((1, tk, gw), lambda b, g, qi, ki: (b, ki, g)),
    ]
    args = [q, k, v]
    if mask is not None:
        in_specs.append(pl.BlockSpec((1, tq, tk), lambda b, g, qi, ki: (b, qi, ki)))
        args.append(mask)

    kernel = functools.partial(
        _attention_kernel, group=group, head_dim=dh, has_mask=mask is not None,
        kv_valid=(S if S_pad != S else None), tk=tk)

    return pl.pallas_call(
        kernel,
        out_shape=jax.ShapeDtypeStruct((B, T, E), jnp.bfloat16),
        grid=(B, ngroups, T // tq, S_pad // tk),
        in_specs=in_specs,
        out_specs=pl.BlockSpec((1, tq, gw), lambda b, g, qi, ki: (b, qi, g)),
        scratch_shapes=[pltpu.VMEM((tq, gw), jnp.float32),    # running max (per head, replicated)
                        pltpu.VMEM((tq, gw), jnp.float32),    # running denom
                        pltpu.VMEM((tq, gw), jnp.float32)],   # PV accumulator
        compiler_params=_compiler_params(
            ("parallel", "parallel", "parallel", "arbitrary")),
    )(*args)


# ----------------------------------------------------------------------------
# Decoder layer forward (mirrors TtWhisperDecoderLayer.forward)
# ----------------------------------------------------------------------------
def _split_heads(x2d, B, L, num_heads, dtype):
    E = x2d.shape[-1]
    return (x2d.reshape(B, L, num_heads, E // num_heads)
            .transpose(0, 2, 1, 3).astype(dtype))


def whisper_decoder_layer(
    hidden_states,
    params,
    num_heads,
    attention_mask=None,
    encoder_hidden_states=None,
    encoder_attention_mask=None,
):
    # TODO(synk): past_key_value / incremental-decode KV-cache path is not expressed here.
    B, T, E = hidden_states.shape
    dtype = hidden_states.dtype
    x2d = hidden_states.reshape(B * T, E)

    # ---- self attention block (LN fused into QKV projection, bf16 intermediates) ----
    sa = params["self_attn"]
    q2d, k2d, v2d = ln_qkv_proj(x2d, params["ln_self_g"], params["ln_self_b"], sa)
    mask3 = None if attention_mask is None else (
        attention_mask.reshape(B, T, T).astype(jnp.float32))
    attn = attention(q2d.reshape(B, T, E), k2d.reshape(B, T, E),
                     v2d.reshape(B, T, E), mask3, num_heads)
    h2d = matmul_residual(attn.reshape(B * T, E), sa["wo_t"], sa["bo"], x2d)
    present_key_value = (_split_heads(k2d, B, T, num_heads, dtype),
                         _split_heads(v2d, B, T, num_heads, dtype))

    # ---- cross attention block ----
    if encoder_hidden_states is not None:
        S = encoder_hidden_states.shape[1]
        ca = params["encoder_attn"]
        res2d = h2d
        q2d = ln_matmul(h2d, params["ln_enc_g"], params["ln_enc_b"],
                        ca["wq_t"], ca["bq"])
        enc2d = encoder_hidden_states.reshape(B * S, E)
        k2d, v2d = kv_proj(enc2d, ca["wk_t"], ca["wv_t"], ca["bv"])
        emask3 = None if encoder_attention_mask is None else (
            encoder_attention_mask.reshape(B, T, S).astype(jnp.float32))
        attn = attention(q2d.reshape(B, T, E), k2d.reshape(B, S, E),
                         v2d.reshape(B, S, E), emask3, num_heads)
        h2d = matmul_residual(attn.reshape(B * T, E), ca["wo_t"], ca["bo"], res2d)
        present_key_value = present_key_value + (
            _split_heads(k2d, B, S, num_heads, dtype),
            _split_heads(v2d, B, S, num_heads, dtype))

    # ---- feed-forward block (LN + fc1 + GELU + fc2 + residual, fully fused) ----
    h2d = ffn(h2d, params["ln_final_g"], params["ln_final_b"],
              params["fc1_w_t"], params["fc1_b"], params["fc2_w_t"], params["fc2_b"])

    return h2d.reshape(B, T, E), present_key_value


# ----------------------------------------------------------------------------
# Parameters: raw torch-convention init + one-time kernel-ready preparation
# ----------------------------------------------------------------------------
def init_params(key, embed_dim, ffn_dim):
    E, F = embed_dim, ffn_dim
    keys = iter(jax.random.split(key, 32))

    def w(shape, scale=0.02):
        return (scale * jax.random.normal(next(keys), shape)).astype(jnp.float32)

    def attn_params():
        return {
            "wq": w((E, E)), "bq": w((E,)),
            "wk": w((E, E)),                     # k_proj: no bias in Whisper
            "wv": w((E, E)), "bv": w((E,)),
            "wo": w((E, E)), "bo": w((E,)),
        }

    return {
        "self_attn": attn_params(),
        "encoder_attn": attn_params(),
        "ln_self_g": jnp.ones((E,), jnp.float32), "ln_self_b": w((E,)),
        "ln_enc_g": jnp.ones((E,), jnp.float32), "ln_enc_b": w((E,)),
        "ln_final_g": jnp.ones((E,), jnp.float32), "ln_final_b": w((E,)),
        "fc1_w": w((F, E)), "fc1_b": w((F,)),
        "fc2_w": w((E, F)), "fc2_b": w((E,)),
    }


def prepare_params(raw, num_heads):
    """One-time prep: transpose weights to (K,N), cast to bf16, fold the 1/sqrt(dh)
    attention scaling into wq/bq, reshape biases/LN params to (1, N)."""
    E = raw["fc2_w"].shape[0]
    scale = float(E // num_heads) ** -0.5

    def prep_attn(p):
        return {
            "wq_t": (p["wq"].T * scale).astype(jnp.bfloat16),
            "bq":   (p["bq"] * scale).reshape(1, -1).astype(jnp.float32),
            "wk_t": p["wk"].T.astype(jnp.bfloat16),
            "wv_t": p["wv"].T.astype(jnp.bfloat16),
            "bv":   p["bv"].reshape(1, -1).astype(jnp.float32),
            "wo_t": p["wo"].T.astype(jnp.bfloat16),
            "bo":   p["bo"].reshape(1, -1).astype(jnp.float32),
        }

    def row(x):
        return x.reshape(1, -1).astype(jnp.float32)

    return {
        "self_attn": prep_attn(raw["self_attn"]),
        "encoder_attn": prep_attn(raw["encoder_attn"]),
        "ln_self_g": row(raw["ln_self_g"]), "ln_self_b": row(raw["ln_self_b"]),
        "ln_enc_g": row(raw["ln_enc_g"]), "ln_enc_b": row(raw["ln_enc_b"]),
        "ln_final_g": row(raw["ln_final_g"]), "ln_final_b": row(raw["ln_final_b"]),
        "fc1_w_t": raw["fc1_w"].T.astype(jnp.bfloat16), "fc1_b": row(raw["fc1_b"]),
        "fc2_w_t": raw["fc2_w"].T.astype(jnp.bfloat16), "fc2_b": row(raw["fc2_b"]),
    }


if __name__ == "__main__":
    B, T, S_ENC = 2, 8, 8
    EMBED_DIM, NUM_HEADS, FFN_DIM = 32, 4, 64

    root = jax.random.PRNGKey(0)
    k_p, k_x, k_e = jax.random.split(root, 3)

    raw_params = init_params(k_p, EMBED_DIM, FFN_DIM)
    params = prepare_params(raw_params, NUM_HEADS)

    hidden_states = jax.random.normal(k_x, (B, T, EMBED_DIM), jnp.float32)
    encoder_hidden_states = jax.random.normal(k_e, (B, S_ENC, EMBED_DIM), jnp.float32)

    # causal additive mask, torch convention (B, 1, tgt, src)
    causal = jnp.triu(jnp.full((T, T), -1e9, jnp.float32), k=1)
    attention_mask = jnp.broadcast_to(causal, (B, 1, T, T))
    encoder_attention_mask = None

    fwd = jax.jit(functools.partial(whisper_decoder_layer, num_heads=NUM_HEADS))
    out, present_kv = fwd(
        hidden_states,
        params,
        attention_mask=attention_mask,
        encoder_hidden_states=encoder_hidden_states,
        encoder_attention_mask=encoder_attention_mask,
    )

    jax.block_until_ready(out)
    jax.block_until_ready(present_kv)
    assert out.shape == (B, T, EMBED_DIM)
    assert len(present_kv) == 4  # (self_k, self_v, cross_k, cross_v)
    print("KERNEL_OK")
</pallas_src>

<mosaic_0001>
module attributes {stable_mosaic.version = 11 : i64} {
  func.func @_matmul_residual_kernel(%arg0: i32, %arg1: i32, %arg2: memref<16x32xbf16, #tpu.memory_space<vmem>>, %arg3: memref<32x32xbf16, #tpu.memory_space<vmem>>, %arg4: memref<1x32xf32, #tpu.memory_space<vmem>>, %arg5: memref<16x32xf32, #tpu.memory_space<vmem>>, %arg6: memref<16x32xf32, #tpu.memory_space<vmem>>) attributes {dimension_semantics = [#tpu.dimension_semantics<parallel>, #tpu.dimension_semantics<parallel>], iteration_bounds = array<i64: 1, 1>, scalar_prefetch = 0 : i64, scratch_operands = 0 : i64, tpu.core_type = #tpu.core_type<tc>, window_params = [{transform_indices = @transform_0, window_bounds = array<i64: 16, 32>}, {transform_indices = @transform_1, window_bounds = array<i64: 32, 32>}, {transform_indices = @transform_2, window_bounds = array<i64: 1, 32>}, {transform_indices = @transform_3, window_bounds = array<i64: 16, 32>}, {transform_indices = @transform_4, window_bounds = array<i64: 16, 32>}]} {
    %c0 = arith.constant 0 : index
    %c0_0 = arith.constant 0 : index
    %0 = vector.load %arg2[%c0, %c0_0] : memref<16x32xbf16, #tpu.memory_space<vmem>>, vector<16x32xbf16>
    %c0_1 = arith.constant 0 : index
    %c0_2 = arith.constant 0 : index
    %1 = vector.load %arg3[%c0_1, %c0_2] : memref<32x32xbf16, #tpu.memory_space<vmem>>, vector<32x32xbf16>
    %cst = arith.constant dense<0.000000e+00> : vector<16x32xf32>
    %2 = tpu.matmul %0, %1, %cst {dimension_numbers = #tpu.dot_dimension_numbers<[1], [0], [0], [1], [0, 0, 1, 1], [], []>} : vector<16x32xbf16>, vector<32x32xbf16>, vector<16x32xf32> -> vector<16x32xf32>
    %c0_3 = arith.constant 0 : index
    %c0_4 = arith.constant 0 : index
    %3 = vector.load %arg4[%c0_3, %c0_4] : memref<1x32xf32, #tpu.memory_space<vmem>>, vector<1x32xf32>
    %4 = vector.broadcast %3 : vector<1x32xf32> to vector<16x32xf32>
    %5 = arith.addf %2, %4 : vector<16x32xf32>
    %c0_5 = arith.constant 0 : index
    %c0_6 = arith.constant 0 : index
    %6 = vector.load %arg5[%c0_5, %c0_6] : memref<16x32xf32, #tpu.memory_space<vmem>>, vector<16x32xf32>
    %7 = arith.addf %5, %6 : vector<16x32xf32>
    %c0_7 = arith.constant 0 : index
    %c0_8 = arith.constant 0 : index
    %8 = vector.load %arg6[%c0_7, %c0_8] : memref<16x32xf32, #tpu.memory_space<vmem>>, vector<16x32xf32>
    tpu.vector_store %arg6[%c0_7, %c0_8], %7 {strides = array<i32>} : memref<16x32xf32, #tpu.memory_space<vmem>>, vector<16x32xf32>,
    return
  }
  func.func @transform_0(%arg0: i32, %arg1: i32) -> (i32, i32) {
    %c0_i32 = arith.constant 0 : i32
    %c0_i32_0 = arith.constant 0 : i32
    return %arg0, %c0_i32 : i32, i32
  }
  func.func @transform_1(%arg0: i32, %arg1: i32) -> (i32, i32) {
    %c0_i32 = arith.constant 0 : i32
    %c0_i32_0 = arith.constant 0 : i32
    return %c0_i32, %arg1 : i32, i32
  }
  func.func @transform_2(%arg0: i32, %arg1: i32) -> (i32, i32) {
    %c0_i32 = arith.constant 0 : i32
    %c0_i32_0 = arith.constant 0 : i32
    return %c0_i32, %arg1 : i32, i32
  }
  func.func @transform_3(%arg0: i32, %arg1: i32) -> (i32, i32) {
    %c0_i32 = arith.constant 0 : i32
    return %arg0, %arg1 : i32, i32
  }
  func.func @transform_4(%arg0: i32, %arg1: i32) -> (i32, i32) {
    %c0_i32 = arith.constant 0 : i32
    return %arg0, %arg1 : i32, i32
  }
}

module attributes {stable_mosaic.version = 11 : i64} {
  func.func @_kv_proj_kernel(%arg0: i32, %arg1: i32, %arg2: memref<16x32xf32, #tpu.memory_space<vmem>>, %arg3: memref<32x32xbf16, #tpu.memory_space<vmem>>, %arg4: memref<32x32xbf16, #tpu.memory_space<vmem>>, %arg5: memref<1x32xf32, #tpu.memory_space<vmem>>, %arg6: memref<16x32xbf16, #tpu.memory_space<vmem>>, %arg7: memref<16x32xbf16, #tpu.memory_space<vmem>>) attributes {dimension_semantics = [#tpu.dimension_semantics<parallel>, #tpu.dimension_semantics<parallel>], iteration_bounds = array<i64: 1, 1>, scalar_prefetch = 0 : i64, scratch_operands = 0 : i64, tpu.core_type = #tpu.core_type<tc>, window_params = [{transform_indices = @transform_0, window_bounds = array<i64: 16, 32>}, {transform_indices = @transform_1, window_bounds = array<i64: 32, 32>}, {transform_indices = @transform_2, window_bounds = array<i64: 32, 32>}, {transform_indices = @transform_3, window_bounds = array<i64: 1, 32>}, {transform_indices = @transform_4, window_bounds = array<i64: 16, 32>}, {transform_indices = @transform_5, window_bounds = array<i64: 16, 32>}]} {
    %c0 = arith.constant 0 : index
    %c0_0 = arith.constant 0 : index
    %0 = vector.load %arg2[%c0, %c0_0] : memref<16x32xf32, #tpu.memory_space<vmem>>, vector<16x32xf32>
    %1 = arith.truncf %0 : vector<16x32xf32> to vector<16x32xbf16>
    %c0_1 = arith.constant 0 : index
    %c0_2 = arith.constant 0 : index
    %2 = vector.load %arg3[%c0_1, %c0_2] : memref<32x32xbf16, #tpu.memory_space<vmem>>, vector<32x32xbf16>
    %cst = arith.constant dense<0.000000e+00> : vector<16x32xf32>
    %3 = tpu.matmul %1, %2, %cst {dimension_numbers = #tpu.dot_dimension_numbers<[1], [0], [0], [1], [0, 0, 1, 1], [], []>} : vector<16x32xbf16>, vector<32x32xbf16>, vector<16x32xf32> -> vector<16x32xf32>
    %c0_3 = arith.constant 0 : index
    %c0_4 = arith.constant 0 : index
    %4 = vector.load %arg4[%c0_3, %c0_4] : memref<32x32xbf16, #tpu.memory_space<vmem>>, vector<32x32xbf16>
    %cst_5 = arith.constant dense<0.000000e+00> : vector<16x32xf32>
    %5 = tpu.matmul %1, %4, %cst_5 {dimension_numbers = #tpu.dot_dimension_numbers<[1], [0], [0], [1], [0, 0, 1, 1], [], []>} : vector<16x32xbf16>, vector<32x32xbf16>, vector<16x32xf32> -> vector<16x32xf32>
    %c0_6 = arith.constant 0 : index
    %c0_7 = arith.constant 0 : index
    %6 = vector.load %arg5[%c0_6, %c0_7] : memref<1x32xf32, #tpu.memory_space<vmem>>, vector<1x32xf32>
    %7 = vector.broadcast %6 : vector<1x32xf32> to vector<16x32xf32>
    %8 = arith.addf %5, %7 : vector<16x32xf32>
    %9 = arith.truncf %3 : vector<16x32xf32> to vector<16x32xbf16>
    %c0_8 = arith.constant 0 : index
    %c0_9 = arith.constant 0 : index
    %10 = vector.load %arg6[%c0_8, %c0_9] : memref<16x32xbf16, #tpu.memory_space<vmem>>, vector<16x32xbf16>
    tpu.vector_store %arg6[%c0_8, %c0_9], %9 {strides = array<i32>} : memref<16x32xbf16, #tpu.memory_space<vmem>>, vector<16x32xbf16>,
    %11 = arith.truncf %8 : vector<16x32xf32> to vector<16x32xbf16>
    %c0_10 = arith.constant 0 : index
    %c0_11 = arith.constant 0 : index
    %12 = vector.load %arg7[%c0_10, %c0_11] : memref<16x32xbf16, #tpu.memory_space<vmem>>, vector<16x32xbf16>
    tpu.vector_store %arg7[%c0_10, %c0_11], %11 {strides = array<i32>} : memref<16x32xbf16, #tpu.memory_space<vmem>>, vector<16x32xbf16>,
    return
  }
  func.func @transform_0(%arg0: i32, %arg1: i32) -> (i32, i32) {
    %c0_i32 = arith.constant 0 : i32
    %c0_i32_0 = arith.constant 0 : i32
    return %arg0, %c0_i32 : i32, i32
  }
  func.func @transform_1(%arg0: i32, %arg1: i32) -> (i32, i32) {
    %c0_i32 = arith.constant 0 : i32
    %c0_i32_0 = arith.constant 0 : i32
    return %c0_i32, %arg1 : i32, i32
  }
  func.func @transform_2(%arg0: i32, %arg1: i32) -> (i32, i32) {
    %c0_i32 = arith.constant 0 : i32
    %c0_i32_0 = arith.constant 0 : i32
    return %c0_i32, %arg1 : i32, i32
  }
  func.func @transform_3(%arg0: i32, %arg1: i32) -> (i32, i32) {
    %c0_i32 = arith.constant 0 : i32
    %c0_i32_0 = arith.constant 0 : i32
    return %c0_i32, %arg1 : i32, i32
  }
  func.func @transform_4(%arg0: i32, %arg1: i32) -> (i32, i32) {
    %c0_i32 = arith.constant 0 : i32
    return %arg0, %arg1 : i32, i32
  }
  func.func @transform_5(%arg0: i32, %arg1: i32) -> (i32, i32) {
    %c0_i32 = arith.constant 0 : i32
    return %arg0, %arg1 : i32, i32
  }
}

module attributes {stable_mosaic.version = 11 : i64} {
  func.func @_ln_qkv_kernel(%arg0: i32, %arg1: i32, %arg2: memref<16x32xf32, #tpu.memory_space<vmem>>, %arg3: memref<1x32xf32, #tpu.memory_space<vmem>>, %arg4: memref<1x32xf32, #tpu.memory_space<vmem>>, %arg5: memref<32x32xbf16, #tpu.memory_space<vmem>>, %arg6: memref<1x32xf32, #tpu.memory_space<vmem>>, %arg7: memref<32x32xbf16, #tpu.memory_space<vmem>>, %arg8: memref<32x32xbf16, #tpu.memory_space<vmem>>, %arg9: memref<1x32xf32, #tpu.memory_space<vmem>>, %arg10: memref<16x32xbf16, #tpu.memory_space<vmem>>, %arg11: memref<16x32xbf16, #tpu.memory_space<vmem>>, %arg12: memref<16x32xbf16, #tpu.memory_space<vmem>>, %arg13: memref<16x32xbf16, #tpu.memory_space<vmem>>) attributes {dimension_semantics = [#tpu.dimension_semantics<parallel>, #tpu.dimension_semantics<arbitrary>], iteration_bounds = array<i64: 1, 1>, scalar_prefetch = 0 : i64, scratch_operands = 1 : i64, tpu.core_type = #tpu.core_type<tc>, window_params = [{transform_indices = @transform_0, window_bounds = array<i64: 16, 32>}, {pipeline_mode = #tpu.pipeline_mode<synchronous>, transform_indices = @transform_1, window_bounds = array<i64: 1, 32>}, {pipeline_mode = #tpu.pipeline_mode<synchronous>, transform_indices = @transform_2, window_bounds = array<i64: 1, 32>}, {transform_indices = @transform_3, window_bounds = array<i64: 32, 32>}, {transform_indices = @transform_4, window_bounds = array<i64: 1, 32>}, {transform_indices = @transform_5, window_bounds = array<i64: 32, 32>}, {transform_indices = @transform_6, window_bounds = array<i64: 32, 32>}, {transform_indices = @transform_7, window_bounds = array<i64: 1, 32>}, {transform_indices = @transform_8, window_bounds = array<i64: 16, 32>}, {transform_indices = @transform_9, window_bounds = array<i64: 16, 32>}, {transform_indices = @transform_10, window_bounds = array<i64: 16, 32>}]} {
    %c0_i32 = arith.constant 0 : i32
    %0 = arith.cmpi eq, %arg1, %c0_i32 : i32
    %1 = arith.extui %0 : i1 to i32
    %c0_i32_0 = arith.constant 0 : i32
    %2 = arith.cmpi ne, %1, %c0_i32_0 : i32
    scf.if %2 {
      %c0_20 = arith.constant 0 : index
      %c0_21 = arith.constant 0 : index
      %22 = vector.load %arg2[%c0_20, %c0_21] : memref<16x32xf32, #tpu.memory_space<vmem>>, vector<16x32xf32>
      %c0_22 = arith.constant 0 : index
      %c0_23 = arith.constant 0 : index
      %23 = vector.load %arg3[%c0_22, %c0_23] : memref<1x32xf32, #tpu.memory_space<vmem>>, vector<1x32xf32>
      %c0_24 = arith.constant 0 : index
      %c0_25 = arith.constant 0 : index
      %24 = vector.load %arg4[%c0_24, %c0_25] : memref<1x32xf32, #tpu.memory_space<vmem>>, vector<1x32xf32>
      %cst_26 = arith.constant dense<0.000000e+00> : vector<16xf32>
      %25 = vector.multi_reduction <add>, %22, %cst_26 [1] : vector<16x32xf32> to vector<16xf32>
      %26 = vector.shape_cast %25 : vector<16xf32> to vector<16x1xf32>
      %cst_27 = arith.constant 3.200000e+01 : f32
      %27 = vector.broadcast %cst_27 : f32 to vector<16x1xf32>
      %28 = arith.divf %26, %27 : vector<16x1xf32>
      %29 = vector.broadcast %28 : vector<16x1xf32> to vector<16x32xf32>
      %30 = arith.subf %22, %29 : vector<16x32xf32>
      %31 = arith.mulf %30, %30 : vector<16x32xf32>
      %cst_28 = arith.constant dense<0.000000e+00> : vector<16xf32>
      %32 = vector.multi_reduction <add>, %31, %cst_28 [1] : vector<16x32xf32> to vector<16xf32>
      %33 = vector.shape_cast %32 : vector<16xf32> to vector<16x1xf32>
      %cst_29 = arith.constant 3.200000e+01 : f32
      %34 = vector.broadcast %cst_29 : f32 to vector<16x1xf32>
      %35 = arith.divf %33, %34 : vector<16x1xf32>
      %cst_30 = arith.constant 9.99999974E-6 : f32
      %36 = vector.broadcast %cst_30 : f32 to vector<16x1xf32>
      %37 = arith.addf %35, %36 : vector<16x1xf32>
      %38 = math.rsqrt %37 : vector<16x1xf32>
      %39 = vector.broadcast %38 : vector<16x1xf32> to vector<16x32xf32>
      %40 = arith.mulf %30, %39 : vector<16x32xf32>
      %41 = vector.broadcast %23 : vector<1x32xf32> to vector<16x32xf32>
      %42 = arith.mulf %40, %41 : vector<16x32xf32>
      %43 = vector.broadcast %24 : vector<1x32xf32> to vector<16x32xf32>
      %44 = arith.addf %42, %43 : vector<16x32xf32>
      %45 = arith.truncf %44 : vector<16x32xf32> to vector<16x32xbf16>
      %c0_31 = arith.constant 0 : index
      %c0_32 = arith.constant 0 : index
      %46 = vector.load %arg13[%c0_31, %c0_32] : memref<16x32xbf16, #tpu.memory_space<vmem>>, vector<16x32xbf16>
      tpu.vector_store %arg13[%c0_31, %c0_32], %45 {strides = array<i32>} : memref<16x32xbf16, #tpu.memory_space<vmem>>, vector<16x32xbf16>,
    } else {
    }
    %c0 = arith.constant 0 : index
    %c0_1 = arith.constant 0 : index
    %3 = vector.load %arg13[%c0, %c0_1] : memref<16x32xbf16, #tpu.memory_space<vmem>>, vector<16x32xbf16>
    %c0_2 = arith.constant 0 : index
    %c0_3 = arith.constant 0 : index
    %4 = vector.load %arg5[%c0_2, %c0_3] : memref<32x32xbf16, #tpu.memory_space<vmem>>, vector<32x32xbf16>
    %cst = arith.constant dense<0.000000e+00> : vector<16x32xf32>
    %5 = tpu.matmul %3, %4, %cst {dimension_numbers = #tpu.dot_dimension_numbers<[1], [0], [0], [1], [0, 0, 1, 1], [], []>} : vector<16x32xbf16>, vector<32x32xbf16>, vector<16x32xf32> -> vector<16x32xf32>
    %c0_4 = arith.constant 0 : index
    %c0_5 = arith.constant 0 : index
    %6 = vector.load %arg6[%c0_4, %c0_5] : memref<1x32xf32, #tpu.memory_space<vmem>>, vector<1x32xf32>
    %7 = vector.broadcast %6 : vector<1x32xf32> to vector<16x32xf32>
    %8 = arith.addf %5, %7 : vector<16x32xf32>
    %c0_6 = arith.constant 0 : index
    %c0_7 = arith.constant 0 : index
    %9 = vector.load %arg7[%c0_6, %c0_7] : memref<32x32xbf16, #tpu.memory_space<vmem>>, vector<32x32xbf16>
    %cst_8 = arith.constant dense<0.000000e+00> : vector<16x32xf32>
    %10 = tpu.matmul %3, %9, %cst_8 {dimension_numbers = #tpu.dot_dimension_numbers<[1], [0], [0], [1], [0, 0, 1, 1], [], []>} : vector<16x32xbf16>, vector<32x32xbf16>, vector<16x32xf32> -> vector<16x32xf32>
    %c0_9 = arith.constant 0 : index
    %c0_10 = arith.constant 0 : index
    %11 = vector.load %arg8[%c0_9, %c0_10] : memref<32x32xbf16, #tpu.memory_space<vmem>>, vector<32x32xbf16>
    %cst_11 = arith.constant dense<0.000000e+00> : vector<16x32xf32>
    %12 = tpu.matmul %3, %11, %cst_11 {dimension_numbers = #tpu.dot_dimension_numbers<[1], [0], [0], [1], [0, 0, 1, 1], [], []>} : vector<16x32xbf16>, vector<32x32xbf16>, vector<16x32xf32> -> vector<16x32xf32>
    %c0_12 = arith.constant 0 : index
    %c0_13 = arith.constant 0 : index
    %13 = vector.load %arg9[%c0_12, %c0_13] : memref<1x32xf32, #tpu.memory_space<vmem>>, vector<1x32xf32>
    %14 = vector.broadcast %13 : vector<1x32xf32> to vector<16x32xf32>
    %15 = arith.addf %12, %14 : vector<16x32xf32>
    %16 = arith.truncf %8 : vector<16x32xf32> to vector<16x32xbf16>
    %c0_14 = arith.constant 0 : index
    %c0_15 = arith.constant 0 : index
    %17 = vector.load %arg10[%c0_14, %c0_15] : memref<16x32xbf16, #tpu.memory_space<vmem>>, vector<16x32xbf16>
    tpu.vector_store %arg10[%c0_14, %c0_15], %16 {strides = array<i32>} : memref<16x32xbf16, #tpu.memory_space<vmem>>, vector<16x32xbf16>,
    %18 = arith.truncf %10 : vector<16x32xf32> to vector<16x32xbf16>
    %c0_16 = arith.constant 0 : index
    %c0_17 = arith.constant 0 : index
    %19 = vector.load %arg11[%c0_16, %c0_17] : memref<16x32xbf16, #tpu.memory_space<vmem>>, vector<16x32xbf16>
    tpu.vector_store %arg11[%c0_16, %c0_17], %18 {strides = array<i32>} : memref<16x32xbf16, #tpu.memory_space<vmem>>, vector<16x32xbf16>,
    %20 = arith.truncf %15 : vector<16x32xf32> to vector<16x32xbf16>
    %c0_18 = arith.constant 0 : index
    %c0_19 = arith.constant 0 : index
    %21 = vector.load %arg12[%c0_18, %c0_19] : memref<16x32xbf16, #tpu.memory_space<vmem>>, vector<16x32xbf16>
    tpu.vector_store %arg12[%c0_18, %c0_19], %20 {strides = array<i32>} : memref<16x32xbf16, #tpu.memory_space<vmem>>, vector<16x32xbf16>,
    return
  }
  func.func @transform_0(%arg0: i32, %arg1: i32) -> (i32, i32) {
    %c0_i32 = arith.constant 0 : i32
    %c0_i32_0 = arith.constant 0 : i32
    return %arg0, %c0_i32 : i32, i32
  }
  func.func @transform_1(%arg0: i32, %arg1: i32) -> (i32, i32) {
    %c0_i32 = arith.constant 0 : i32
    %c0_i32_0 = arith.constant 0 : i32
    %c0_i32_1 = arith.constant 0 : i32
    return %c0_i32, %c0_i32_0 : i32, i32
  }
  func.func @transform_2(%arg0: i32, %arg1: i32) -> (i32, i32) {
    %c0_i32 = arith.constant 0 : i32
    %c0_i32_0 = arith.constant 0 : i32
    %c0_i32_1 = arith.constant 0 : i32
    return %c0_i32, %c0_i32_0 : i32, i32
  }
  func.func @transform_3(%arg0: i32, %arg1: i32) -> (i32, i32) {
    %c0_i32 = arith.constant 0 : i32
    %c0_i32_0 = arith.constant 0 : i32
    return %c0_i32, %arg1 : i32, i32
  }
  func.func @transform_4(%arg0: i32, %arg1: i32) -> (i32, i32) {
    %c0_i32 = arith.constant 0 : i32
    %c0_i32_0 = arith.constant 0 : i32
    return %c0_i32, %arg1 : i32, i32
  }
  func.func @transform_5(%arg0: i32, %arg1: i32) -> (i32, i32) {
    %c0_i32 = arith.constant 0 : i32
    %c0_i32_0 = arith.constant 0 : i32
    return %c0_i32, %arg1 : i32, i32
  }
  func.func @transform_6(%arg0: i32, %arg1: i32) -> (i32, i32) {
    %c0_i32 = arith.constant 0 : i32
    %c0_i32_0 = arith.constant 0 : i32
    return %c0_i32, %arg1 : i32, i32
  }
  func.func @transform_7(%arg0: i32, %arg1: i32) -> (i32, i32) {
    %c0_i32 = arith.constant 0 : i32
    %c0_i32_0 = arith.constant 0 : i32
    return %c0_i32, %arg1 : i32, i32
  }
  func.func @transform_8(%arg0: i32, %arg1: i32) -> (i32, i32) {
    %c0_i32 = arith.constant 0 : i32
    return %arg0, %arg1 : i32, i32
  }
  func.func @transform_9(%arg0: i32, %arg1: i32) -> (i32, i32) {
    %c0_i32 = arith.constant 0 : i32
    return %arg0, %arg1 : i32, i32
  }
  func.func @transform_10(%arg0: i32, %arg1: i32) -> (i32, i32) {
    %c0_i32 = arith.constant 0 : i32
    return %arg0, %arg1 : i32, i32
  }
}

module attributes {stable_mosaic.version = 11 : i64} {
  func.func @_attention_kernel(%arg0: i32, %arg1: i32, %arg2: i32, %arg3: i32, %arg4: memref<1x8x32xbf16, #tpu.memory_space<vmem>>, %arg5: memref<1x8x32xbf16, #tpu.memory_space<vmem>>, %arg6: memref<1x8x32xbf16, #tpu.memory_space<vmem>>, %arg7: memref<1x8x8xf32, #tpu.memory_space<vmem>>, %arg8: memref<1x8x32xbf16, #tpu.memory_space<vmem>>, %arg9: memref<8x32xf32, #tpu.memory_space<vmem>>, %arg10: memref<8x32xf32, #tpu.memory_space<vmem>>, %arg11: memref<8x32xf32, #tpu.memory_space<vmem>>) attributes {dimension_semantics = [#tpu.dimension_semantics<parallel>, #tpu.dimension_semantics<parallel>, #tpu.dimension_semantics<parallel>, #tpu.dimension_semantics<arbitrary>], iteration_bounds = array<i64: 2, 1, 1, 1>, scalar_prefetch = 0 : i64, scratch_operands = 3 : i64, tpu.core_type = #tpu.core_type<tc>, window_params = [{transform_indices = @transform_0, window_bounds = array<i64: 1, 8, 32>}, {transform_indices = @transform_1, window_bounds = array<i64: 1, 8, 32>}, {transform_indices = @transform_2, window_bounds = array<i64: 1, 8, 32>}, {transform_indices = @transform_3, window_bounds = array<i64: 1, 8, 8>}, {transform_indices = @transform_4, window_bounds = array<i64: 1, 8, 32>}]} {
    %c0_i32 = arith.constant 0 : i32
    %0 = arith.cmpi eq, %arg3, %c0_i32 : i32
    %1 = arith.extui %0 : i1 to i32
    %c0_i32_0 = arith.constant 0 : i32
    %2 = arith.cmpi ne, %1, %c0_i32_0 : i32
    scf.if %2 {
      %cst_74 = arith.constant -1.000000e+30 : f32
      %134 = vector.broadcast %cst_74 : f32 to vector<8x32xf32>
      %c0_75 = arith.constant 0 : index
      %c0_76 = arith.constant 0 : index
      %135 = vector.load %arg9[%c0_75, %c0_76] : memref<8x32xf32, #tpu.memory_space<vmem>>, vector<8x32xf32>
      tpu.vector_store %arg9[%c0_75, %c0_76], %134 {strides = array<i32>} : memref<8x32xf32, #tpu.memory_space<vmem>>, vector<8x32xf32>,
      %cst_77 = arith.constant 0.000000e+00 : f32
      %136 = vector.broadcast %cst_77 : f32 to vector<8x32xf32>
      %c0_78 = arith.constant 0 : index
      %c0_79 = arith.constant 0 : index
      %137 = vector.load %arg10[%c0_78, %c0_79] : memref<8x32xf32, #tpu.memory_space<vmem>>, vector<8x32xf32>
      tpu.vector_store %arg10[%c0_78, %c0_79], %136 {strides = array<i32>} : memref<8x32xf32, #tpu.memory_space<vmem>>, vector<8x32xf32>,
      %cst_80 = arith.constant 0.000000e+00 : f32
      %138 = vector.broadcast %cst_80 : f32 to vector<8x32xf32>
      %c0_81 = arith.constant 0 : index
      %c0_82 = arith.constant 0 : index
      %139 = vector.load %arg11[%c0_81, %c0_82] : memref<8x32xf32, #tpu.memory_space<vmem>>, vector<8x32xf32>
      tpu.vector_store %arg11[%c0_81, %c0_82], %138 {strides = array<i32>} : memref<8x32xf32, #tpu.memory_space<vmem>>, vector<8x32xf32>,
    } else {
    }
    %c0 = arith.constant 0 : index
    %c0_1 = arith.constant 0 : index
    %c0_2 = arith.constant 0 : index
    %3 = vector.load %arg4[%c0, %c0_1, %c0_2] : memref<1x8x32xbf16, #tpu.memory_space<vmem>>, vector<1x8x32xbf16>
    %4 = vector.shape_cast %3 : vector<1x8x32xbf16> to vector<8x32xbf16>
    %c0_3 = arith.constant 0 : index
    %c0_4 = arith.constant 0 : index
    %c0_5 = arith.constant 0 : index
    %5 = vector.load %arg5[%c0_3, %c0_4, %c0_5] : memref<1x8x32xbf16, #tpu.memory_space<vmem>>, vector<1x8x32xbf16>
    %6 = vector.shape_cast %5 : vector<1x8x32xbf16> to vector<8x32xbf16>
    %c0_6 = arith.constant 0 : index
    %c0_7 = arith.constant 0 : index
    %c0_8 = arith.constant 0 : index
    %7 = vector.load %arg6[%c0_6, %c0_7, %c0_8] : memref<1x8x32xbf16, #tpu.memory_space<vmem>>, vector<1x8x32xbf16>
    %8 = vector.shape_cast %7 : vector<1x8x32xbf16> to vector<8x32xbf16>
    %c0_9 = arith.constant 0 : index
    %c0_10 = arith.constant 0 : index
    %c0_11 = arith.constant 0 : index
    %9 = vector.load %arg7[%c0_9, %c0_10, %c0_11] : memref<1x8x8xf32, #tpu.memory_space<vmem>>, vector<1x8x8xf32>
    %10 = vector.shape_cast %9 : vector<1x8x8xf32> to vector<8x8xf32>
    %11 = vector.extract_strided_slice %4 {offsets = [0, 0], sizes = [8, 8], strides = [1, 1]} : vector<8x32xbf16> to vector<8x8xbf16>
    %12 = vector.extract_strided_slice %6 {offsets = [0, 0], sizes = [8, 8], strides = [1, 1]} : vector<8x32xbf16> to vector<8x8xbf16>
    %cst = arith.constant dense<0.000000e+00> : vector<8x8xf32>
    %13 = tpu.matmul %11, %12, %cst {dimension_numbers = #tpu.dot_dimension_numbers<[1], [1], [0], [0], [0, 0, 1, 0], [], []>} : vector<8x8xbf16>, vector<8x8xbf16>, vector<8x8xf32> -> vector<8x8xf32>
    %14 = arith.addf %13, %10 : vector<8x8xf32>
    %c0_12 = arith.constant 0 : index
    %c0_13 = arith.constant 0 : index
    %15 = vector.load %arg9[%c0_12, %c0_13] : memref<8x32xf32, #tpu.memory_space<vmem>>, vector<8x8xf32>
    %cst_14 = arith.constant dense<0xFF800000> : vector<8xf32>
    %16 = vector.multi_reduction <maximumf>, %14, %cst_14 [1] : vector<8x8xf32> to vector<8xf32>
    %17 = vector.shape_cast %16 : vector<8xf32> to vector<8x1xf32>
    %18 = vector.broadcast %17 : vector<8x1xf32> to vector<8x8xf32>
    %19 = arith.maximumf %15, %18 : vector<8x8xf32>
    %20 = arith.subf %15, %19 : vector<8x8xf32>
    %21 = math.exp %20 : vector<8x8xf32>
    %22 = vector.extract_strided_slice %19 {offsets = [0, 0], sizes = [8, 1], strides = [1, 1]} : vector<8x8xf32> to vector<8x1xf32>
    %23 = vector.broadcast %22 : vector<8x1xf32> to vector<8x8xf32>
    %24 = arith.subf %14, %23 : vector<8x8xf32>
    %25 = math.exp %24 : vector<8x8xf32>
    %c0_15 = arith.constant 0 : index
    %c0_16 = arith.constant 0 : index
    %26 = vector.load %arg10[%c0_15, %c0_16] : memref<8x32xf32, #tpu.memory_space<vmem>>, vector<8x8xf32>
    %27 = arith.mulf %21, %26 : vector<8x8xf32>
    %cst_17 = arith.constant dense<0.000000e+00> : vector<8xf32>
    %28 = vector.multi_reduction <add>, %25, %cst_17 [1] : vector<8x8xf32> to vector<8xf32>
    %29 = vector.shape_cast %28 : vector<8xf32> to vector<8x1xf32>
    %30 = vector.broadcast %29 : vector<8x1xf32> to vector<8x8xf32>
    %31 = arith.addf %27, %30 : vector<8x8xf32>
    %c0_18 = arith.constant 0 : index
    %c0_19 = arith.constant 0 : index
    %32 = vector.load %arg10[%c0_18, %c0_19] : memref<8x32xf32, #tpu.memory_space<vmem>>, vector<8x8xf32>
    tpu.vector_store %arg10[%c0_18, %c0_19], %31 {strides = array<i32>} : memref<8x32xf32, #tpu.memory_space<vmem>>, vector<8x8xf32>,
    %c0_20 = arith.constant 0 : index
    %c0_21 = arith.constant 0 : index
    %33 = vector.load %arg11[%c0_20, %c0_21] : memref<8x32xf32, #tpu.memory_space<vmem>>, vector<8x8xf32>
    %34 = arith.mulf %21, %33 : vector<8x8xf32>
    %35 = arith.truncf %25 : vector<8x8xf32> to vector<8x8xbf16>
    %36 = vector.extract_strided_slice %8 {offsets = [0, 0], sizes = [8, 8], strides = [1, 1]} : vector<8x32xbf16> to vector<8x8xbf16>
    %cst_22 = arith.constant dense<0.000000e+00> : vector<8x8xf32>
    %37 = tpu.matmul %35, %36, %cst_22 {dimension_numbers = #tpu.dot_dimension_numbers<[1], [0], [0], [1], [0, 0, 1, 1], [], []>} : vector<8x8xbf16>, vector<8x8xbf16>, vector<8x8xf32> -> vector<8x8xf32>
    %38 = arith.addf %34, %37 : vector<8x8xf32>
    %c0_23 = arith.constant 0 : index
    %c0_24 = arith.constant 0 : index
    %39 = vector.load %arg11[%c0_23, %c0_24] : memref<8x32xf32, #tpu.memory_space<vmem>>, vector<8x8xf32>
    tpu.vector_store %arg11[%c0_23, %c0_24], %38 {strides = array<i32>} : memref<8x32xf32, #tpu.memory_space<vmem>>, vector<8x8xf32>,
    %c0_25 = arith.constant 0 : index
    %c0_26 = arith.constant 0 : index
    %40 = vector.load %arg9[%c0_25, %c0_26] : memref<8x32xf32, #tpu.memory_space<vmem>>, vector<8x8xf32>
    tpu.vector_store %arg9[%c0_25, %c0_26], %19 {strides = array<i32>} : memref<8x32xf32, #tpu.memory_space<vmem>>, vector<8x8xf32>,
    %41 = vector.extract_strided_slice %4 {offsets = [0, 8], sizes = [8, 8], strides = [1, 1]} : vector<8x32xbf16> to vector<8x8xbf16>
    %42 = vector.extract_strided_slice %6 {offsets = [0, 8], sizes = [8, 8], strides = [1, 1]} : vector<8x32xbf16> to vector<8x8xbf16>
    %cst_27 = arith.constant dense<0.000000e+00> : vector<8x8xf32>
    %43 = tpu.matmul %41, %42, %cst_27 {dimension_numbers = #tpu.dot_dimension_numbers<[1], [1], [0], [0], [0, 0, 1, 0], [], []>} : vector<8x8xbf16>, vector<8x8xbf16>, vector<8x8xf32> -> vector<8x8xf32>
    %44 = arith.addf %43, %10 : vector<8x8xf32>
    %c0_28 = arith.constant 0 : index
    %c8 = arith.constant 8 : index
    %45 = vector.load %arg9[%c0_28, %c8] : memref<8x32xf32, #tpu.memory_space<vmem>>, vector<8x8xf32>
    %cst_29 = arith.constant dense<0xFF800000> : vector<8xf32>
    %46 = vector.multi_reduction <maximumf>, %44, %cst_29 [1] : vector<8x8xf32> to vector<8xf32>
    %47 = vector.shape_cast %46 : vector<8xf32> to vector<8x1xf32>
    %48 = vector.broadcast %47 : vector<8x1xf32> to vector<8x8xf32>
    %49 = arith.maximumf %45, %48 : vector<8x8xf32>
    %50 = arith.subf %45, %49 : vector<8x8xf32>
    %51 = math.exp %50 : vector<8x8xf32>
    %52 = vector.extract_strided_slice %49 {offsets = [0, 0], sizes = [8, 1], strides = [1, 1]} : vector<8x8xf32> to vector<8x1xf32>
    %53 = vector.broadcast %52 : vector<8x1xf32> to vector<8x8xf32>
    %54 = arith.subf %44, %53 : vector<8x8xf32>
    %55 = math.exp %54 : vector<8x8xf32>
    %c0_30 = arith.constant 0 : index
    %c8_31 = arith.constant 8 : index
    %56 = vector.load %arg10[%c0_30, %c8_31] : memref<8x32xf32, #tpu.memory_space<vmem>>, vector<8x8xf32>
    %57 = arith.mulf %51, %56 : vector<8x8xf32>
    %cst_32 = arith.constant dense<0.000000e+00> : vector<8xf32>
    %58 = vector.multi_reduction <add>, %55, %cst_32 [1] : vector<8x8xf32> to vector<8xf32>
    %59 = vector.shape_cast %58 : vector<8xf32> to vector<8x1xf32>
    %60 = vector.broadcast %59 : vector<8x1xf32> to vector<8x8xf32>
    %61 = arith.addf %57, %60 : vector<8x8xf32>
    %c0_33 = arith.constant 0 : index
    %c8_34 = arith.constant 8 : index
    %62 = vector.load %arg10[%c0_33, %c8_34] : memref<8x32xf32, #tpu.memory_space<vmem>>, vector<8x8xf32>
    tpu.vector_store %arg10[%c0_33, %c8_34], %61 {strides = array<i32>} : memref<8x32xf32, #tpu.memory_space<vmem>>, vector<8x8xf32>,
    %c0_35 = arith.constant 0 : index
    %c8_36 = arith.constant 8 : index
    %63 = vector.load %arg11[%c0_35, %c8_36] : memref<8x32xf32, #tpu.memory_space<vmem>>, vector<8x8xf32>
    %64 = arith.mulf %51, %63 : vector<8x8xf32>
    %65 = arith.truncf %55 : vector<8x8xf32> to vector<8x8xbf16>
    %66 = vector.extract_strided_slice %8 {offsets = [0, 8], sizes = [8, 8], strides = [1, 1]} : vector<8x32xbf16> to vector<8x8xbf16>
    %cst_37 = arith.constant dense<0.000000e+00> : vector<8x8xf32>
    %67 = tpu.matmul %65, %66, %cst_37 {dimension_numbers = #tpu.dot_dimension_numbers<[1], [0], [0], [1], [0, 0, 1, 1], [], []>} : vector<8x8xbf16>, vector<8x8xbf16>, vector<8x8xf32> -> vector<8x8xf32>
    %68 = arith.addf %64, %67 : vector<8x8xf32>
    %c0_38 = arith.constant 0 : index
    %c8_39 = arith.constant 8 : index
    %69 = vector.load %arg11[%c0_38, %c8_39] : memref<8x32xf32, #tpu.memory_space<vmem>>, vector<8x8xf32>
    tpu.vector_store %arg11[%c0_38, %c8_39], %68 {strides = array<i32>} : memref<8x32xf32, #tpu.memory_space<vmem>>, vector<8x8xf32>,
    %c0_40 = arith.constant 0 : index
    %c8_41 = arith.constant 8 : index
    %70 = vector.load %arg9[%c0_40, %c8_41] : memref<8x32xf32, #tpu.memory_space<vmem>>, vector<8x8xf32>
    tpu.vector_store %arg9[%c0_40, %c8_41], %49 {strides = array<i32>} : memref<8x32xf32, #tpu.memory_space<vmem>>, vector<8x8xf32>,
    %71 = vector.extract_strided_slice %4 {offsets = [0, 16], sizes = [8, 8], strides = [1, 1]} : vector<8x32xbf16> to vector<8x8xbf16>
    %72 = vector.extract_strided_slice %6 {offsets = [0, 16], sizes = [8, 8], strides = [1, 1]} : vector<8x32xbf16> to vector<8x8xbf16>
    %cst_42 = arith.constant dense<0.000000e+00> : vector<8x8xf32>
    %73 = tpu.matmul %71, %72, %cst_42 {dimension_numbers = #tpu.dot_dimension_numbers<[1], [1], [0], [0], [0, 0, 1, 0], [], []>} : vector<8x8xbf16>, vector<8x8xbf16>, vector<8x8xf32> -> vector<8x8xf32>
    %74 = arith.addf %73, %10 : vector<8x8xf32>
    %c0_43 = arith.constant 0 : index
    %c16 = arith.constant 16 : index
    %75 = vector.load %arg9[%c0_43, %c16] : memref<8x32xf32, #tpu.memory_space<vmem>>, vector<8x8xf32>
    %cst_44 = arith.constant dense<0xFF800000> : vector<8xf32>
    %76 = vector.multi_reduction <maximumf>, %74, %cst_44 [1] : vector<8x8xf32> to vector<8xf32>
    %77 = vector.shape_cast %76 : vector<8xf32> to vector<8x1xf32>
    %78 = vector.broadcast %77 : vector<8x1xf32> to vector<8x8xf32>
    %79 = arith.maximumf %75, %78 : vector<8x8xf32>
    %80 = arith.subf %75, %79 : vector<8x8xf32>
    %81 = math.exp %80 : vector<8x8xf32>
    %82 = vector.extract_strided_slice %79 {offsets = [0, 0], sizes = [8, 1], strides = [1, 1]} : vector<8x8xf32> to vector<8x1xf32>
    %83 = vector.broadcast %82 : vector<8x1xf32> to vector<8x8xf32>
    %84 = arith.subf %74, %83 : vector<8x8xf32>
    %85 = math.exp %84 : vector<8x8xf32>
    %c0_45 = arith.constant 0 : index
    %c16_46 = arith.constant 16 : index
    %86 = vector.load %arg10[%c0_45, %c16_46] : memref<8x32xf32, #tpu.memory_space<vmem>>, vector<8x8xf32>
    %87 = arith.mulf %81, %86 : vector<8x8xf32>
    %cst_47 = arith.constant dense<0.000000e+00> : vector<8xf32>
    %88 = vector.multi_reduction <add>, %85, %cst_47 [1] : vector<8x8xf32> to vector<8xf32>
    %89 = vector.shape_cast %88 : vector<8xf32> to vector<8x1xf32>
    %90 = vector.broadcast %89 : vector<8x1xf32> to vector<8x8xf32>
    %91 = arith.addf %87, %90 : vector<8x8xf32>
    %c0_48 = arith.constant 0 : index
    %c16_49 = arith.constant 16 : index
    %92 = vector.load %arg10[%c0_48, %c16_49] : memref<8x32xf32, #tpu.memory_space<vmem>>, vector<8x8xf32>
    tpu.vector_store %arg10[%c0_48, %c16_49], %91 {strides = array<i32>} : memref<8x32xf32, #tpu.memory_space<vmem>>, vector<8x8xf32>,
    %c0_50 = arith.constant 0 : index
    %c16_51 = arith.constant 16 : index
    %93 = vector.load %arg11[%c0_50, %c16_51] : memref<8x32xf32, #tpu.memory_space<vmem>>, vector<8x8xf32>
    %94 = arith.mulf %81, %93 : vector<8x8xf32>
    %95 = arith.truncf %85 : vector<8x8xf32> to vector<8x8xbf16>
    %96 = vector.extract_strided_slice %8 {offsets = [0, 16], sizes = [8, 8], strides = [1, 1]} : vector<8x32xbf16> to vector<8x8xbf16>
    %cst_52 = arith.constant dense<0.000000e+00> : vector<8x8xf32>
    %97 = tpu.matmul %95, %96, %cst_52 {dimension_numbers = #tpu.dot_dimension_numbers<[1], [0], [0], [1], [0, 0, 1, 1], [], []>} : vector<8x8xbf16>, vector<8x8xbf16>, vector<8x8xf32> -> vector<8x8xf32>
    %98 = arith.addf %94, %97 : vector<8x8xf32>
    %c0_53 = arith.constant 0 : index
    %c16_54 = arith.constant 16 : index
    %99 = vector.load %arg11[%c0_53, %c16_54] : memref<8x32xf32, #tpu.memory_space<vmem>>, vector<8x8xf32>
    tpu.vector_store %arg11[%c0_53, %c16_54], %98 {strides = array<i32>} : memref<8x32xf32, #tpu.memory_space<vmem>>, vector<8x8xf32>,
    %c0_55 = arith.constant 0 : index
    %c16_56 = arith.constant 16 : index
    %100 = vector.load %arg9[%c0_55, %c16_56] : memref<8x32xf32, #tpu.memory_space<vmem>>, vector<8x8xf32>
    tpu.vector_store %arg9[%c0_55, %c16_56], %79 {strides = array<i32>} : memref<8x32xf32, #tpu.memory_space<vmem>>, vector<8x8xf32>,
    %101 = vector.extract_strided_slice %4 {offsets = [0, 24], sizes = [8, 8], strides = [1, 1]} : vector<8x32xbf16> to vector<8x8xbf16>
    %102 = vector.extract_strided_slice %6 {offsets = [0, 24], sizes = [8, 8], strides = [1, 1]} : vector<8x32xbf16> to vector<8x8xbf16>
    %cst_57 = arith.constant dense<0.000000e+00> : vector<8x8xf32>
    %103 = tpu.matmul %101, %102, %cst_57 {dimension_numbers = #tpu.dot_dimension_numbers<[1], [1], [0], [0], [0, 0, 1, 0], [], []>} : vector<8x8xbf16>, vector<8x8xbf16>, vector<8x8xf32> -> vector<8x8xf32>
    %104 = arith.addf %103, %10 : vector<8x8xf32>
    %c0_58 = arith.constant 0 : index
    %c24 = arith.constant 24 : index
    %105 = vector.load %arg9[%c0_58, %c24] : memref<8x32xf32, #tpu.memory_space<vmem>>, vector<8x8xf32>
    %cst_59 = arith.constant dense<0xFF800000> : vector<8xf32>
    %106 = vector.multi_reduction <maximumf>, %104, %cst_59 [1] : vector<8x8xf32> to vector<8xf32>
    %107 = vector.shape_cast %106 : vector<8xf32> to vector<8x1xf32>
    %108 = vector.broadcast %107 : vector<8x1xf32> to vector<8x8xf32>
    %109 = arith.maximumf %105, %108 : vector<8x8xf32>
    %110 = arith.subf %105, %109 : vector<8x8xf32>
    %111 = math.exp %110 : vector<8x8xf32>
    %112 = vector.extract_strided_slice %109 {offsets = [0, 0], sizes = [8, 1], strides = [1, 1]} : vector<8x8xf32> to vector<8x1xf32>
    %113 = vector.broadcast %112 : vector<8x1xf32> to vector<8x8xf32>
    %114 = arith.subf %104, %113 : vector<8x8xf32>
    %115 = math.exp %114 : vector<8x8xf32>
    %c0_60 = arith.constant 0 : index
    %c24_61 = arith.constant 24 : index
    %116 = vector.load %arg10[%c0_60, %c24_61] : memref<8x32xf32, #tpu.memory_space<vmem>>, vector<8x8xf32>
    %117 = arith.mulf %111, %116 : vector<8x8xf32>
    %cst_62 = arith.constant dense<0.000000e+00> : vector<8xf32>
    %118 = vector.multi_reduction <add>, %115, %cst_62 [1] : vector<8x8xf32> to vector<8xf32>
    %119 = vector.shape_cast %118 : vector<8xf32> to vector<8x1xf32>
    %120 = vector.broadcast %119 : vector<8x1xf32> to vector<8x8xf32>
    %121 = arith.addf %117, %120 : vector<8x8xf32>
    %c0_63 = arith.constant 0 : index
    %c24_64 = arith.constant 24 : index
    %122 = vector.load %arg10[%c0_63, %c24_64] : memref<8x32xf32, #tpu.memory_space<vmem>>, vector<8x8xf32>
    tpu.vector_store %arg10[%c0_63, %c24_64], %121 {strides = array<i32>} : memref<8x32xf32, #tpu.memory_space<vmem>>, vector<8x8xf32>,
    %c0_65 = arith.constant 0 : index
    %c24_66 = arith.constant 24 : index
    %123 = vector.load %arg11[%c0_65, %c24_66] : memref<8x32xf32, #tpu.memory_space<vmem>>, vector<8x8xf32>
    %124 = arith.mulf %111, %123 : vector<8x8xf32>
    %125 = arith.truncf %115 : vector<8x8xf32> to vector<8x8xbf16>
    %126 = vector.extract_strided_slice %8 {offsets = [0, 24], sizes = [8, 8], strides = [1, 1]} : vector<8x32xbf16> to vector<8x8xbf16>
    %cst_67 = arith.constant dense<0.000000e+00> : vector<8x8xf32>
    %127 = tpu.matmul %125, %126, %cst_67 {dimension_numbers = #tpu.dot_dimension_numbers<[1], [0], [0], [1], [0, 0, 1, 1], [], []>} : vector<8x8xbf16>, vector<8x8xbf16>, vector<8x8xf32> -> vector<8x8xf32>
    %128 = arith.addf %124, %127 : vector<8x8xf32>
    %c0_68 = arith.constant 0 : index
    %c24_69 = arith.constant 24 : index
    %129 = vector.load %arg11[%c0_68, %c24_69] : memref<8x32xf32, #tpu.memory_space<vmem>>, vector<8x8xf32>
    tpu.vector_store %arg11[%c0_68, %c24_69], %128 {strides = array<i32>} : memref<8x32xf32, #tpu.memory_space<vmem>>, vector<8x8xf32>,
    %c0_70 = arith.constant 0 : index
    %c24_71 = arith.constant 24 : index
    %130 = vector.load %arg9[%c0_70, %c24_71] : memref<8x32xf32, #tpu.memory_space<vmem>>, vector<8x8xf32>
    tpu.vector_store %arg9[%c0_70, %c24_71], %109 {strides = array<i32>} : memref<8x32xf32, #tpu.memory_space<vmem>>, vector<8x8xf32>,
    %c0_i32_72 = arith.constant 0 : i32
    %131 = arith.cmpi eq, %arg3, %c0_i32_72 : i32
    %132 = arith.extui %131 : i1 to i32
    %c0_i32_73 = arith.constant 0 : i32
    %133 = arith.cmpi ne, %132, %c0_i32_73 : i32
    scf.if %133 {
      %c0_74 = arith.constant 0 : index
      %c0_75 = arith.constant 0 : index
      %134 = vector.load %arg11[%c0_74, %c0_75] : memref<8x32xf32, #tpu.memory_space<vmem>>, vector<8x32xf32>
      %c0_76 = arith.constant 0 : index
      %c0_77 = arith.constant 0 : index
      %135 = vector.load %arg10[%c0_76, %c0_77] : memref<8x32xf32, #tpu.memory_space<vmem>>, vector<8x32xf32>
      %136 = tpu.reciprocal %135 {approx = true} : vector<8x32xf32> -> vector<8x32xf32>
      %137 = arith.mulf %134, %136 : vector<8x32xf32>
      %138 = arith.truncf %137 : vector<8x32xf32> to vector<8x32xbf16>
      %c0_78 = arith.constant 0 : index
      %c0_79 = arith.constant 0 : index
      %c0_80 = arith.constant 0 : index
      %139 = vector.load %arg8[%c0_78, %c0_79, %c0_80] : memref<1x8x32xbf16, #tpu.memory_space<vmem>>, vector<1x8x32xbf16>
      %140 = vector.shape_cast %139 : vector<1x8x32xbf16> to vector<8x32xbf16>
      %141 = vector.shape_cast %138 : vector<8x32xbf16> to vector<1x8x32xbf16>
      tpu.vector_store %arg8[%c0_78, %c0_79, %c0_80], %141 {strides = array<i32>} : memref<1x8x32xbf16, #tpu.memory_space<vmem>>, vector<1x8x32xbf16>,
    } else {
    }
    return
  }
  func.func @transform_0(%arg0: i32, %arg1: i32, %arg2: i32, %arg3: i32) -> (i32, i32, i32) {
    %c0_i32 = arith.constant 0 : i32
    return %arg0, %arg2, %arg1 : i32, i32, i32
  }
  func.func @transform_1(%arg0: i32, %arg1: i32, %arg2: i32, %arg3: i32) -> (i32, i32, i32) {
    %c0_i32 = arith.constant 0 : i32
    return %arg0, %arg3, %arg1 : i32, i32, i32
  }
  func.func @transform_2(%arg0: i32, %arg1: i32, %arg2: i32, %arg3: i32) -> (i32, i32, i32) {
    %c0_i32 = arith.constant 0 : i32
    return %arg0, %arg3, %arg1 : i32, i32, i32
  }
  func.func @transform_3(%arg0: i32, %arg1: i32, %arg2: i32, %arg3: i32) -> (i32, i32, i32) {
    %c0_i32 = arith.constant 0 : i32
    return %arg0, %arg2, %arg3 : i32, i32, i32
  }
  func.func @transform_4(%arg0: i32, %arg1: i32, %arg2: i32, %arg3: i32) -> (i32, i32, i32) {
    %c0_i32 = arith.constant 0 : i32
    return %arg0, %arg2, %arg1 : i32, i32, i32
  }
}

module attributes {stable_mosaic.version = 11 : i64} {
  func.func @_ln_matmul_kernel(%arg0: i32, %arg1: i32, %arg2: memref<16x32xf32, #tpu.memory_space<vmem>>, %arg3: memref<1x32xf32, #tpu.memory_space<vmem>>, %arg4: memref<1x32xf32, #tpu.memory_space<vmem>>, %arg5: memref<32x32xbf16, #tpu.memory_space<vmem>>, %arg6: memref<1x32xf32, #tpu.memory_space<vmem>>, %arg7: memref<16x32xbf16, #tpu.memory_space<vmem>>, %arg8: memref<16x32xbf16, #tpu.memory_space<vmem>>) attributes {dimension_semantics = [#tpu.dimension_semantics<parallel>, #tpu.dimension_semantics<arbitrary>], iteration_bounds = array<i64: 1, 1>, scalar_prefetch = 0 : i64, scratch_operands = 1 : i64, tpu.core_type = #tpu.core_type<tc>, window_params = [{transform_indices = @transform_0, window_bounds = array<i64: 16, 32>}, {pipeline_mode = #tpu.pipeline_mode<synchronous>, transform_indices = @transform_1, window_bounds = array<i64: 1, 32>}, {pipeline_mode = #tpu.pipeline_mode<synchronous>, transform_indices = @transform_2, window_bounds = array<i64: 1, 32>}, {transform_indices = @transform_3, window_bounds = array<i64: 32, 32>}, {transform_indices = @transform_4, window_bounds = array<i64: 1, 32>}, {transform_indices = @transform_5, window_bounds = array<i64: 16, 32>}]} {
    %c0_i32 = arith.constant 0 : i32
    %0 = arith.cmpi eq, %arg1, %c0_i32 : i32
    %1 = arith.extui %0 : i1 to i32
    %c0_i32_0 = arith.constant 0 : i32
    %2 = arith.cmpi ne, %1, %c0_i32_0 : i32
    scf.if %2 {
      %c0_8 = arith.constant 0 : index
      %c0_9 = arith.constant 0 : index
      %11 = vector.load %arg2[%c0_8, %c0_9] : memref<16x32xf32, #tpu.memory_space<vmem>>, vector<16x32xf32>
      %c0_10 = arith.constant 0 : index
      %c0_11 = arith.constant 0 : index
      %12 = vector.load %arg3[%c0_10, %c0_11] : memref<1x32xf32, #tpu.memory_space<vmem>>, vector<1x32xf32>
      %c0_12 = arith.constant 0 : index
      %c0_13 = arith.constant 0 : index
      %13 = vector.load %arg4[%c0_12, %c0_13] : memref<1x32xf32, #tpu.memory_space<vmem>>, vector<1x32xf32>
      %cst_14 = arith.constant dense<0.000000e+00> : vector<16xf32>
      %14 = vector.multi_reduction <add>, %11, %cst_14 [1] : vector<16x32xf32> to vector<16xf32>
      %15 = vector.shape_cast %14 : vector<16xf32> to vector<16x1xf32>
      %cst_15 = arith.constant 3.200000e+01 : f32
      %16 = vector.broadcast %cst_15 : f32 to vector<16x1xf32>
      %17 = arith.divf %15, %16 : vector<16x1xf32>
      %18 = vector.broadcast %17 : vector<16x1xf32> to vector<16x32xf32>
      %19 = arith.subf %11, %18 : vector<16x32xf32>
      %20 = arith.mulf %19, %19 : vector<16x32xf32>
      %cst_16 = arith.constant dense<0.000000e+00> : vector<16xf32>
      %21 = vector.multi_reduction <add>, %20, %cst_16 [1] : vector<16x32xf32> to vector<16xf32>
      %22 = vector.shape_cast %21 : vector<16xf32> to vector<16x1xf32>
      %cst_17 = arith.constant 3.200000e+01 : f32
      %23 = vector.broadcast %cst_17 : f32 to vector<16x1xf32>
      %24 = arith.divf %22, %23 : vector<16x1xf32>
      %cst_18 = arith.constant 9.99999974E-6 : f32
      %25 = vector.broadcast %cst_18 : f32 to vector<16x1xf32>
      %26 = arith.addf %24, %25 : vector<16x1xf32>
      %27 = math.rsqrt %26 : vector<16x1xf32>
      %28 = vector.broadcast %27 : vector<16x1xf32> to vector<16x32xf32>
      %29 = arith.mulf %19, %28 : vector<16x32xf32>
      %30 = vector.broadcast %12 : vector<1x32xf32> to vector<16x32xf32>
      %31 = arith.mulf %29, %30 : vector<16x32xf32>
      %32 = vector.broadcast %13 : vector<1x32xf32> to vector<16x32xf32>
      %33 = arith.addf %31, %32 : vector<16x32xf32>
      %34 = arith.truncf %33 : vector<16x32xf32> to vector<16x32xbf16>
      %c0_19 = arith.constant 0 : index
      %c0_20 = arith.constant 0 : index
      %35 = vector.load %arg8[%c0_19, %c0_20] : memref<16x32xbf16, #tpu.memory_space<vmem>>, vector<16x32xbf16>
      tpu.vector_store %arg8[%c0_19, %c0_20], %34 {strides = array<i32>} : memref<16x32xbf16, #tpu.memory_space<vmem>>, vector<16x32xbf16>,
    } else {
    }
    %c0 = arith.constant 0 : index
    %c0_1 = arith.constant 0 : index
    %3 = vector.load %arg8[%c0, %c0_1] : memref<16x32xbf16, #tpu.memory_space<vmem>>, vector<16x32xbf16>
    %c0_2 = arith.constant 0 : index
    %c0_3 = arith.constant 0 : index
    %4 = vector.load %arg5[%c0_2, %c0_3] : memref<32x32xbf16, #tpu.memory_space<vmem>>, vector<32x32xbf16>
    %cst = arith.constant dense<0.000000e+00> : vector<16x32xf32>
    %5 = tpu.matmul %3, %4, %cst {dimension_numbers = #tpu.dot_dimension_numbers<[1], [0], [0], [1], [0, 0, 1, 1], [], []>} : vector<16x32xbf16>, vector<32x32xbf16>, vector<16x32xf32> -> vector<16x32xf32>
    %c0_4 = arith.constant 0 : index
    %c0_5 = arith.constant 0 : index
    %6 = vector.load %arg6[%c0_4, %c0_5] : memref<1x32xf32, #tpu.memory_space<vmem>>, vector<1x32xf32>
    %7 = vector.broadcast %6 : vector<1x32xf32> to vector<16x32xf32>
    %8 = arith.addf %5, %7 : vector<16x32xf32>
    %9 = arith.truncf %8 : vector<16x32xf32> to vector<16x32xbf16>
    %c0_6 = arith.constant 0 : index
    %c0_7 = arith.constant 0 : index
    %10 = vector.load %arg7[%c0_6, %c0_7] : memref<16x32xbf16, #tpu.memory_space<vmem>>, vector<16x32xbf16>
    tpu.vector_store %arg7[%c0_6, %c0_7], %9 {strides = array<i32>} : memref<16x32xbf16, #tpu.memory_space<vmem>>, vector<16x32xbf16>,
    return
  }
  func.func @transform_0(%arg0: i32, %arg1: i32) -> (i32, i32) {
    %c0_i32 = arith.constant 0 : i32
    %c0_i32_0 = arith.constant 0 : i32
    return %arg0, %c0_i32 : i32, i32
  }
  func.func @transform_1(%arg0: i32, %arg1: i32) -> (i32, i32) {
    %c0_i32 = arith.constant 0 : i32
    %c0_i32_0 = arith.constant 0 : i32
    %c0_i32_1 = arith.constant 0 : i32
    return %c0_i32, %c0_i32_0 : i32, i32
  }
  func.func @transform_2(%arg0: i32, %arg1: i32) -> (i32, i32) {
    %c0_i32 = arith.constant 0 : i32
    %c0_i32_0 = arith.constant 0 : i32
    %c0_i32_1 = arith.constant 0 : i32
    return %c0_i32, %c0_i32_0 : i32, i32
  }
  func.func @transform_3(%arg0: i32, %arg1: i32) -> (i32, i32) {
    %c0_i32 = arith.constant 0 : i32
    %c0_i32_0 = arith.constant 0 : i32
    return %c0_i32, %arg1 : i32, i32
  }
  func.func @transform_4(%arg0: i32, %arg1: i32) -> (i32, i32) {
    %c0_i32 = arith.constant 0 : i32
    %c0_i32_0 = arith.constant 0 : i32
    return %c0_i32, %arg1 : i32, i32
  }
  func.func @transform_5(%arg0: i32, %arg1: i32) -> (i32, i32) {
    %c0_i32 = arith.constant 0 : i32
    return %arg0, %arg1 : i32, i32
  }
}

module attributes {stable_mosaic.version = 11 : i64} {
  func.func @_attention_kernel(%arg0: i32, %arg1: i32, %arg2: i32, %arg3: i32, %arg4: memref<1x8x32xbf16, #tpu.memory_space<vmem>>, %arg5: memref<1x8x32xbf16, #tpu.memory_space<vmem>>, %arg6: memref<1x8x32xbf16, #tpu.memory_space<vmem>>, %arg7: memref<1x8x32xbf16, #tpu.memory_space<vmem>>, %arg8: memref<8x32xf32, #tpu.memory_space<vmem>>, %arg9: memref<8x32xf32, #tpu.memory_space<vmem>>, %arg10: memref<8x32xf32, #tpu.memory_space<vmem>>) attributes {dimension_semantics = [#tpu.dimension_semantics<parallel>, #tpu.dimension_semantics<parallel>, #tpu.dimension_semantics<parallel>, #tpu.dimension_semantics<arbitrary>], iteration_bounds = array<i64: 2, 1, 1, 1>, scalar_prefetch = 0 : i64, scratch_operands = 3 : i64, tpu.core_type = #tpu.core_type<tc>, window_params = [{transform_indices = @transform_0, window_bounds = array<i64: 1, 8, 32>}, {transform_indices = @transform_1, window_bounds = array<i64: 1, 8, 32>}, {transform_indices = @transform_2, window_bounds = array<i64: 1, 8, 32>}, {transform_indices = @transform_3, window_bounds = array<i64: 1, 8, 32>}]} {
    %c0_i32 = arith.constant 0 : i32
    %0 = arith.cmpi eq, %arg3, %c0_i32 : i32
    %1 = arith.extui %0 : i1 to i32
    %c0_i32_0 = arith.constant 0 : i32
    %2 = arith.cmpi ne, %1, %c0_i32_0 : i32
    scf.if %2 {
      %cst_71 = arith.constant -1.000000e+30 : f32
      %128 = vector.broadcast %cst_71 : f32 to vector<8x32xf32>
      %c0_72 = arith.constant 0 : index
      %c0_73 = arith.constant 0 : index
      %129 = vector.load %arg8[%c0_72, %c0_73] : memref<8x32xf32, #tpu.memory_space<vmem>>, vector<8x32xf32>
      tpu.vector_store %arg8[%c0_72, %c0_73], %128 {strides = array<i32>} : memref<8x32xf32, #tpu.memory_space<vmem>>, vector<8x32xf32>,
      %cst_74 = arith.constant 0.000000e+00 : f32
      %130 = vector.broadcast %cst_74 : f32 to vector<8x32xf32>
      %c0_75 = arith.constant 0 : index
      %c0_76 = arith.constant 0 : index
      %131 = vector.load %arg9[%c0_75, %c0_76] : memref<8x32xf32, #tpu.memory_space<vmem>>, vector<8x32xf32>
      tpu.vector_store %arg9[%c0_75, %c0_76], %130 {strides = array<i32>} : memref<8x32xf32, #tpu.memory_space<vmem>>, vector<8x32xf32>,
      %cst_77 = arith.constant 0.000000e+00 : f32
      %132 = vector.broadcast %cst_77 : f32 to vector<8x32xf32>
      %c0_78 = arith.constant 0 : index
      %c0_79 = arith.constant 0 : index
      %133 = vector.load %arg10[%c0_78, %c0_79] : memref<8x32xf32, #tpu.memory_space<vmem>>, vector<8x32xf32>
      tpu.vector_store %arg10[%c0_78, %c0_79], %132 {strides = array<i32>} : memref<8x32xf32, #tpu.memory_space<vmem>>, vector<8x32xf32>,
    } else {
    }
    %c0 = arith.constant 0 : index
    %c0_1 = arith.constant 0 : index
    %c0_2 = arith.constant 0 : index
    %3 = vector.load %arg4[%c0, %c0_1, %c0_2] : memref<1x8x32xbf16, #tpu.memory_space<vmem>>, vector<1x8x32xbf16>
    %4 = vector.shape_cast %3 : vector<1x8x32xbf16> to vector<8x32xbf16>
    %c0_3 = arith.constant 0 : index
    %c0_4 = arith.constant 0 : index
    %c0_5 = arith.constant 0 : index
    %5 = vector.load %arg5[%c0_3, %c0_4, %c0_5] : memref<1x8x32xbf16, #tpu.memory_space<vmem>>, vector<1x8x32xbf16>
    %6 = vector.shape_cast %5 : vector<1x8x32xbf16> to vector<8x32xbf16>
    %c0_6 = arith.constant 0 : index
    %c0_7 = arith.constant 0 : index
    %c0_8 = arith.constant 0 : index
    %7 = vector.load %arg6[%c0_6, %c0_7, %c0_8] : memref<1x8x32xbf16, #tpu.memory_space<vmem>>, vector<1x8x32xbf16>
    %8 = vector.shape_cast %7 : vector<1x8x32xbf16> to vector<8x32xbf16>
    %9 = vector.extract_strided_slice %4 {offsets = [0, 0], sizes = [8, 8], strides = [1, 1]} : vector<8x32xbf16> to vector<8x8xbf16>
    %10 = vector.extract_strided_slice %6 {offsets = [0, 0], sizes = [8, 8], strides = [1, 1]} : vector<8x32xbf16> to vector<8x8xbf16>
    %cst = arith.constant dense<0.000000e+00> : vector<8x8xf32>
    %11 = tpu.matmul %9, %10, %cst {dimension_numbers = #tpu.dot_dimension_numbers<[1], [1], [0], [0], [0, 0, 1, 0], [], []>} : vector<8x8xbf16>, vector<8x8xbf16>, vector<8x8xf32> -> vector<8x8xf32>
    %c0_9 = arith.constant 0 : index
    %c0_10 = arith.constant 0 : index
    %12 = vector.load %arg8[%c0_9, %c0_10] : memref<8x32xf32, #tpu.memory_space<vmem>>, vector<8x8xf32>
    %cst_11 = arith.constant dense<0xFF800000> : vector<8xf32>
    %13 = vector.multi_reduction <maximumf>, %11, %cst_11 [1] : vector<8x8xf32> to vector<8xf32>
    %14 = vector.shape_cast %13 : vector<8xf32> to vector<8x1xf32>
    %15 = vector.broadcast %14 : vector<8x1xf32> to vector<8x8xf32>
    %16 = arith.maximumf %12, %15 : vector<8x8xf32>
    %17 = arith.subf %12, %16 : vector<8x8xf32>
    %18 = math.exp %17 : vector<8x8xf32>
    %19 = vector.extract_strided_slice %16 {offsets = [0, 0], sizes = [8, 1], strides = [1, 1]} : vector<8x8xf32> to vector<8x1xf32>
    %20 = vector.broadcast %19 : vector<8x1xf32> to vector<8x8xf32>
    %21 = arith.subf %11, %20 : vector<8x8xf32>
    %22 = math.exp %21 : vector<8x8xf32>
    %c0_12 = arith.constant 0 : index
    %c0_13 = arith.constant 0 : index
    %23 = vector.load %arg9[%c0_12, %c0_13] : memref<8x32xf32, #tpu.memory_space<vmem>>, vector<8x8xf32>
    %24 = arith.mulf %18, %23 : vector<8x8xf32>
    %cst_14 = arith.constant dense<0.000000e+00> : vector<8xf32>
    %25 = vector.multi_reduction <add>, %22, %cst_14 [1] : vector<8x8xf32> to vector<8xf32>
    %26 = vector.shape_cast %25 : vector<8xf32> to vector<8x1xf32>
    %27 = vector.broadcast %26 : vector<8x1xf32> to vector<8x8xf32>
    %28 = arith.addf %24, %27 : vector<8x8xf32>
    %c0_15 = arith.constant 0 : index
    %c0_16 = arith.constant 0 : index
    %29 = vector.load %arg9[%c0_15, %c0_16] : memref<8x32xf32, #tpu.memory_space<vmem>>, vector<8x8xf32>
    tpu.vector_store %arg9[%c0_15, %c0_16], %28 {strides = array<i32>} : memref<8x32xf32, #tpu.memory_space<vmem>>, vector<8x8xf32>,
    %c0_17 = arith.constant 0 : index
    %c0_18 = arith.constant 0 : index
    %30 = vector.load %arg10[%c0_17, %c0_18] : memref<8x32xf32, #tpu.memory_space<vmem>>, vector<8x8xf32>
    %31 = arith.mulf %18, %30 : vector<8x8xf32>
    %32 = arith.truncf %22 : vector<8x8xf32> to vector<8x8xbf16>
    %33 = vector.extract_strided_slice %8 {offsets = [0, 0], sizes = [8, 8], strides = [1, 1]} : vector<8x32xbf16> to vector<8x8xbf16>
    %cst_19 = arith.constant dense<0.000000e+00> : vector<8x8xf32>
    %34 = tpu.matmul %32, %33, %cst_19 {dimension_numbers = #tpu.dot_dimension_numbers<[1], [0], [0], [1], [0, 0, 1, 1], [], []>} : vector<8x8xbf16>, vector<8x8xbf16>, vector<8x8xf32> -> vector<8x8xf32>
    %35 = arith.addf %31, %34 : vector<8x8xf32>
    %c0_20 = arith.constant 0 : index
    %c0_21 = arith.constant 0 : index
    %36 = vector.load %arg10[%c0_20, %c0_21] : memref<8x32xf32, #tpu.memory_space<vmem>>, vector<8x8xf32>
    tpu.vector_store %arg10[%c0_20, %c0_21], %35 {strides = array<i32>} : memref<8x32xf32, #tpu.memory_space<vmem>>, vector<8x8xf32>,
    %c0_22 = arith.constant 0 : index
    %c0_23 = arith.constant 0 : index
    %37 = vector.load %arg8[%c0_22, %c0_23] : memref<8x32xf32, #tpu.memory_space<vmem>>, vector<8x8xf32>
    tpu.vector_store %arg8[%c0_22, %c0_23], %16 {strides = array<i32>} : memref<8x32xf32, #tpu.memory_space<vmem>>, vector<8x8xf32>,
    %38 = vector.extract_strided_slice %4 {offsets = [0, 8], sizes = [8, 8], strides = [1, 1]} : vector<8x32xbf16> to vector<8x8xbf16>
    %39 = vector.extract_strided_slice %6 {offsets = [0, 8], sizes = [8, 8], strides = [1, 1]} : vector<8x32xbf16> to vector<8x8xbf16>
    %cst_24 = arith.constant dense<0.000000e+00> : vector<8x8xf32>
    %40 = tpu.matmul %38, %39, %cst_24 {dimension_numbers = #tpu.dot_dimension_numbers<[1], [1], [0], [0], [0, 0, 1, 0], [], []>} : vector<8x8xbf16>, vector<8x8xbf16>, vector<8x8xf32> -> vector<8x8xf32>
    %c0_25 = arith.constant 0 : index
    %c8 = arith.constant 8 : index
    %41 = vector.load %arg8[%c0_25, %c8] : memref<8x32xf32, #tpu.memory_space<vmem>>, vector<8x8xf32>
    %cst_26 = arith.constant dense<0xFF800000> : vector<8xf32>
    %42 = vector.multi_reduction <maximumf>, %40, %cst_26 [1] : vector<8x8xf32> to vector<8xf32>
    %43 = vector.shape_cast %42 : vector<8xf32> to vector<8x1xf32>
    %44 = vector.broadcast %43 : vector<8x1xf32> to vector<8x8xf32>
    %45 = arith.maximumf %41, %44 : vector<8x8xf32>
    %46 = arith.subf %41, %45 : vector<8x8xf32>
    %47 = math.exp %46 : vector<8x8xf32>
    %48 = vector.extract_strided_slice %45 {offsets = [0, 0], sizes = [8, 1], strides = [1, 1]} : vector<8x8xf32> to vector<8x1xf32>
    %49 = vector.broadcast %48 : vector<8x1xf32> to vector<8x8xf32>
    %50 = arith.subf %40, %49 : vector<8x8xf32>
    %51 = math.exp %50 : vector<8x8xf32>
    %c0_27 = arith.constant 0 : index
    %c8_28 = arith.constant 8 : index
    %52 = vector.load %arg9[%c0_27, %c8_28] : memref<8x32xf32, #tpu.memory_space<vmem>>, vector<8x8xf32>
    %53 = arith.mulf %47, %52 : vector<8x8xf32>
    %cst_29 = arith.constant dense<0.000000e+00> : vector<8xf32>
    %54 = vector.multi_reduction <add>, %51, %cst_29 [1] : vector<8x8xf32> to vector<8xf32>
    %55 = vector.shape_cast %54 : vector<8xf32> to vector<8x1xf32>
    %56 = vector.broadcast %55 : vector<8x1xf32> to vector<8x8xf32>
    %57 = arith.addf %53, %56 : vector<8x8xf32>
    %c0_30 = arith.constant 0 : index
    %c8_31 = arith.constant 8 : index
    %58 = vector.load %arg9[%c0_30, %c8_31] : memref<8x32xf32, #tpu.memory_space<vmem>>, vector<8x8xf32>
    tpu.vector_store %arg9[%c0_30, %c8_31], %57 {strides = array<i32>} : memref<8x32xf32, #tpu.memory_space<vmem>>, vector<8x8xf32>,
    %c0_32 = arith.constant 0 : index
    %c8_33 = arith.constant 8 : index
    %59 = vector.load %arg10[%c0_32, %c8_33] : memref<8x32xf32, #tpu.memory_space<vmem>>, vector<8x8xf32>
    %60 = arith.mulf %47, %59 : vector<8x8xf32>
    %61 = arith.truncf %51 : vector<8x8xf32> to vector<8x8xbf16>
    %62 = vector.extract_strided_slice %8 {offsets = [0, 8], sizes = [8, 8], strides = [1, 1]} : vector<8x32xbf16> to vector<8x8xbf16>
    %cst_34 = arith.constant dense<0.000000e+00> : vector<8x8xf32>
    %63 = tpu.matmul %61, %62, %cst_34 {dimension_numbers = #tpu.dot_dimension_numbers<[1], [0], [0], [1], [0, 0, 1, 1], [], []>} : vector<8x8xbf16>, vector<8x8xbf16>, vector<8x8xf32> -> vector<8x8xf32>
    %64 = arith.addf %60, %63 : vector<8x8xf32>
    %c0_35 = arith.constant 0 : index
    %c8_36 = arith.constant 8 : index
    %65 = vector.load %arg10[%c0_35, %c8_36] : memref<8x32xf32, #tpu.memory_space<vmem>>, vector<8x8xf32>
    tpu.vector_store %arg10[%c0_35, %c8_36], %64 {strides = array<i32>} : memref<8x32xf32, #tpu.memory_space<vmem>>, vector<8x8xf32>,
    %c0_37 = arith.constant 0 : index
    %c8_38 = arith.constant 8 : index
    %66 = vector.load %arg8[%c0_37, %c8_38] : memref<8x32xf32, #tpu.memory_space<vmem>>, vector<8x8xf32>
    tpu.vector_store %arg8[%c0_37, %c8_38], %45 {strides = array<i32>} : memref<8x32xf32, #tpu.memory_space<vmem>>, vector<8x8xf32>,
    %67 = vector.extract_strided_slice %4 {offsets = [0, 16], sizes = [8, 8], strides = [1, 1]} : vector<8x32xbf16> to vector<8x8xbf16>
    %68 = vector.extract_strided_slice %6 {offsets = [0, 16], sizes = [8, 8], strides = [1, 1]} : vector<8x32xbf16> to vector<8x8xbf16>
    %cst_39 = arith.constant dense<0.000000e+00> : vector<8x8xf32>
    %69 = tpu.matmul %67, %68, %cst_39 {dimension_numbers = #tpu.dot_dimension_numbers<[1], [1], [0], [0], [0, 0, 1, 0], [], []>} : vector<8x8xbf16>, vector<8x8xbf16>, vector<8x8xf32> -> vector<8x8xf32>
    %c0_40 = arith.constant 0 : index
    %c16 = arith.constant 16 : index
    %70 = vector.load %arg8[%c0_40, %c16] : memref<8x32xf32, #tpu.memory_space<vmem>>, vector<8x8xf32>
    %cst_41 = arith.constant dense<0xFF800000> : vector<8xf32>
    %71 = vector.multi_reduction <maximumf>, %69, %cst_41 [1] : vector<8x8xf32> to vector<8xf32>
    %72 = vector.shape_cast %71 : vector<8xf32> to vector<8x1xf32>
    %73 = vector.broadcast %72 : vector<8x1xf32> to vector<8x8xf32>
    %74 = arith.maximumf %70, %73 : vector<8x8xf32>
    %75 = arith.subf %70, %74 : vector<8x8xf32>
    %76 = math.exp %75 : vector<8x8xf32>
    %77 = vector.extract_strided_slice %74 {offsets = [0, 0], sizes = [8, 1], strides = [1, 1]} : vector<8x8xf32> to vector<8x1xf32>
    %78 = vector.broadcast %77 : vector<8x1xf32> to vector<8x8xf32>
    %79 = arith.subf %69, %78 : vector<8x8xf32>
    %80 = math.exp %79 : vector<8x8xf32>
    %c0_42 = arith.constant 0 : index
    %c16_43 = arith.constant 16 : index
    %81 = vector.load %arg9[%c0_42, %c16_43] : memref<8x32xf32, #tpu.memory_space<vmem>>, vector<8x8xf32>
    %82 = arith.mulf %76, %81 : vector<8x8xf32>
    %cst_44 = arith.constant dense<0.000000e+00> : vector<8xf32>
    %83 = vector.multi_reduction <add>, %80, %cst_44 [1] : vector<8x8xf32> to vector<8xf32>
    %84 = vector.shape_cast %83 : vector<8xf32> to vector<8x1xf32>
    %85 = vector.broadcast %84 : vector<8x1xf32> to vector<8x8xf32>
    %86 = arith.addf %82, %85 : vector<8x8xf32>
    %c0_45 = arith.constant 0 : index
    %c16_46 = arith.constant 16 : index
    %87 = vector.load %arg9[%c0_45, %c16_46] : memref<8x32xf32, #tpu.memory_space<vmem>>, vector<8x8xf32>
    tpu.vector_store %arg9[%c0_45, %c16_46], %86 {strides = array<i32>} : memref<8x32xf32, #tpu.memory_space<vmem>>, vector<8x8xf32>,
    %c0_47 = arith.constant 0 : index
    %c16_48 = arith.constant 16 : index
    %88 = vector.load %arg10[%c0_47, %c16_48] : memref<8x32xf32, #tpu.memory_space<vmem>>, vector<8x8xf32>
    %89 = arith.mulf %76, %88 : vector<8x8xf32>
    %90 = arith.truncf %80 : vector<8x8xf32> to vector<8x8xbf16>
    %91 = vector.extract_strided_slice %8 {offsets = [0, 16], sizes = [8, 8], strides = [1, 1]} : vector<8x32xbf16> to vector<8x8xbf16>
    %cst_49 = arith.constant dense<0.000000e+00> : vector<8x8xf32>
    %92 = tpu.matmul %90, %91, %cst_49 {dimension_numbers = #tpu.dot_dimension_numbers<[1], [0], [0], [1], [0, 0, 1, 1], [], []>} : vector<8x8xbf16>, vector<8x8xbf16>, vector<8x8xf32> -> vector<8x8xf32>
    %93 = arith.addf %89, %92 : vector<8x8xf32>
    %c0_50 = arith.constant 0 : index
    %c16_51 = arith.constant 16 : index
    %94 = vector.load %arg10[%c0_50, %c16_51] : memref<8x32xf32, #tpu.memory_space<vmem>>, vector<8x8xf32>
    tpu.vector_store %arg10[%c0_50, %c16_51], %93 {strides = array<i32>} : memref<8x32xf32, #tpu.memory_space<vmem>>, vector<8x8xf32>,
    %c0_52 = arith.constant 0 : index
    %c16_53 = arith.constant 16 : index
    %95 = vector.load %arg8[%c0_52, %c16_53] : memref<8x32xf32, #tpu.memory_space<vmem>>, vector<8x8xf32>
    tpu.vector_store %arg8[%c0_52, %c16_53], %74 {strides = array<i32>} : memref<8x32xf32, #tpu.memory_space<vmem>>, vector<8x8xf32>,
    %96 = vector.extract_strided_slice %4 {offsets = [0, 24], sizes = [8, 8], strides = [1, 1]} : vector<8x32xbf16> to vector<8x8xbf16>
    %97 = vector.extract_strided_slice %6 {offsets = [0, 24], sizes = [8, 8], strides = [1, 1]} : vector<8x32xbf16> to vector<8x8xbf16>
    %cst_54 = arith.constant dense<0.000000e+00> : vector<8x8xf32>
    %98 = tpu.matmul %96, %97, %cst_54 {dimension_numbers = #tpu.dot_dimension_numbers<[1], [1], [0], [0], [0, 0, 1, 0], [], []>} : vector<8x8xbf16>, vector<8x8xbf16>, vector<8x8xf32> -> vector<8x8xf32>
    %c0_55 = arith.constant 0 : index
    %c24 = arith.constant 24 : index
    %99 = vector.load %arg8[%c0_55, %c24] : memref<8x32xf32, #tpu.memory_space<vmem>>, vector<8x8xf32>
    %cst_56 = arith.constant dense<0xFF800000> : vector<8xf32>
    %100 = vector.multi_reduction <maximumf>, %98, %cst_56 [1] : vector<8x8xf32> to vector<8xf32>
    %101 = vector.shape_cast %100 : vector<8xf32> to vector<8x1xf32>
    %102 = vector.broadcast %101 : vector<8x1xf32> to vector<8x8xf32>
    %103 = arith.maximumf %99, %102 : vector<8x8xf32>
    %104 = arith.subf %99, %103 : vector<8x8xf32>
    %105 = math.exp %104 : vector<8x8xf32>
    %106 = vector.extract_strided_slice %103 {offsets = [0, 0], sizes = [8, 1], strides = [1, 1]} : vector<8x8xf32> to vector<8x1xf32>
    %107 = vector.broadcast %106 : vector<8x1xf32> to vector<8x8xf32>
    %108 = arith.subf %98, %107 : vector<8x8xf32>
    %109 = math.exp %108 : vector<8x8xf32>
    %c0_57 = arith.constant 0 : index
    %c24_58 = arith.constant 24 : index
    %110 = vector.load %arg9[%c0_57, %c24_58] : memref<8x32xf32, #tpu.memory_space<vmem>>, vector<8x8xf32>
    %111 = arith.mulf %105, %110 : vector<8x8xf32>
    %cst_59 = arith.constant dense<0.000000e+00> : vector<8xf32>
    %112 = vector.multi_reduction <add>, %109, %cst_59 [1] : vector<8x8xf32> to vector<8xf32>
    %113 = vector.shape_cast %112 : vector<8xf32> to vector<8x1xf32>
    %114 = vector.broadcast %113 : vector<8x1xf32> to vector<8x8xf32>
    %115 = arith.addf %111, %114 : vector<8x8xf32>
    %c0_60 = arith.constant 0 : index
    %c24_61 = arith.constant 24 : index
    %116 = vector.load %arg9[%c0_60, %c24_61] : memref<8x32xf32, #tpu.memory_space<vmem>>, vector<8x8xf32>
    tpu.vector_store %arg9[%c0_60, %c24_61], %115 {strides = array<i32>} : memref<8x32xf32, #tpu.memory_space<vmem>>, vector<8x8xf32>,
    %c0_62 = arith.constant 0 : index
    %c24_63 = arith.constant 24 : index
    %117 = vector.load %arg10[%c0_62, %c24_63] : memref<8x32xf32, #tpu.memory_space<vmem>>, vector<8x8xf32>
    %118 = arith.mulf %105, %117 : vector<8x8xf32>
    %119 = arith.truncf %109 : vector<8x8xf32> to vector<8x8xbf16>
    %120 = vector.extract_strided_slice %8 {offsets = [0, 24], sizes = [8, 8], strides = [1, 1]} : vector<8x32xbf16> to vector<8x8xbf16>
    %cst_64 = arith.constant dense<0.000000e+00> : vector<8x8xf32>
    %121 = tpu.matmul %119, %120, %cst_64 {dimension_numbers = #tpu.dot_dimension_numbers<[1], [0], [0], [1], [0, 0, 1, 1], [], []>} : vector<8x8xbf16>, vector<8x8xbf16>, vector<8x8xf32> -> vector<8x8xf32>
    %122 = arith.addf %118, %121 : vector<8x8xf32>
    %c0_65 = arith.constant 0 : index
    %c24_66 = arith.constant 24 : index
    %123 = vector.load %arg10[%c0_65, %c24_66] : memref<8x32xf32, #tpu.memory_space<vmem>>, vector<8x8xf32>
    tpu.vector_store %arg10[%c0_65, %c24_66], %122 {strides = array<i32>} : memref<8x32xf32, #tpu.memory_space<vmem>>, vector<8x8xf32>,
    %c0_67 = arith.constant 0 : index
    %c24_68 = arith.constant 24 : index
    %124 = vector.load %arg8[%c0_67, %c24_68] : memref<8x32xf32, #tpu.memory_space<vmem>>, vector<8x8xf32>
    tpu.vector_store %arg8[%c0_67, %c24_68], %103 {strides = array<i32>} : memref<8x32xf32, #tpu.memory_space<vmem>>, vector<8x8xf32>,
    %c0_i32_69 = arith.constant 0 : i32
    %125 = arith.cmpi eq, %arg3, %c0_i32_69 : i32
    %126 = arith.extui %125 : i1 to i32
    %c0_i32_70 = arith.constant 0 : i32
    %127 = arith.cmpi ne, %126, %c0_i32_70 : i32
    scf.if %127 {
      %c0_71 = arith.constant 0 : index
      %c0_72 = arith.constant 0 : index
      %128 = vector.load %arg10[%c0_71, %c0_72] : memref<8x32xf32, #tpu.memory_space<vmem>>, vector<8x32xf32>
      %c0_73 = arith.constant 0 : index
      %c0_74 = arith.constant 0 : index
      %129 = vector.load %arg9[%c0_73, %c0_74] : memref<8x32xf32, #tpu.memory_space<vmem>>, vector<8x32xf32>
      %130 = tpu.reciprocal %129 {approx = true} : vector<8x32xf32> -> vector<8x32xf32>
      %131 = arith.mulf %128, %130 : vector<8x32xf32>
      %132 = arith.truncf %131 : vector<8x32xf32> to vector<8x32xbf16>
      %c0_75 = arith.constant 0 : index
      %c0_76 = arith.constant 0 : index
      %c0_77 = arith.constant 0 : index
      %133 = vector.load %arg7[%c0_75, %c0_76, %c0_77] : memref<1x8x32xbf16, #tpu.memory_space<vmem>>, vector<1x8x32xbf16>
      %134 = vector.shape_cast %133 : vector<1x8x32xbf16> to vector<8x32xbf16>
      %135 = vector.shape_cast %132 : vector<8x32xbf16> to vector<1x8x32xbf16>
      tpu.vector_store %arg7[%c0_75, %c0_76, %c0_77], %135 {strides = array<i32>} : memref<1x8x32xbf16, #tpu.memory_space<vmem>>, vector<1x8x32xbf16>,
    } else {
    }
    return
  }
  func.func @transform_0(%arg0: i32, %arg1: i32, %arg2: i32, %arg3: i32) -> (i32, i32, i32) {
    %c0_i32 = arith.constant 0 : i32
    return %arg0, %arg2, %arg1 : i32, i32, i32
  }
  func.func @transform_1(%arg0: i32, %arg1: i32, %arg2: i32, %arg3: i32) -> (i32, i32, i32) {
    %c0_i32 = arith.constant 0 : i32
    return %arg0, %arg3, %arg1 : i32, i32, i32
  }
  func.func @transform_2(%arg0: i32, %arg1: i32, %arg2: i32, %arg3: i32) -> (i32, i32, i32) {
    %c0_i32 = arith.constant 0 : i32
    return %arg0, %arg3, %arg1 : i32, i32, i32
  }
  func.func @transform_3(%arg0: i32, %arg1: i32, %arg2: i32, %arg3: i32) -> (i32, i32, i32) {
    %c0_i32 = arith.constant 0 : i32
    return %arg0, %arg2, %arg1 : i32, i32, i32
  }
}

module attributes {stable_mosaic.version = 11 : i64} {
  func.func @_ffn_kernel(%arg0: i32, %arg1: i32, %arg2: i32, %arg3: memref<16x32xf32, #tpu.memory_space<vmem>>, %arg4: memref<16x32xf32, #tpu.memory_space<vmem>>, %arg5: memref<1x32xf32, #tpu.memory_space<vmem>>, %arg6: memref<1x32xf32, #tpu.memory_space<vmem>>, %arg7: memref<32x64xbf16, #tpu.memory_space<vmem>>, %arg8: memref<1x64xf32, #tpu.memory_space<vmem>>, %arg9: memref<64x32xbf16, #tpu.memory_space<vmem>>, %arg10: memref<1x32xf32, #tpu.memory_space<vmem>>, %arg11: memref<16x32xf32, #tpu.memory_space<vmem>>, %arg12: memref<16x32xf32, #tpu.memory_space<vmem>>, %arg13: memref<16x32xbf16, #tpu.memory_space<vmem>>) attributes {dimension_semantics = [#tpu.dimension_semantics<parallel>, #tpu.dimension_semantics<parallel>, #tpu.dimension_semantics<arbitrary>], iteration_bounds = array<i64: 1, 1, 1>, scalar_prefetch = 0 : i64, scratch_operands = 2 : i64, tpu.core_type = #tpu.core_type<tc>, window_params = [{transform_indices = @transform_0, window_bounds = array<i64: 16, 32>}, {transform_indices = @transform_1, window_bounds = array<i64: 16, 32>}, {pipeline_mode = #tpu.pipeline_mode<synchronous>, transform_indices = @transform_2, window_bounds = array<i64: 1, 32>}, {pipeline_mode = #tpu.pipeline_mode<synchronous>, transform_indices = @transform_3, window_bounds = array<i64: 1, 32>}, {transform_indices = @transform_4, window_bounds = array<i64: 32, 64>}, {transform_indices = @transform_5, window_bounds = array<i64: 1, 64>}, {transform_indices = @transform_6, window_bounds = array<i64: 64, 32>}, {transform_indices = @transform_7, window_bounds = array<i64: 1, 32>}, {transform_indices = @transform_8, window_bounds = array<i64: 16, 32>}]} {
    %c0_i32 = arith.constant 0 : i32
    %0 = arith.cmpi eq, %arg2, %c0_i32 : i32
    %1 = arith.extui %0 : i1 to i32
    %c0_i32_0 = arith.constant 0 : i32
    %2 = arith.cmpi ne, %1, %c0_i32_0 : i32
    scf.if %2 {
      %c0_19 = arith.constant 0 : index
      %c0_20 = arith.constant 0 : index
      %31 = vector.load %arg3[%c0_19, %c0_20] : memref<16x32xf32, #tpu.memory_space<vmem>>, vector<16x32xf32>
      %c0_21 = arith.constant 0 : index
      %c0_22 = arith.constant 0 : index
      %32 = vector.load %arg5[%c0_21, %c0_22] : memref<1x32xf32, #tpu.memory_space<vmem>>, vector<1x32xf32>
      %c0_23 = arith.constant 0 : index
      %c0_24 = arith.constant 0 : index
      %33 = vector.load %arg6[%c0_23, %c0_24] : memref<1x32xf32, #tpu.memory_space<vmem>>, vector<1x32xf32>
      %cst_25 = arith.constant dense<0.000000e+00> : vector<16xf32>
      %34 = vector.multi_reduction <add>, %31, %cst_25 [1] : vector<16x32xf32> to vector<16xf32>
      %35 = vector.shape_cast %34 : vector<16xf32> to vector<16x1xf32>
      %cst_26 = arith.constant 3.200000e+01 : f32
      %36 = vector.broadcast %cst_26 : f32 to vector<16x1xf32>
      %37 = arith.divf %35, %36 : vector<16x1xf32>
      %38 = vector.broadcast %37 : vector<16x1xf32> to vector<16x32xf32>
      %39 = arith.subf %31, %38 : vector<16x32xf32>
      %40 = arith.mulf %39, %39 : vector<16x32xf32>
      %cst_27 = arith.constant dense<0.000000e+00> : vector<16xf32>
      %41 = vector.multi_reduction <add>, %40, %cst_27 [1] : vector<16x32xf32> to vector<16xf32>
      %42 = vector.shape_cast %41 : vector<16xf32> to vector<16x1xf32>
      %cst_28 = arith.constant 3.200000e+01 : f32
      %43 = vector.broadcast %cst_28 : f32 to vector<16x1xf32>
      %44 = arith.divf %42, %43 : vector<16x1xf32>
      %cst_29 = arith.constant 9.99999974E-6 : f32
      %45 = vector.broadcast %cst_29 : f32 to vector<16x1xf32>
      %46 = arith.addf %44, %45 : vector<16x1xf32>
      %47 = math.rsqrt %46 : vector<16x1xf32>
      %48 = vector.broadcast %47 : vector<16x1xf32> to vector<16x32xf32>
      %49 = arith.mulf %39, %48 : vector<16x32xf32>
      %50 = vector.broadcast %32 : vector<1x32xf32> to vector<16x32xf32>
      %51 = arith.mulf %49, %50 : vector<16x32xf32>
      %52 = vector.broadcast %33 : vector<1x32xf32> to vector<16x32xf32>
      %53 = arith.addf %51, %52 : vector<16x32xf32>
      %54 = arith.truncf %53 : vector<16x32xf32> to vector<16x32xbf16>
      %c0_30 = arith.constant 0 : index
      %c0_31 = arith.constant 0 : index
      %55 = vector.load %arg13[%c0_30, %c0_31] : memref<16x32xbf16, #tpu.memory_space<vmem>>, vector<16x32xbf16>
      tpu.vector_store %arg13[%c0_30, %c0_31], %54 {strides = array<i32>} : memref<16x32xbf16, #tpu.memory_space<vmem>>, vector<16x32xbf16>,
      %cst_32 = arith.constant 0.000000e+00 : f32
      %56 = vector.broadcast %cst_32 : f32 to vector<16x32xf32>
      %c0_33 = arith.constant 0 : index
      %c0_34 = arith.constant 0 : index
      %57 = vector.load %arg12[%c0_33, %c0_34] : memref<16x32xf32, #tpu.memory_space<vmem>>, vector<16x32xf32>
      tpu.vector_store %arg12[%c0_33, %c0_34], %56 {strides = array<i32>} : memref<16x32xf32, #tpu.memory_space<vmem>>, vector<16x32xf32>,
    } else {
    }
    %c0 = arith.constant 0 : index
    %c0_1 = arith.constant 0 : index
    %3 = vector.load %arg13[%c0, %c0_1] : memref<16x32xbf16, #tpu.memory_space<vmem>>, vector<16x32xbf16>
    %c0_2 = arith.constant 0 : index
    %c0_3 = arith.constant 0 : index
    %4 = vector.load %arg7[%c0_2, %c0_3] : memref<32x64xbf16, #tpu.memory_space<vmem>>, vector<32x64xbf16>
    %cst = arith.constant dense<0.000000e+00> : vector<16x64xf32>
    %5 = tpu.matmul %3, %4, %cst {dimension_numbers = #tpu.dot_dimension_numbers<[1], [0], [0], [1], [0, 0, 1, 1], [], []>} : vector<16x32xbf16>, vector<32x64xbf16>, vector<16x64xf32> -> vector<16x64xf32>
    %c0_4 = arith.constant 0 : index
    %c0_5 = arith.constant 0 : index
    %6 = vector.load %arg8[%c0_4, %c0_5] : memref<1x64xf32, #tpu.memory_space<vmem>>, vector<1x64xf32>
    %7 = vector.broadcast %6 : vector<1x64xf32> to vector<16x64xf32>
    %8 = arith.addf %5, %7 : vector<16x64xf32>
    %9 = arith.mulf %8, %8 : vector<16x64xf32>
    %10 = arith.mulf %8, %9 : vector<16x64xf32>
    %cst_6 = arith.constant 4.471500e-02 : f32
    %11 = vector.broadcast %cst_6 : f32 to vector<16x64xf32>
    %12 = arith.mulf %11, %10 : vector<16x64xf32>
    %13 = arith.addf %8, %12 : vector<16x64xf32>
    %cst_7 = arith.constant 0.797884583 : f32
    %14 = vector.broadcast %cst_7 : f32 to vector<16x64xf32>
    %15 = arith.mulf %14, %13 : vector<16x64xf32>
    %16 = math.tanh %15 : vector<16x64xf32>
    %cst_8 = arith.constant 1.000000e+00 : f32
    %17 = vector.broadcast %cst_8 : f32 to vector<16x64xf32>
    %18 = arith.addf %17, %16 : vector<16x64xf32>
    %cst_9 = arith.constant 5.000000e-01 : f32
    %19 = vector.broadcast %cst_9 : f32 to vector<16x64xf32>
    %20 = arith.mulf %19, %18 : vector<16x64xf32>
    %21 = arith.mulf %8, %20 : vector<16x64xf32>
    %22 = arith.truncf %21 : vector<16x64xf32> to vector<16x64xbf16>
    %c0_10 = arith.constant 0 : index
    %c0_11 = arith.constant 0 : index
    %23 = vector.load %arg12[%c0_10, %c0_11] : memref<16x32xf32, #tpu.memory_space<vmem>>, vector<16x32xf32>
    %c0_12 = arith.constant 0 : index
    %c0_13 = arith.constant 0 : index
    %24 = vector.load %arg9[%c0_12, %c0_13] : memref<64x32xbf16, #tpu.memory_space<vmem>>, vector<64x32xbf16>
    %cst_14 = arith.constant dense<0.000000e+00> : vector<16x32xf32>
    %25 = tpu.matmul %22, %24, %cst_14 {dimension_numbers = #tpu.dot_dimension_numbers<[1], [0], [0], [1], [0, 0, 1, 1], [], []>} : vector<16x64xbf16>, vector<64x32xbf16>, vector<16x32xf32> -> vector<16x32xf32>
    %26 = arith.addf %23, %25 : vector<16x32xf32>
    %c0_15 = arith.constant 0 : index
    %c0_16 = arith.constant 0 : index
    %27 = vector.load %arg12[%c0_15, %c0_16] : memref<16x32xf32, #tpu.memory_space<vmem>>, vector<16x32xf32>
    tpu.vector_store %arg12[%c0_15, %c0_16], %26 {strides = array<i32>} : memref<16x32xf32, #tpu.memory_space<vmem>>, vector<16x32xf32>,
    %c0_i32_17 = arith.constant 0 : i32
    %28 = arith.cmpi eq, %arg2, %c0_i32_17 : i32
    %29 = arith.extui %28 : i1 to i32
    %c0_i32_18 = arith.constant 0 : i32
    %30 = arith.cmpi ne, %29, %c0_i32_18 : i32
    scf.if %30 {
      %c0_19 = arith.constant 0 : index
      %c0_20 = arith.constant 0 : index
      %31 = vector.load %arg12[%c0_19, %c0_20] : memref<16x32xf32, #tpu.memory_space<vmem>>, vector<16x32xf32>
      %c0_21 = arith.constant 0 : index
      %c0_22 = arith.constant 0 : index
      %32 = vector.load %arg10[%c0_21, %c0_22] : memref<1x32xf32, #tpu.memory_space<vmem>>, vector<1x32xf32>
      %33 = vector.broadcast %32 : vector<1x32xf32> to vector<16x32xf32>
      %34 = arith.addf %31, %33 : vector<16x32xf32>
      %c0_23 = arith.constant 0 : index
      %c0_24 = arith.constant 0 : index
      %35 = vector.load %arg4[%c0_23, %c0_24] : memref<16x32xf32, #tpu.memory_space<vmem>>, vector<16x32xf32>
      %36 = arith.addf %34, %35 : vector<16x32xf32>
      %c0_25 = arith.constant 0 : index
      %c0_26 = arith.constant 0 : index
      %37 = vector.load %arg11[%c0_25, %c0_26] : memref<16x32xf32, #tpu.memory_space<vmem>>, vector<16x32xf32>
      tpu.vector_store %arg11[%c0_25, %c0_26], %36 {strides = array<i32>} : memref<16x32xf32, #tpu.memory_space<vmem>>, vector<16x32xf32>,
    } else {
    }
    return
  }
  func.func @transform_0(%arg0: i32, %arg1: i32, %arg2: i32) -> (i32, i32) {
    %c0_i32 = arith.constant 0 : i32
    %c0_i32_0 = arith.constant 0 : i32
    return %arg0, %c0_i32 : i32, i32
  }
  func.func @transform_1(%arg0: i32, %arg1: i32, %arg2: i32) -> (i32, i32) {
    %c0_i32 = arith.constant 0 : i32
    return %arg0, %arg1 : i32, i32
  }
  func.func @transform_2(%arg0: i32, %arg1: i32, %arg2: i32) -> (i32, i32) {
    %c0_i32 = arith.constant 0 : i32
    %c0_i32_0 = arith.constant 0 : i32
    %c0_i32_1 = arith.constant 0 : i32
    return %c0_i32, %c0_i32_0 : i32, i32
  }
  func.func @transform_3(%arg0: i32, %arg1: i32, %arg2: i32) -> (i32, i32) {
    %c0_i32 = arith.constant 0 : i32
    %c0_i32_0 = arith.constant 0 : i32
    %c0_i32_1 = arith.constant 0 : i32
    return %c0_i32, %c0_i32_0 : i32, i32
  }
  func.func @transform_4(%arg0: i32, %arg1: i32, %arg2: i32) -> (i32, i32) {
    %c0_i32 = arith.constant 0 : i32
    %c0_i32_0 = arith.constant 0 : i32
    return %c0_i32, %arg2 : i32, i32
  }
  func.func @transform_5(%arg0: i32, %arg1: i32, %arg2: i32) -> (i32, i32) {
    %c0_i32 = arith.constant 0 : i32
    %c0_i32_0 = arith.constant 0 : i32
    return %c0_i32, %arg2 : i32, i32
  }
  func.func @transform_6(%arg0: i32, %arg1: i32, %arg2: i32) -> (i32, i32) {
    %c0_i32 = arith.constant 0 : i32
    return %arg2, %arg1 : i32, i32
  }
  func.func @transform_7(%arg0: i32, %arg1: i32, %arg2: i32) -> (i32, i32) {
    %c0_i32 = arith.constant 0 : i32
    %c0_i32_0 = arith.constant 0 : i32
    return %c0_i32, %arg1 : i32, i32
  }
  func.func @transform_8(%arg0: i32, %arg1: i32, %arg2: i32) -> (i32, i32) {
    %c0_i32 = arith.constant 0 : i32
    return %arg0, %arg1 : i32, i32
  }
}

</mosaic_0001>

<llo_original>
// kernel: whisper_decoder_layer.10
$region0: #{whisper_decoder_layer.10}
  #allocation0 [shape = 'u32[]', space=smem, size = 0x4, offset = 0x4, fixed_abs, tag = 'smem constant byte address 0x4 - core index']
  #allocation1 [shape = 'u32[144,128]{1,0:T(1,128)}', space=vmem, size = 0x12000, scoped, tag = 'internal scratch']
  %s0 = inlined_call_operand.vmem [shape: bf16[16,32], index: 0, kind: input, shape index: {}]
  %s1 = inlined_call_operand.vmem [shape: bf16[32,32], index: 1, kind: input, shape index: {}]
  %s2 = inlined_call_operand.vmem [shape: f32[1,32], index: 2, kind: input, shape index: {}]
  %s3 = inlined_call_operand.vmem [shape: f32[16,32], index: 3, kind: input, shape index: {}]
  %s4 = inlined_call_operand.vmem [shape: f32[16,32], index: 4, kind: output, shape index: {}]
  %s5 = sld [smem:[#allocation0]]
  $region26: #{whisper_decoder_layer.10} parent=0
    _
  %s7 = ssub.s32 1, %s5
  %s8 = scalar_select 0, %s7, %s5
  // Predicated region
  $region2: #{whisper_decoder_layer.10} parent=0 // pred_check
    _
  $region3: #{whisper_decoder_layer.10} parent=0 // pred_check_branch
    %10 = sbr.rel (0) target = $region5
  $region4: #{whisper_decoder_layer.10} parent=0 // pred_region
    _
  $region5: #{whisper_decoder_layer.10} parent=0 // pred_fallthru
    _
  // Predicated region
  $region6: #{whisper_decoder_layer.10} parent=0 // pred_check
    _
  $region7: #{whisper_decoder_layer.10} parent=0 // pred_check_branch
    %12 = sbr.rel (0) target = $region9
  $region8: #{whisper_decoder_layer.10} parent=0 // pred_region
    _
  $region9: #{whisper_decoder_layer.10} parent=0 // pred_fallthru
    _
  // Predicated region
  $region10: #{whisper_decoder_layer.10} parent=0 // pred_check
    _
  $region11: #{whisper_decoder_layer.10} parent=0 // pred_check_branch
    %14 = sbr.rel (0) target = $region13
  $region12: #{whisper_decoder_layer.10} parent=0 // pred_region
    _
  $region13: #{whisper_decoder_layer.10} parent=0 // pred_fallthru
    _
  // Predicated region
  $region14: #{whisper_decoder_layer.10} parent=0 // pred_check
    _
  $region15: #{whisper_decoder_layer.10} parent=0 // pred_check_branch
    %16 = sbr.rel (0) target = $region17
  $region16: #{whisper_decoder_layer.10} parent=0 // pred_region
    _
  $region17: #{whisper_decoder_layer.10} parent=0 // pred_fallthru
    _
  %v18 = vld [vmem:[%s0] sm:$0xf]
  %v19 = vld [vmem:[%s0 + $0x4] sm:$0xf]
  %v20 = vld [vmem:[%s1] sm:$0xf]
  %v21 = vld [vmem:[%s1 + $0x4] sm:$0xf]
  %v22 = vld [vmem:[%s1 + $0x8] sm:$0xf]
  %v23 = vld [vmem:[%s1 + $0xc] sm:$0xf]
  %v24 = vld [vmem:[%s2] sm:$0x1]
  %v26 = vlaneseq
  %v27 = vshrl.u32 %v26, 7
  %v28 = vsub.s32 0, %v27
  %v29 = vrot.slane %v24, %v28
  %v33 = vunpack.c.l.b16 %v18
  %v34 = vunpack.c.l.b16 %v19
  %v35 = vpack.c.b16 %v34, %v33
  %v40 = vunpack.c.l.b16 %v20
  %v41 = vunpack.c.l.b16 %v21
  %v42 = vunpack.c.l.b16 %v22
  %v43 = vunpack.c.l.b16 %v23
  %v44 = vpack.c.b16 %v41, %v40
  %v45 = vpack.c.b16 %v43, %v42
  %vm48 = vcmask 261120
  %v50 = vsel %vm48, %v35, 0
  %52 = vmatprep.subr.bf16.mxu0 0
  %53 = vmatpush1.bf16.msra.mxu0 %v44
  %54 = vmatprep.subr.bf16.mxu0 0
  %55 = vmatpush1.bf16.msra.mxu0 %v45
  %56 = vmatprep.subr.bf16.mxu0 0
  %57 = vmatpush1.bf16.msra.mxu0 0
  %58 = vmatprep.subr.bf16.mxu0 0
  %59 = vmatpush1.bf16.msra.mxu0 0
  %60 = vmatprep.subr.bf16.mxu0 0
  %61 = vmatpush1.bf16.msra.mxu0 0
  %62 = vmatprep.subr.bf16.mxu0 0
  %63 = vmatpush1.bf16.msra.mxu0 0
  %64 = vmatprep.subr.bf16.mxu0 0
  %65 = vmatpush1.bf16.msra.mxu0 0
  %66 = vmatprep.subr.bf16.mxu0 0
  %67 = vmatpush1.bf16.msra.mxu0 0
  %68 = vmatprep.subr.bf16.mxu0 0
  %69 = vmatpush1.bf16.msra.mxu0 0
  %70 = vmatprep.subr.bf16.mxu0 0
  %71 = vmatpush1.bf16.msra.mxu0 0
  %72 = vmatprep.subr.bf16.mxu0 0
  %73 = vmatpush1.bf16.msra.mxu0 0
  %74 = vmatprep.subr.bf16.mxu0 0
  %75 = vmatpush1.bf16.msra.mxu0 0
  %76 = vmatprep.subr.bf16.mxu0 0
  %77 = vmatpush1.bf16.msra.mxu0 0
  %78 = vmatprep.subr.bf16.mxu0 0
  %79 = vmatpush1.bf16.msra.mxu0 0
  %80 = vmatprep.subr.bf16.mxu0 0
  %81 = vmatpush1.bf16.msra.mxu0 0
  %82 = vmatprep.subr.bf16.mxu0 0
  %83 = vmatpush1.bf16.msra.mxu0 0
  %84 = vmatprep.mubr.bf16.mxu0 0
  %85 = vmatmul.mubr.bf16.gmra.mrb[0].mxu0 %v50
  %v86 = vpop.f32.mrb[0].mxu0
  %v87 = vadd.f32 %v29, %v86
  %v88 = vpop.f32.mrb[0].mxu0
  %v89 = vpop.f32.mrb[0].mxu0
  %v90 = vadd.f32 %v29, %v89
  %v91 = vpop.f32.mrb[0].mxu0
  %92 = vdwg.mxu0
  %v93 = vld [vmem:[%s3] sm:$0xff]
  %v94 = vld [vmem:[%s3 + $0x8] sm:$0xff]
  %v95 = vadd.f32 %v87, %v93
  %v96 = vadd.f32 %v90, %v94
  %97 = vst.msk [vmem:[%s4] sm:$0xff] %vm48, %v95
  %98 = vst.msk [vmem:[%s4 + $0x8] sm:$0xff] %vm48, %v96
  // Predicated region
  $region18: #{whisper_decoder_layer.10} parent=0 // pred_check
    _
  $region19: #{whisper_decoder_layer.10} parent=0 // pred_check_branch
    %100 = sbr.rel (0) target = $region21
  $region20: #{whisper_decoder_layer.10} parent=0 // pred_region
    _
  $region21: #{whisper_decoder_layer.10} parent=0 // pred_fallthru
    _
  // Predicated region
  $region22: #{whisper_decoder_layer.10} parent=0 // pred_check
    _
  $region23: #{whisper_decoder_layer.10} parent=0 // pred_check_branch
    %102 = sbr.rel (0) target = $region25
  $region24: #{whisper_decoder_layer.10} parent=0 // pred_region
    _
  $region25: #{whisper_decoder_layer.10} parent=0 // pred_fallthru
    _

// kernel: whisper_decoder_layer.12
$region0: #{whisper_decoder_layer.12}
  #allocation0 [shape = 'u32[]', space=smem, size = 0x4, offset = 0x4, fixed_abs, tag = 'smem constant byte address 0x4 - core index']
  #allocation1 [shape = 'u32[144,128]{1,0:T(1,128)}', space=vmem, size = 0x12000, scoped, tag = 'internal scratch']
  %s0 = inlined_call_operand.vmem [shape: f32[16,32], index: 0, kind: input, shape index: {}]
  %s1 = inlined_call_operand.hbm [shape: bf16[32,32], index: 1, kind: input, shape index: {}]
  %s2 = inlined_call_operand.vmem [shape: bf16[32,32], index: 2, kind: input, shape index: {}]
  %s3 = inlined_call_operand.hbm [shape: f32[1,32], index: 3, kind: input, shape index: {}]
  %s4 = inlined_call_operand.vmem [shape: bf16[16,32], index: 4, kind: output, shape index: {0}]
  %s5 = inlined_call_operand.vmem [shape: bf16[16,32], index: 5, kind: output, shape index: {1}]
  %6 = xla_tuple %s4, %s5
  %s7 = sld [smem:[#allocation0]]
  $region42: #{whisper_decoder_layer.12} parent=0
    _
  %s9 = ssub.s32 1, %s7
  %s10 = scalar_select 0, %s9, %s7
  $region1: #{whisper_decoder_layer.12} parent=0
    #allocation2 [shape = 'u8[8192]{0}', space=vmem, size = 0x2000, scoped, tag = 'input window, operand 1, single buffered']
    #allocation3 [shape = 's32[1]{0}', space=sflag, size = 0x4, scoped, tag = 'scoped memory for whisper_decoder_layer.12']
    #allocation4 [shape = 'u8[512]{0}', space=vmem, size = 0x400, scoped, tag = 'input window, operand 3, single buffered']
    #allocation5 [shape = 's32[1]{0}', space=sflag, size = 0x4, scoped, tag = 'scoped memory for whisper_decoder_layer.12']
    %11 = vsyncpa [#allocation3], 0
    %12 = vsyncpa [#allocation5], 0
    // Predicated region
    $region2: #{whisper_decoder_layer.12} parent=1 // pred_check
      _
    $region3: #{whisper_decoder_layer.12} parent=1 // pred_check_branch
      %14 = sbr.rel (0) target = $region5
    $region4: #{whisper_decoder_layer.12} parent=1 // pred_region
      _
    $region5: #{whisper_decoder_layer.12} parent=1 // pred_fallthru
      _
    // Predicated region
    $region6: #{whisper_decoder_layer.12} parent=1 // pred_check
      _
    $region7: #{whisper_decoder_layer.12} parent=1 // pred_check_branch
      %16 = sbr.rel (0) target = $region9
    $region8: #{whisper_decoder_layer.12} parent=1 // pred_region
      %s18 = ssub.s32 256, 256
      %19 = vsyncadd [#allocation3], %s18
      %s20 = sshll.u32 [#allocation2], 4
      %s21 = int_to_ptr.vmem [resolvable:$true] %s20
      %26 = dma.hbm_to_vmem [thread:$0]  %s1, 256, %s21, [#allocation3], 64, 64, 4
    $region9: #{whisper_decoder_layer.12} parent=1 // pred_fallthru
      _
    // Predicated region
    $region10: #{whisper_decoder_layer.12} parent=1 // pred_check
      _
    $region11: #{whisper_decoder_layer.12} parent=1 // pred_check_branch
      %28 = sbr.rel (0) target = $region13
    $region12: #{whisper_decoder_layer.12} parent=1 // pred_region
      _
    $region13: #{whisper_decoder_layer.12} parent=1 // pred_fallthru
      _
    // Predicated region
    $region14: #{whisper_decoder_layer.12} parent=1 // pred_check
      _
    $region15: #{whisper_decoder_layer.12} parent=1 // pred_check_branch
      %30 = sbr.rel (0) target = $region17
    $region16: #{whisper_decoder_layer.12} parent=1 // pred_region
      %s32 = ssub.s32 16, 16
      %33 = vsyncadd [#allocation5], %s32
      %s35 = sshll.u32 [#allocation4], 4
      %s36 = int_to_ptr.vmem [resolvable:$true] %s35
      %38 = dma.hbm_to_vmem [thread:$0]  %s3, 16, %s36, [#allocation5]
    $region17: #{whisper_decoder_layer.12} parent=1 // pred_fallthru
      _
    // Predicated region
    $region18: #{whisper_decoder_layer.12} parent=1 // pred_check
      _
    $region19: #{whisper_decoder_layer.12} parent=1 // pred_check_branch
      %40 = sbr.rel (0) target = $region21
    $region20: #{whisper_decoder_layer.12} parent=1 // pred_region
      %41 = dma.done [#allocation3], 256
    $region21: #{whisper_decoder_layer.12} parent=1 // pred_fallthru
      _
    // Predicated region
    $region22: #{whisper_decoder_layer.12} parent=1 // pred_check
      _
    $region23: #{whisper_decoder_layer.12} parent=1 // pred_check_branch
      %43 = sbr.rel (0) target = $region25
    $region24: #{whisper_decoder_layer.12} parent=1 // pred_region
      %44 = dma.done [#allocation5], 16
    $region25: #{whisper_decoder_layer.12} parent=1 // pred_fallthru
      _
    %v46 = vld [vmem:[%s0] sm:$0xff]
    %v47 = vld [vmem:[%s0 + $0x8] sm:$0xff]
    %v48 = vpack.c.bf16 %v47, %v46
    %v49 = vld [vmem:[#allocation2] sm:$0xf]
    %v50 = vld [vmem:[#allocation2 + $0x4] sm:$0xf]
    %v51 = vld [vmem:[#allocation2 + $0x8] sm:$0xf]
    %v52 = vld [vmem:[#allocation2 + $0xc] sm:$0xf]
    %v57 = vunpack.c.l.b16 %v49
    %v58 = vunpack.c.l.b16 %v50
    %v59 = vunpack.c.l.b16 %v51
    %v60 = vunpack.c.l.b16 %v52
    %v61 = vpack.c.b16 %v58, %v57
    %v62 = vpack.c.b16 %v60, %v59
    %vm65 = vcmask 261120
    %v67 = vsel %vm65, %v48, 0
    %69 = vmatprep.subr.bf16.mxu0 0
    %70 = vmatpush1.bf16.msra.mxu0 %v61
    %71 = vmatprep.subr.bf16.mxu0 0
    %72 = vmatpush1.bf16.msra.mxu0 %v62
    %73 = vmatprep.subr.bf16.mxu0 0
    %74 = vmatpush1.bf16.msra.mxu0 0
    %75 = vmatprep.subr.bf16.mxu0 0
    %76 = vmatpush1.bf16.msra.mxu0 0
    %77 = vmatprep.subr.bf16.mxu0 0
    %78 = vmatpush1.bf16.msra.mxu0 0
    %79 = vmatprep.subr.bf16.mxu0 0
    %80 = vmatpush1.bf16.msra.mxu0 0
    %81 = vmatprep.subr.bf16.mxu0 0
    %82 = vmatpush1.bf16.msra.mxu0 0
    %83 = vmatprep.subr.bf16.mxu0 0
    %84 = vmatpush1.bf16.msra.mxu0 0
    %85 = vmatprep.subr.bf16.mxu0 0
    %86 = vmatpush1.bf16.msra.mxu0 0
    %87 = vmatprep.subr.bf16.mxu0 0
    %88 = vmatpush1.bf16.msra.mxu0 0
    %89 = vmatprep.subr.bf16.mxu0 0
    %90 = vmatpush1.bf16.msra.mxu0 0
    %91 = vmatprep.subr.bf16.mxu0 0
    %92 = vmatpush1.bf16.msra.mxu0 0
    %93 = vmatprep.subr.bf16.mxu0 0
    %94 = vmatpush1.bf16.msra.mxu0 0
    %95 = vmatprep.subr.bf16.mxu0 0
    %96 = vmatpush1.bf16.msra.mxu0 0
    %97 = vmatprep.subr.bf16.mxu0 0
    %98 = vmatpush1.bf16.msra.mxu0 0
    %99 = vmatprep.subr.bf16.mxu0 0
    %100 = vmatpush1.bf16.msra.mxu0 0
    %101 = vmatprep.mubr.bf16.mxu0 0
    %102 = vmatmul.mubr.bf16.gmra.mrb[0].mxu0 %v67
    %v103 = vpop.f32.mrb[0].mxu0
    %v104 = vadd.f32 0.0, %v103
    %v105 = vpop.f32.mrb[0].mxu0
    %v106 = vpop.f32.mrb[0].mxu0
    %v107 = vadd.f32 0.0, %v106
    %v108 = vpop.f32.mrb[0].mxu0
    %109 = vdwg.mxu0
    %v110 = vld [vmem:[%s2] sm:$0xf]
    %v111 = vld [vmem:[%s2 + $0x4] sm:$0xf]
    %v112 = vld [vmem:[%s2 + $0x8] sm:$0xf]
    %v113 = vld [vmem:[%s2 + $0xc] sm:$0xf]
    %v114 = vld [vmem:[#allocation4] sm:$0x1]
    %v116 = vlaneseq
    %v117 = vshrl.u32 %v116, 7
    %v118 = vsub.s32 0, %v117
    %v119 = vrot.slane %v114, %v118
    %v125 = vunpack.c.l.b16 %v110
    %v126 = vunpack.c.l.b16 %v111
    %v127 = vunpack.c.l.b16 %v112
    %v128 = vunpack.c.l.b16 %v113
    %v129 = vpack.c.b16 %v126, %v125
    %v130 = vpack.c.b16 %v128, %v127
    %133 = vmatprep.subr.bf16.mxu0 0
    %134 = vmatpush1.bf16.msra.mxu0 %v129
    %135 = vmatprep.subr.bf16.mxu0 0
    %136 = vmatpush1.bf16.msra.mxu0 %v130
    %137 = vmatprep.subr.bf16.mxu0 0
    %138 = vmatpush1.bf16.msra.mxu0 0
    %139 = vmatprep.subr.bf16.mxu0 0
    %140 = vmatpush1.bf16.msra.mxu0 0
    %141 = vmatprep.subr.bf16.mxu0 0
    %142 = vmatpush1.bf16.msra.mxu0 0
    %143 = vmatprep.subr.bf16.mxu0 0
    %144 = vmatpush1.bf16.msra.mxu0 0
    %145 = vmatprep.subr.bf16.mxu0 0
    %146 = vmatpush1.bf16.msra.mxu0 0
    %147 = vmatprep.subr.bf16.mxu0 0
    %148 = vmatpush1.bf16.msra.mxu0 0
    %149 = vmatprep.subr.bf16.mxu0 0
    %150 = vmatpush1.bf16.msra.mxu0 0
    %151 = vmatprep.subr.bf16.mxu0 0
    %152 = vmatpush1.bf16.msra.mxu0 0
    %153 = vmatprep.subr.bf16.mxu0 0
    %154 = vmatpush1.bf16.msra.mxu0 0
    %155 = vmatprep.subr.bf16.mxu0 0
    %156 = vmatpush1.bf16.msra.mxu0 0
    %157 = vmatprep.subr.bf16.mxu0 0
    %158 = vmatpush1.bf16.msra.mxu0 0
    %159 = vmatprep.subr.bf16.mxu0 0
    %160 = vmatpush1.bf16.msra.mxu0 0
    %161 = vmatprep.subr.bf16.mxu0 0
    %162 = vmatpush1.bf16.msra.mxu0 0
    %163 = vmatprep.subr.bf16.mxu0 0
    %164 = vmatpush1.bf16.msra.mxu0 0
    %165 = vmatprep.mubr.bf16.mxu0 0
    %166 = vmatmul.mubr.bf16.gmra.mrb[0].mxu0 %v67
    %v167 = vpop.f32.mrb[0].mxu0
    %v168 = vadd.f32 %v119, %v167
    %v169 = vpop.f32.mrb[0].mxu0
    %v170 = vpop.f32.mrb[0].mxu0
    %v171 = vadd.f32 %v119, %v170
    %v172 = vpop.f32.mrb[0].mxu0
    %173 = vdwg.mxu0
    %v174 = vpack.c.bf16 %v107, %v104
    %v176 = vunpack.c.l.b16 %v174
    %v177 = vunpack.c.h.b16 %v174
    %v178 = vpack.c.b16 %v176, %v176
    %v179 = vpack.c.b16 %v177, %v177
    %vm182 = vcmask 257024
    %183 = vst.msk [vmem:[%s4] sm:$0xf] %vm182, %v178
    %184 = vst.msk [vmem:[%s4 + $0x4] sm:$0xf] %vm182, %v179
    %v185 = vpack.c.bf16 %v171, %v168
    %v187 = vunpack.c.l.b16 %v185
    %v188 = vunpack.c.h.b16 %v185
    %v189 = vpack.c.b16 %v187, %v187
    %v190 = vpack.c.b16 %v188, %v188
    %193 = vst.msk [vmem:[%s5] sm:$0xf] %vm182, %v189
    %194 = vst.msk [vmem:[%s5 + $0x4] sm:$0xf] %vm182, %v190
    // Predicated region
    $region26: #{whisper_decoder_layer.12} parent=1 // pred_check
      _
    $region27: #{whisper_decoder_layer.12} parent=1 // pred_check_branch
      %196 = sbr.rel (0) target = $region29
    $region28: #{whisper_decoder_layer.12} parent=1 // pred_region
      _
    $region29: #{whisper_decoder_layer.12} parent=1 // pred_fallthru
      _
    // Predicated region
    $region30: #{whisper_decoder_layer.12} parent=1 // pred_check
      _
    $region31: #{whisper_decoder_layer.12} parent=1 // pred_check_branch
      %198 = sbr.rel (0) target = $region33
    $region32: #{whisper_decoder_layer.12} parent=1 // pred_region
      _
    $region33: #{whisper_decoder_layer.12} parent=1 // pred_fallthru
      _
    // Predicated region
    $region34: #{whisper_decoder_layer.12} parent=1 // pred_check
      _
    $region35: #{whisper_decoder_layer.12} parent=1 // pred_check_branch
      %200 = sbr.rel (0) target = $region37
    $region36: #{whisper_decoder_layer.12} parent=1 // pred_region
      _
    $region37: #{whisper_decoder_layer.12} parent=1 // pred_fallthru
      _
    // Predicated region
    $region38: #{whisper_decoder_layer.12} parent=1 // pred_check
      _
    $region39: #{whisper_decoder_layer.12} parent=1 // pred_check_branch
      %202 = sbr.rel (0) target = $region41
    $region40: #{whisper_decoder_layer.12} parent=1 // pred_region
      _
    $region41: #{whisper_decoder_layer.12} parent=1 // pred_fallthru
      _
    %203 = vsyncpa [#allocation3], 1
    %204 = vsyncpa [#allocation5], 1

// kernel: whisper_decoder_layer.8
$region0: #{whisper_decoder_layer.8}
  #allocation0 [shape = 'u32[]', space=smem, size = 0x4, offset = 0x4, fixed_abs, tag = 'smem constant byte address 0x4 - core index']
  #allocation1 [shape = 'u32[144,128]{1,0:T(1,128)}', space=vmem, size = 0x12000, scoped, tag = 'internal scratch']
  #allocation2 [shape = 'bf16[16,32]{1,0:T(16,128)(2,1)}', space=vmem, size = 0x1000, scoped, tag = 'scratch operand']
  %s0 = inlined_call_operand.vmem [shape: f32[16,32], index: 0, kind: input, shape index: {}]
  %s1 = inlined_call_operand.vmem [shape: f32[1,32], index: 1, kind: input, shape index: {}]
  %s2 = inlined_call_operand.vmem [shape: f32[1,32], index: 2, kind: input, shape index: {}]
  %s3 = inlined_call_operand.vmem [shape: bf16[32,32], index: 3, kind: input, shape index: {}]
  %s4 = inlined_call_operand.vmem [shape: f32[1,32], index: 4, kind: input, shape index: {}]
  %s5 = inlined_call_operand.vmem [shape: bf16[32,32], index: 5, kind: input, shape index: {}]
  %s6 = inlined_call_operand.vmem [shape: bf16[32,32], index: 6, kind: input, shape index: {}]
  %s7 = inlined_call_operand.vmem [shape: f32[1,32], index: 7, kind: input, shape index: {}]
  %s8 = inlined_call_operand.vmem [shape: bf16[16,32], index: 8, kind: output, shape index: {0}]
  %s9 = inlined_call_operand.vmem [shape: bf16[16,32], index: 9, kind: output, shape index: {1}]
  %s10 = inlined_call_operand.vmem [shape: bf16[16,32], index: 10, kind: output, shape index: {2}]
  %11 = xla_tuple %s8, %s9, %s10
  %s12 = sld [smem:[#allocation0]]
  $region62: #{whisper_decoder_layer.8} parent=0
    _
  %s14 = ssub.s32 1, %s12
  %s15 = scalar_select 0, %s14, %s12
  // Predicated region
  $region2: #{whisper_decoder_layer.8} parent=0 // pred_check
    _
  $region3: #{whisper_decoder_layer.8} parent=0 // pred_check_branch
    %17 = sbr.rel (0) target = $region5
  $region4: #{whisper_decoder_layer.8} parent=0 // pred_region
    _
  $region5: #{whisper_decoder_layer.8} parent=0 // pred_fallthru
    _
  // Predicated region
  $region6: #{whisper_decoder_layer.8} parent=0 // pred_check
    _
  $region7: #{whisper_decoder_layer.8} parent=0 // pred_check_branch
    %19 = sbr.rel (0) target = $region9
  $region8: #{whisper_decoder_layer.8} parent=0 // pred_region
    _
  $region9: #{whisper_decoder_layer.8} parent=0 // pred_fallthru
    _
  // Predicated region
  $region10: #{whisper_decoder_layer.8} parent=0 // pred_check
    _
  $region11: #{whisper_decoder_layer.8} parent=0 // pred_check_branch
    %21 = sbr.rel (0) target = $region13
  $region12: #{whisper_decoder_layer.8} parent=0 // pred_region
    _
  $region13: #{whisper_decoder_layer.8} parent=0 // pred_fallthru
    _
  // Predicated region
  $region14: #{whisper_decoder_layer.8} parent=0 // pred_check
    _
  $region15: #{whisper_decoder_layer.8} parent=0 // pred_check_branch
    %23 = sbr.rel (0) target = $region17
  $region16: #{whisper_decoder_layer.8} parent=0 // pred_region
    _
  $region17: #{whisper_decoder_layer.8} parent=0 // pred_fallthru
    _
  // Predicated region
  $region18: #{whisper_decoder_layer.8} parent=0 // pred_check
    _
  $region19: #{whisper_decoder_layer.8} parent=0 // pred_check_branch
    %25 = sbr.rel (0) target = $region21
  $region20: #{whisper_decoder_layer.8} parent=0 // pred_region
    _
  $region21: #{whisper_decoder_layer.8} parent=0 // pred_fallthru
    _
  // Predicated region
  $region22: #{whisper_decoder_layer.8} parent=0 // pred_check
    _
  $region23: #{whisper_decoder_layer.8} parent=0 // pred_check_branch
    %27 = sbr.rel (0) target = $region25
  $region24: #{whisper_decoder_layer.8} parent=0 // pred_region
    _
  $region25: #{whisper_decoder_layer.8} parent=0 // pred_fallthru
    _
  // Predicated region
  $region26: #{whisper_decoder_layer.8} parent=0 // pred_check
    _
  $region27: #{whisper_decoder_layer.8} parent=0 // pred_check_branch
    %29 = sbr.rel (0) target = $region29
  $region28: #{whisper_decoder_layer.8} parent=0 // pred_region
    _
  $region29: #{whisper_decoder_layer.8} parent=0 // pred_fallthru
    _
  // Predicated region
  $region30: #{whisper_decoder_layer.8} parent=0 // pred_check
    _
  $region31: #{whisper_decoder_layer.8} parent=0 // pred_check_branch
    %31 = sbr.rel (0) target = $region33
  $region32: #{whisper_decoder_layer.8} parent=0 // pred_region
    _
  $region33: #{whisper_decoder_layer.8} parent=0 // pred_fallthru
    _
  %p33 = scmp.eq.s32.totalorder 0, 0
  // Predicated region
  $region34: #{whisper_decoder_layer.8} parent=0 // pred_check
    %p34 = pneg %p33
  $region35: #{whisper_decoder_layer.8} parent=0 // pred_check_branch
    %36 = sbr.rel (%p34) target = $region37
  $region36: #{whisper_decoder_layer.8} parent=0 // pred_region
    %v37 = vld [vmem:[%s0] sm:$0xff]
    %v38 = vld [vmem:[%s0 + $0x8] sm:$0xff]
    %v39 = vld [vmem:[%s1] sm:$0x1]
    %v40 = vld [vmem:[%s2] sm:$0x1]
    %vm41 = vcmask 261120
    %v42 = vsel %vm41, %v37, 0.0
    %43 = vadd.xlane.f32.xlu0 %v42
    %v44 = vpop.xlane.xlu0 %43
    %v45 = vsel %vm41, %v38, 0.0
    %46 = vadd.xlane.f32.xlu0 %v45
    %v47 = vpop.xlane.xlu0 %46
    %v48 = vrcp.pop 32.0
    %v49 = vmul.f32 %v44, %v48
    %v50 = vmul.f32 %v47, %v48
    %v51 = vsub.f32 %v37, %v49
    %v52 = vsub.f32 %v38, %v50
    %v53 = vmul.f32 %v51, %v51
    %v54 = vmul.f32 %v52, %v52
    %v55 = vsel %vm41, %v53, 0.0
    %56 = vadd.xlane.f32.xlu0 %v55
    %v57 = vpop.xlane.xlu0 %56
    %v58 = vsel %vm41, %v54, 0.0
    %59 = vadd.xlane.f32.xlu0 %v58
    %v60 = vpop.xlane.xlu0 %59
    %v61 = vmul.f32 %v57, %v48
    %v62 = vmul.f32 %v60, %v48
    %v63 = vadd.f32 %v61, 1e-05
    %v64 = vadd.f32 %v62, 1e-05
    %v65 = vrsqrt.pop %v63
    %v66 = vrsqrt.pop %v64
    %v67 = vmul.f32 %v51, %v65
    %v68 = vmul.f32 %v52, %v66
    %v70 = vlaneseq
    %v71 = vshrl.u32 %v70, 7
    %v72 = vsub.s32 0, %v71
    %v73 = vrot.slane %v39, %v72
    %v75 = vmul.f32 %v67, %v73
    %v76 = vmul.f32 %v68, %v73
    %v78 = vlaneseq
    %v79 = vshrl.u32 %v78, 7
    %v80 = vsub.s32 0, %v79
    %v81 = vrot.slane %v40, %v80
    %v83 = vadd.f32 %v75, %v81
    %v84 = vadd.f32 %v76, %v81
    %v85 = vpack.c.bf16 %v84, %v83
    %86 = vst.msk [vmem:[#allocation2] sm:$0xff] %vm41, %v85
  $region37: #{whisper_decoder_layer.8} parent=0 // pred_fallthru
    _
  %v87 = vld [vmem:[#allocation2] sm:$0xff]
  %v88 = vld [vmem:[%s3] sm:$0xf]
  %v89 = vld [vmem:[%s3 + $0x4] sm:$0xf]
  %v90 = vld [vmem:[%s3 + $0x8] sm:$0xf]
  %v91 = vld [vmem:[%s3 + $0xc] sm:$0xf]
  %v92 = vld [vmem:[%s4] sm:$0x1]
  %v94 = vlaneseq
  %v95 = vshrl.u32 %v94, 7
  %v96 = vsub.s32 0, %v95
  %v97 = vrot.slane %v92, %v96
  %v103 = vunpack.c.l.b16 %v88
  %v104 = vunpack.c.l.b16 %v89
  %v105 = vunpack.c.l.b16 %v90
  %v106 = vunpack.c.l.b16 %v91
  %v107 = vpack.c.b16 %v104, %v103
  %v108 = vpack.c.b16 %v106, %v105
  %vm111 = vcmask 261120
  %v113 = vsel %vm111, %v87, 0
  %115 = vmatprep.subr.bf16.mxu0 0
  %116 = vmatpush1.bf16.msra.mxu0 %v107
  %117 = vmatprep.subr.bf16.mxu0 0
  %118 = vmatpush1.bf16.msra.mxu0 %v108
  %119 = vmatprep.subr.bf16.mxu0 0
  %120 = vmatpush1.bf16.msra.mxu0 0
  %121 = vmatprep.subr.bf16.mxu0 0
  %122 = vmatpush1.bf16.msra.mxu0 0
  %123 = vmatprep.subr.bf16.mxu0 0
  %124 = vmatpush1.bf16.msra.mxu0 0
  %125 = vmatprep.subr.bf16.mxu0 0
  %126 = vmatpush1.bf16.msra.mxu0 0
  %127 = vmatprep.subr.bf16.mxu0 0
  %128 = vmatpush1.bf16.msra.mxu0 0
  %129 = vmatprep.subr.bf16.mxu0 0
  %130 = vmatpush1.bf16.msra.mxu0 0
  %131 = vmatprep.subr.bf16.mxu0 0
  %132 = vmatpush1.bf16.msra.mxu0 0
  %133 = vmatprep.subr.bf16.mxu0 0
  %134 = vmatpush1.bf16.msra.mxu0 0
  %135 = vmatprep.subr.bf16.mxu0 0
  %136 = vmatpush1.bf16.msra.mxu0 0
  %137 = vmatprep.subr.bf16.mxu0 0
  %138 = vmatpush1.bf16.msra.mxu0 0
  %139 = vmatprep.subr.bf16.mxu0 0
  %140 = vmatpush1.bf16.msra.mxu0 0
  %141 = vmatprep.subr.bf16.mxu0 0
  %142 = vmatpush1.bf16.msra.mxu0 0
  %143 = vmatprep.subr.bf16.mxu0 0
  %144 = vmatpush1.bf16.msra.mxu0 0
  %145 = vmatprep.subr.bf16.mxu0 0
  %146 = vmatpush1.bf16.msra.mxu0 0
  %147 = vmatprep.mubr.bf16.mxu0 0
  %148 = vmatmul.mubr.bf16.gmra.mrb[0].mxu0 %v113
  %v149 = vpop.f32.mrb[0].mxu0
  %v150 = vadd.f32 %v97, %v149
  %v151 = vpop.f32.mrb[0].mxu0
  %v152 = vpop.f32.mrb[0].mxu0
  %v153 = vadd.f32 %v97, %v152
  %v154 = vpop.f32.mrb[0].mxu0
  %155 = vdwg.mxu0
  %v156 = vld [vmem:[%s5] sm:$0xf]
  %v157 = vld [vmem:[%s5 + $0x4] sm:$0xf]
  %v158 = vld [vmem:[%s5 + $0x8] sm:$0xf]
  %v159 = vld [vmem:[%s5 + $0xc] sm:$0xf]
  %v164 = vunpack.c.l.b16 %v156
  %v165 = vunpack.c.l.b16 %v157
  %v166 = vunpack.c.l.b16 %v158
  %v167 = vunpack.c.l.b16 %v159
  %v168 = vpack.c.b16 %v165, %v164
  %v169 = vpack.c.b16 %v167, %v166
  %172 = vmatprep.subr.bf16.mxu0 0
  %173 = vmatpush1.bf16.msra.mxu0 %v168
  %174 = vmatprep.subr.bf16.mxu0 0
  %175 = vmatpush1.bf16.msra.mxu0 %v169
  %176 = vmatprep.subr.bf16.mxu0 0
  %177 = vmatpush1.bf16.msra.mxu0 0
  %178 = vmatprep.subr.bf16.mxu0 0
  %179 = vmatpush1.bf16.msra.mxu0 0
  %180 = vmatprep.subr.bf16.mxu0 0
  %181 = vmatpush1.bf16.msra.mxu0 0
  %182 = vmatprep.subr.bf16.mxu0 0
  %183 = vmatpush1.bf16.msra.mxu0 0
  %184 = vmatprep.subr.bf16.mxu0 0
  %185 = vmatpush1.bf16.msra.mxu0 0
  %186 = vmatprep.subr.bf16.mxu0 0
  %187 = vmatpush1.bf16.msra.mxu0 0
  %188 = vmatprep.subr.bf16.mxu0 0
  %189 = vmatpush1.bf16.msra.mxu0 0
  %190 = vmatprep.subr.bf16.mxu0 0
  %191 = vmatpush1.bf16.msra.mxu0 0
  %192 = vmatprep.subr.bf16.mxu0 0
  %193 = vmatpush1.bf16.msra.mxu0 0
  %194 = vmatprep.subr.bf16.mxu0 0
  %195 = vmatpush1.bf16.msra.mxu0 0
  %196 = vmatprep.subr.bf16.mxu0 0
  %197 = vmatpush1.bf16.msra.mxu0 0
  %198 = vmatprep.subr.bf16.mxu0 0
  %199 = vmatpush1.bf16.msra.mxu0 0
  %200 = vmatprep.subr.bf16.mxu0 0
  %201 = vmatpush1.bf16.msra.mxu0 0
  %202 = vmatprep.subr.bf16.mxu0 0
  %203 = vmatpush1.bf16.msra.mxu0 0
  %204 = vmatprep.mubr.bf16.mxu0 0
  %205 = vmatmul.mubr.bf16.gmra.mrb[0].mxu0 %v113
  %v206 = vpop.f32.mrb[0].mxu0
  %v207 = vadd.f32 0.0, %v206
  %v208 = vpop.f32.mrb[0].mxu0
  %v209 = vpop.f32.mrb[0].mxu0
  %v210 = vadd.f32 0.0, %v209
  %v211 = vpop.f32.mrb[0].mxu0
  %212 = vdwg.mxu0
  %v213 = vld [vmem:[%s6] sm:$0xf]
  %v214 = vld [vmem:[%s6 + $0x4] sm:$0xf]
  %v215 = vld [vmem:[%s6 + $0x8] sm:$0xf]
  %v216 = vld [vmem:[%s6 + $0xc] sm:$0xf]
  %v217 = vld [vmem:[%s7] sm:$0x1]
  %v219 = vlaneseq
  %v220 = vshrl.u32 %v219, 7
  %v221 = vsub.s32 0, %v220
  %v222 = vrot.slane %v217, %v221
  %v228 = vunpack.c.l.b16 %v213
  %v229 = vunpack.c.l.b16 %v214
  %v230 = vunpack.c.l.b16 %v215
  %v231 = vunpack.c.l.b16 %v216
  %v232 = vpack.c.b16 %v229, %v228
  %v233 = vpack.c.b16 %v231, %v230
  %236 = vmatprep.subr.bf16.mxu0 0
  %237 = vmatpush1.bf16.msra.mxu0 %v232
  %238 = vmatprep.subr.bf16.mxu0 0
  %239 = vmatpush1.bf16.msra.mxu0 %v233
  %240 = vmatprep.subr.bf16.mxu0 0
  %241 = vmatpush1.bf16.msra.mxu0 0
  %242 = vmatprep.subr.bf16.mxu0 0
  %243 = vmatpush1.bf16.msra.mxu0 0
  %244 = vmatprep.subr.bf16.mxu0 0
  %245 = vmatpush1.bf16.msra.mxu0 0
  %246 = vmatprep.subr.bf16.mxu0 0
  %247 = vmatpush1.bf16.msra.mxu0 0
  %248 = vmatprep.subr.bf16.mxu0 0
  %249 = vmatpush1.bf16.msra.mxu0 0
  %250 = vmatprep.subr.bf16.mxu0 0
  %251 = vmatpush1.bf16.msra.mxu0 0
  %252 = vmatprep.subr.bf16.mxu0 0
  %253 = vmatpush1.bf16.msra.mxu0 0
  %254 = vmatprep.subr.bf16.mxu0 0
  %255 = vmatpush1.bf16.msra.mxu0 0
  %256 = vmatprep.subr.bf16.mxu0 0
  %257 = vmatpush1.bf16.msra.mxu0 0
  %258 = vmatprep.subr.bf16.mxu0 0
  %259 = vmatpush1.bf16.msra.mxu0 0
  %260 = vmatprep.subr.bf16.mxu0 0
  %261 = vmatpush1.bf16.msra.mxu0 0
  %262 = vmatprep.subr.bf16.mxu0 0
  %263 = vmatpush1.bf16.msra.mxu0 0
  %264 = vmatprep.subr.bf16.mxu0 0
  %265 = vmatpush1.bf16.msra.mxu0 0
  %266 = vmatprep.subr.bf16.mxu0 0
  %267 = vmatpush1.bf16.msra.mxu0 0
  %268 = vmatprep.mubr.bf16.mxu0 0
  %269 = vmatmul.mubr.bf16.gmra.mrb[0].mxu0 %v113
  %v270 = vpop.f32.mrb[0].mxu0
  %v271 = vadd.f32 %v222, %v270
  %v272 = vpop.f32.mrb[0].mxu0
  %v273 = vpop.f32.mrb[0].mxu0
  %v274 = vadd.f32 %v222, %v273
  %v275 = vpop.f32.mrb[0].mxu0
  %276 = vdwg.mxu0
  %v277 = vpack.c.bf16 %v153, %v150
  %v279 = vunpack.c.l.b16 %v277
  %v280 = vunpack.c.h.b16 %v277
  %v281 = vpack.c.b16 %v279, %v279
  %v282 = vpack.c.b16 %v280, %v280
  %vm285 = vcmask 257024
  %286 = vst.msk [vmem:[%s8] sm:$0xf] %vm285, %v281
  %287 = vst.msk [vmem:[%s8 + $0x4] sm:$0xf] %vm285, %v282
  %v288 = vpack.c.bf16 %v210, %v207
  %v290 = vunpack.c.l.b16 %v288
  %v291 = vunpack.c.h.b16 %v288
  %v292 = vpack.c.b16 %v290, %v290
  %v293 = vpack.c.b16 %v291, %v291
  %296 = vst.msk [vmem:[%s9] sm:$0xf] %vm285, %v292
  %297 = vst.msk [vmem:[%s9 + $0x4] sm:$0xf] %vm285, %v293
  %v298 = vpack.c.bf16 %v274, %v271
  %v300 = vunpack.c.l.b16 %v298
  %v301 = vunpack.c.h.b16 %v298
  %v302 = vpack.c.b16 %v300, %v300
  %v303 = vpack.c.b16 %v301, %v301
  %306 = vst.msk [vmem:[%s10] sm:$0xf] %vm285, %v302
  %307 = vst.msk [vmem:[%s10 + $0x4] sm:$0xf] %vm285, %v303
  // Predicated region
  $region38: #{whisper_decoder_layer.8} parent=0 // pred_check
    _
  $region39: #{whisper_decoder_layer.8} parent=0 // pred_check_branch
    %309 = sbr.rel (0) target = $region41
  $region40: #{whisper_decoder_layer.8} parent=0 // pred_region
    _
  $region41: #{whisper_decoder_layer.8} parent=0 // pred_fallthru
    _
  // Predicated region
  $region42: #{whisper_decoder_layer.8} parent=0 // pred_check
    _
  $region43: #{whisper_decoder_layer.8} parent=0 // pred_check_branch
    %311 = sbr.rel (0) target = $region45
  $region44: #{whisper_decoder_layer.8} parent=0 // pred_region
    _
  $region45: #{whisper_decoder_layer.8} parent=0 // pred_fallthru
    _
  // Predicated region
  $region46: #{whisper_decoder_layer.8} parent=0 // pred_check
    _
  $region47: #{whisper_decoder_layer.8} parent=0 // pred_check_branch
    %313 = sbr.rel (0) target = $region49
  $region48: #{whisper_decoder_layer.8} parent=0 // pred_region
    _
  $region49: #{whisper_decoder_layer.8} parent=0 // pred_fallthru
    _
  // Predicated region
  $region50: #{whisper_decoder_layer.8} parent=0 // pred_check
    _
  $region51: #{whisper_decoder_layer.8} parent=0 // pred_check_branch
    %315 = sbr.rel (0) target = $region53
  $region52: #{whisper_decoder_layer.8} parent=0 // pred_region
    _
  $region53: #{whisper_decoder_layer.8} parent=0 // pred_fallthru
    _
  // Predicated region
  $region54: #{whisper_decoder_layer.8} parent=0 // pred_check
    _
  $region55: #{whisper_decoder_layer.8} parent=0 // pred_check_branch
    %317 = sbr.rel (0) target = $region57
  $region56: #{whisper_decoder_layer.8} parent=0 // pred_region
    _
  $region57: #{whisper_decoder_layer.8} parent=0 // pred_fallthru
    _
  // Predicated region
  $region58: #{whisper_decoder_layer.8} parent=0 // pred_check
    _
  $region59: #{whisper_decoder_layer.8} parent=0 // pred_check_branch
    %319 = sbr.rel (0) target = $region61
  $region60: #{whisper_decoder_layer.8} parent=0 // pred_region
    _
  $region61: #{whisper_decoder_layer.8} parent=0 // pred_fallthru
    _

// kernel: whisper_decoder_layer.9
$region0: #{whisper_decoder_layer.9}
  #allocation0 [shape = 'u32[]', space=smem, size = 0x4, offset = 0x4, fixed_abs, tag = 'smem constant byte address 0x4 - core index']
  #allocation1 [shape = 'u32[144,128]{1,0:T(1,128)}', space=vmem, size = 0x12000, scoped, tag = 'internal scratch']
  #allocation2 [shape = 'f32[8,32]{1,0:T(8,128)}', space=vmem, size = 0x1000, scoped, tag = 'scratch operand']
  #allocation3 [shape = 'f32[8,32]{1,0:T(8,128)}', space=vmem, size = 0x1000, scoped, tag = 'scratch operand']
  #allocation4 [shape = 'f32[8,32]{1,0:T(8,128)}', space=vmem, size = 0x1000, scoped, tag = 'scratch operand']
  %s0 = inlined_call_operand.vmem [shape: bf16[2,8,32], index: 0, kind: input, shape index: {}]
  %s1 = inlined_call_operand.vmem [shape: bf16[2,8,32], index: 1, kind: input, shape index: {}]
  %s2 = inlined_call_operand.vmem [shape: bf16[2,8,32], index: 2, kind: input, shape index: {}]
  %s3 = inlined_call_operand.vmem [shape: f32[2,8,8], index: 3, kind: input, shape index: {}]
  %s4 = inlined_call_operand.vmem [shape: bf16[2,8,32], index: 4, kind: output, shape index: {}]
  %s5 = sld [smem:[#allocation0]]
  $region57: #{whisper_decoder_layer.9} parent=0
    _
  %s7 = ssub.s32 1, %s5
  %s8 = scalar_select 0, %s7, %s5
  loop: start=0, step=1, limit=4
  $region2: #{whisper_decoder_layer.9} parent=0 // loop_pre_header
    _
  $region3: #{whisper_decoder_layer.9} parent=0 // loop_header
    %s10 = sphi 0, %s14
    %p11 = scmp.ge.s32.totalorder %s10, 4
    %s17 = sphi 0, %s43
    %s18 = sphi 0, %s39
    %s19 = sphi 0, %s35
    %s20 = sphi 0, %s31
    %s21 = sphi 0, %s17
    %s22 = sphi 0, %s18
    %s23 = sphi 0, %s19
    %s24 = sphi 0, %s20
    %s25 = sphi 0, %s21
    %s26 = sphi 0, %s22
    %s27 = sphi 0, %s23
    %s28 = sphi 0, %s24
    %s50 = sphi 0, %s52
    %s53 = sphi 0, %s50
    %s54 = sphi 0, %s53
    %s70 = sphi 0, %s54
    %s80 = sphi 0, %s82
    %s83 = sphi 0, %s80
    %s84 = sphi 0, %s83
    %s100 = sphi 0, %s84
    %s110 = sphi 0, %s112
    %s113 = sphi 0, %s110
    %s114 = sphi 0, %s113
    %s130 = sphi 0, %s114
    %s140 = sphi 0, %s142
    %s143 = sphi 0, %s140
    %s144 = sphi 0, %s143
    %s160 = sphi 0, %s144
    %s170 = sphi 0, %s172
    %s173 = sphi 0, %s170
    %s174 = sphi 0, %s173
    %s190 = sphi 0, %s174
  $region4: #{whisper_decoder_layer.9} parent=0 // loop_header_branch
    %13 = sbr.rel (%p11) target = $region8
  $region5: #{whisper_decoder_layer.9} parent=0 // loop_body
    %s15 = ssub.s32 %s10, 1
    %s16 = ssub.s32 %s10, 2
    %s29 = sadd.s32 1, %s20
    %p30 = scmp.ge.s32.totalorder %s29, 1
    %s31 = scalar_select %p30, 0, %s29
    %s32 = sadd.s32 1, %s19
    %s33 = scalar_select %p30, %s32, %s19
    %p34 = scmp.ge.s32.totalorder %s33, 1
    %s35 = scalar_select %p34, 0, %s33
    %s36 = sadd.s32 1, %s18
    %s37 = scalar_select %p34, %s36, %s18
    %p38 = scmp.ge.s32.totalorder %s37, 1
    %s39 = scalar_select %p38, 0, %s37
    %s40 = sadd.s32 1, %s17
    %s41 = scalar_select %p38, %s40, %s17
    %p42 = scmp.ge.s32.totalorder %s41, 2
    %s43 = scalar_select %p42, 0, %s41
    %s44 = ssub.s32 %s17, %s43
    %s45 = ssub.s32 %s19, %s35
    %s46 = sor.u32 %s44, %s45
    %s47 = ssub.s32 %s18, %s39
    %s48 = sor.u32 %s46, %s47
    %p49 = scmp.eq.s32.totalorder %s48, 0
    %s51 = sadd.s32 %s50, 1
    %s52 = scalar_select %p49, %s50, %s51
    %p55 = pneg %p49
    %p56 = scmp.eq.s32.totalorder %s10, 1
    %p57 = por %p55, %p56
    %p58 = scmp.ne.s32.totalorder %s50, %s53
    %p59 = scmp.eq.s32.totalorder %s10, 0
    %p60 = por %p58, %p59
    %p61 = scmp.ne.s32.totalorder %s50, %s53
    %p62 = scmp.eq.s32.totalorder %s15, 1
    %p63 = por %p61, %p62
    %p64 = scmp.ne.s32.totalorder %s53, %s54
    %p65 = scmp.eq.s32.totalorder %s15, 0
    %p66 = por %p64, %p65
    %p67 = scmp.ne.s32.totalorder %s53, %s54
    %p68 = scmp.eq.s32.totalorder %s16, 1
    %p69 = por %p67, %p68
    %p71 = scmp.ne.s32.totalorder %s54, %s70
    %p72 = scmp.eq.s32.totalorder %s16, 0
    %p73 = por %p71, %p72
    %s74 = ssub.s32 %s17, %s43
    %s75 = ssub.s32 %s20, %s31
    %s76 = sor.u32 %s74, %s75
    %s77 = ssub.s32 %s18, %s39
    %s78 = sor.u32 %s76, %s77
    %p79 = scmp.eq.s32.totalorder %s78, 0
    %s81 = sadd.s32 %s80, 1
    %s82 = scalar_select %p79, %s80, %s81
    %p85 = pneg %p79
    %p86 = scmp.eq.s32.totalorder %s10, 1
    %p87 = por %p85, %p86
    %p88 = scmp.ne.s32.totalorder %s80, %s83
    %p89 = scmp.eq.s32.totalorder %s10, 0
    %p90 = por %p88, %p89
    %p91 = scmp.ne.s32.totalorder %s80, %s83
    %p92 = scmp.eq.s32.totalorder %s15, 1
    %p93 = por %p91, %p92
    %p94 = scmp.ne.s32.totalorder %s83, %s84
    %p95 = scmp.eq.s32.totalorder %s15, 0
    %p96 = por %p94, %p95
    %p97 = scmp.ne.s32.totalorder %s83, %s84
    %p98 = scmp.eq.s32.totalorder %s16, 1
    %p99 = por %p97, %p98
    %p101 = scmp.ne.s32.totalorder %s84, %s100
    %p102 = scmp.eq.s32.totalorder %s16, 0
    %p103 = por %p101, %p102
    %s104 = ssub.s32 %s17, %s43
    %s105 = ssub.s32 %s20, %s31
    %s106 = sor.u32 %s104, %s105
    %s107 = ssub.s32 %s18, %s39
    %s108 = sor.u32 %s106, %s107
    %p109 = scmp.eq.s32.totalorder %s108, 0
    %s111 = sadd.s32 %s110, 1
    %s112 = scalar_select %p109, %s110, %s111
    %p115 = pneg %p109
    %p116 = scmp.eq.s32.totalorder %s10, 1
    %p117 = por %p115, %p116
    %p118 = scmp.ne.s32.totalorder %s110, %s113
    %p119 = scmp.eq.s32.totalorder %s10, 0
    %p120 = por %p118, %p119
    %p121 = scmp.ne.s32.totalorder %s110, %s113
    %p122 = scmp.eq.s32.totalorder %s15, 1
    %p123 = por %p121, %p122
    %p124 = scmp.ne.s32.totalorder %s113, %s114
    %p125 = scmp.eq.s32.totalorder %s15, 0
    %p126 = por %p124, %p125
    %p127 = scmp.ne.s32.totalorder %s113, %s114
    %p128 = scmp.eq.s32.totalorder %s16, 1
    %p129 = por %p127, %p128
    %p131 = scmp.ne.s32.totalorder %s114, %s130
    %p132 = scmp.eq.s32.totalorder %s16, 0
    %p133 = por %p131, %p132
    %s134 = ssub.s32 %s17, %s43
    %s135 = ssub.s32 %s19, %s35
    %s136 = sor.u32 %s134, %s135
    %s137 = ssub.s32 %s20, %s31
    %s138 = sor.u32 %s136, %s137
    %p139 = scmp.eq.s32.totalorder %s138, 0
    %s141 = sadd.s32 %s140, 1
    %s142 = scalar_select %p139, %s140, %s141
    %p145 = pneg %p139
    %p146 = scmp.eq.s32.totalorder %s10, 1
    %p147 = por %p145, %p146
    %p148 = scmp.ne.s32.totalorder %s140, %s143
    %p149 = scmp.eq.s32.totalorder %s10, 0
    %p150 = por %p148, %p149
    %p151 = scmp.ne.s32.totalorder %s140, %s143
    %p152 = scmp.eq.s32.totalorder %s15, 1
    %p153 = por %p151, %p152
    %p154 = scmp.ne.s32.totalorder %s143, %s144
    %p155 = scmp.eq.s32.totalorder %s15, 0
    %p156 = por %p154, %p155
    %p157 = scmp.ne.s32.totalorder %s143, %s144
    %p158 = scmp.eq.s32.totalorder %s16, 1
    %p159 = por %p157, %p158
    %p161 = scmp.ne.s32.totalorder %s144, %s160
    %p162 = scmp.eq.s32.totalorder %s16, 0
    %p163 = por %p161, %p162
    %s164 = ssub.s32 %s17, %s43
    %s165 = ssub.s32 %s19, %s35
    %s166 = sor.u32 %s164, %s165
    %s167 = ssub.s32 %s18, %s39
    %s168 = sor.u32 %s166, %s167
    %p169 = scmp.eq.s32.totalorder %s168, 0
    %s171 = sadd.s32 %s170, 1
    %s172 = scalar_select %p169, %s170, %s171
    %p175 = pneg %p169
    %p176 = scmp.eq.s32.totalorder %s10, 1
    %p177 = por %p175, %p176
    %p178 = scmp.ne.s32.totalorder %s170, %s173
    %p179 = scmp.eq.s32.totalorder %s10, 0
    %p180 = por %p178, %p179
    %p181 = scmp.ne.s32.totalorder %s170, %s173
    %p182 = scmp.eq.s32.totalorder %s15, 1
    %p183 = por %p181, %p182
    %p184 = scmp.ne.s32.totalorder %s173, %s174
    %p185 = scmp.eq.s32.totalorder %s15, 0
    %p186 = por %p184, %p185
    %p187 = scmp.ne.s32.totalorder %s173, %s174
    %p188 = scmp.eq.s32.totalorder %s16, 1
    %p189 = por %p187, %p188
    %p191 = scmp.ne.s32.totalorder %s174, %s190
    %p192 = scmp.eq.s32.totalorder %s16, 0
    %p193 = por %p191, %p192
    %p194 = scmp.le.s32.totalorder 1, %s10
    %p195 = scmp.lt.s32.totalorder %s10, 3
    %p196 = pnand %p194, %p195
    %p197 = pneg %p196
    // Predicated region
    $region9: #{whisper_decoder_layer.9} parent=5 // pred_check
      _
    $region10: #{whisper_decoder_layer.9} parent=5 // pred_check_branch
      %199 = sbr.rel (%p196) target = $region12
    $region11: #{whisper_decoder_layer.9} parent=5 // pred_region
      %s200 = ssub.s32 %s10, 1
    $region12: #{whisper_decoder_layer.9} parent=5 // pred_fallthru
      _
    %p201 = scmp.lt.s32.totalorder %s10, 2
    // Predicated region
    $region13: #{whisper_decoder_layer.9} parent=5 // pred_check
      %p202 = pneg %p201
    $region14: #{whisper_decoder_layer.9} parent=5 // pred_check_branch
      %204 = sbr.rel (%p202) target = $region16
    $region15: #{whisper_decoder_layer.9} parent=5 // pred_region
      // Predicated region
      $region17: #{whisper_decoder_layer.9} parent=15 // pred_check
        %p205 = pneg %p60
      $region18: #{whisper_decoder_layer.9} parent=15 // pred_check_branch
        %207 = sbr.rel (%p205) target = $region20
      $region19: #{whisper_decoder_layer.9} parent=15 // pred_region
        %p208 = scmp.lt.s32.totalorder %s17, 1
        %s209 = scalar_select %p208, %s17, 1
        %p210 = scmp.lt.s32.totalorder %s19, 0
        %s211 = scalar_select %p210, %s19, 0
        %p212 = scmp.lt.s32.totalorder %s18, 0
        %s213 = scalar_select %p212, %s18, 0
        %s214 = sadd.s32 %s213, %s211
        %s215 = sadd.s32 %s214, %s209
        %s216 = smul.addr %s215, 4
        %s217 = scalar_lea.vmem %s0, %s216
      $region20: #{whisper_decoder_layer.9} parent=15 // pred_fallthru
        _
      // Predicated region
      $region21: #{whisper_decoder_layer.9} parent=15 // pred_check
        %p218 = pneg %p90
      $region22: #{whisper_decoder_layer.9} parent=15 // pred_check_branch
        %220 = sbr.rel (%p218) target = $region24
      $region23: #{whisper_decoder_layer.9} parent=15 // pred_region
        %p221 = scmp.lt.s32.totalorder %s17, 1
        %s222 = scalar_select %p221, %s17, 1
        %p223 = scmp.lt.s32.totalorder %s20, 0
        %s224 = scalar_select %p223, %s20, 0
        %p225 = scmp.lt.s32.totalorder %s18, 0
        %s226 = scalar_select %p225, %s18, 0
        %s227 = sadd.s32 %s226, %s224
        %s228 = sadd.s32 %s227, %s222
        %s229 = smul.addr %s228, 4
        %s230 = scalar_lea.vmem %s1, %s229
      $region24: #{whisper_decoder_layer.9} parent=15 // pred_fallthru
        _
      // Predicated region
      $region25: #{whisper_decoder_layer.9} parent=15 // pred_check
        %p231 = pneg %p120
      $region26: #{whisper_decoder_layer.9} parent=15 // pred_check_branch
        %233 = sbr.rel (%p231) target = $region28
      $region27: #{whisper_decoder_layer.9} parent=15 // pred_region
        %p234 = scmp.lt.s32.totalorder %s17, 1
        %s235 = scalar_select %p234, %s17, 1
        %p236 = scmp.lt.s32.totalorder %s20, 0
        %s237 = scalar_select %p236, %s20, 0
        %p238 = scmp.lt.s32.totalorder %s18, 0
        %s239 = scalar_select %p238, %s18, 0
        %s240 = sadd.s32 %s239, %s237
        %s241 = sadd.s32 %s240, %s235
        %s242 = smul.addr %s241, 4
        %s243 = scalar_lea.vmem %s2, %s242
      $region28: #{whisper_decoder_layer.9} parent=15 // pred_fallthru
        _
      // Predicated region
      $region29: #{whisper_decoder_layer.9} parent=15 // pred_check
        %p244 = pneg %p150
      $region30: #{whisper_decoder_layer.9} parent=15 // pred_check_branch
        %246 = sbr.rel (%p244) target = $region32
      $region31: #{whisper_decoder_layer.9} parent=15 // pred_region
        %p247 = scmp.lt.s32.totalorder %s17, 1
        %s248 = scalar_select %p247, %s17, 1
        %p249 = scmp.lt.s32.totalorder %s19, 0
        %s250 = scalar_select %p249, %s19, 0
        %p251 = scmp.lt.s32.totalorder %s20, 0
        %s252 = scalar_select %p251, %s20, 0
        %s253 = sadd.s32 %s252, %s250
        %s254 = sadd.s32 %s253, %s248
        %s255 = smul.addr %s254, 8
        %s256 = scalar_lea.vmem %s3, %s255
      $region32: #{whisper_decoder_layer.9} parent=15 // pred_fallthru
        _
    $region16: #{whisper_decoder_layer.9} parent=5 // pred_fallthru
      _
    %p257 = scmp.le.s32.totalorder 1, %s10
    %p258 = scmp.lt.s32.totalorder %s10, 3
    %p259 = pnand %p257, %p258
    %p260 = pneg %p259
    // Predicated region
    $region33: #{whisper_decoder_layer.9} parent=5 // pred_check
      _
    $region34: #{whisper_decoder_layer.9} parent=5 // pred_check_branch
      %262 = sbr.rel (%p259) target = $region36
    $region35: #{whisper_decoder_layer.9} parent=5 // pred_region
      %s263 = ssub.s32 %s10, 1
      %p264 = scmp.lt.s32.totalorder %s21, 1
      %s265 = scalar_select %p264, %s21, 1
      %p266 = scmp.lt.s32.totalorder %s23, 0
      %s267 = scalar_select %p266, %s23, 0
      %p268 = scmp.lt.s32.totalorder %s22, 0
      %s269 = scalar_select %p268, %s22, 0
      %s270 = sadd.s32 %s269, %s267
      %s271 = sadd.s32 %s270, %s265
      %s272 = smul.addr %s271, 4
      %s273 = scalar_lea.vmem %s0, %s272
      %p274 = pneg %p66
      %p275 = pneg %p63
      %p276 = scmp.lt.s32.totalorder %s21, 1
      %s277 = scalar_select %p276, %s21, 1
      %p278 = scmp.lt.s32.totalorder %s24, 0
      %s279 = scalar_select %p278, %s24, 0
      %p280 = scmp.lt.s32.totalorder %s22, 0
      %s281 = scalar_select %p280, %s22, 0
      %s282 = sadd.s32 %s281, %s279
      %s283 = sadd.s32 %s282, %s277
      %s284 = smul.addr %s283, 4
      %s285 = scalar_lea.vmem %s1, %s284
      %p286 = pneg %p96
      %p287 = pneg %p93
      %p288 = scmp.lt.s32.totalorder %s21, 1
      %s289 = scalar_select %p288, %s21, 1
      %p290 = scmp.lt.s32.totalorder %s24, 0
      %s291 = scalar_select %p290, %s24, 0
      %p292 = scmp.lt.s32.totalorder %s22, 0
      %s293 = scalar_select %p292, %s22, 0
      %s294 = sadd.s32 %s293, %s291
      %s295 = sadd.s32 %s294, %s289
      %s296 = smul.addr %s295, 4
      %s297 = scalar_lea.vmem %s2, %s296
      %p298 = pneg %p126
      %p299 = pneg %p123
      %p300 = scmp.lt.s32.totalorder %s21, 1
      %s301 = scalar_select %p300, %s21, 1
      %p302 = scmp.lt.s32.totalorder %s23, 0
      %s303 = scalar_select %p302, %s23, 0
      %p304 = scmp.lt.s32.totalorder %s24, 0
      %s305 = scalar_select %p304, %s24, 0
      %s306 = sadd.s32 %s305, %s303
      %s307 = sadd.s32 %s306, %s301
      %s308 = smul.addr %s307, 8
      %s309 = scalar_lea.vmem %s3, %s308
      %p310 = pneg %p156
      %p311 = pneg %p153
      %p312 = pneg %p186
      %p313 = pneg %p183
      %p314 = scmp.lt.s32.totalorder %s21, 1
      %s315 = scalar_select %p314, %s21, 1
      %p316 = scmp.lt.s32.totalorder %s23, 0
      %s317 = scalar_select %p316, %s23, 0
      %p318 = scmp.lt.s32.totalorder %s22, 0
      %s319 = scalar_select %p318, %s22, 0
      %s320 = sadd.s32 %s319, %s317
      %s321 = sadd.s32 %s320, %s315
      %s322 = smul.addr %s321, 4
      %s323 = scalar_lea.vmem %s4, %s322
      %p324 = scmp.lt.s32.totalorder %s21, 1
      %s325 = scalar_select %p324, %s21, 1
      %p326 = scmp.lt.s32.totalorder %s23, 0
      %s327 = scalar_select %p326, %s23, 0
      %p328 = scmp.lt.s32.totalorder %s22, 0
      %s329 = scalar_select %p328, %s22, 0
      %s330 = sadd.s32 %s329, %s327
      %s331 = sadd.s32 %s330, %s325
      %s332 = smul.addr %s331, 4
      %s333 = scalar_lea.vmem %s0, %s332
      %p334 = scmp.lt.s32.totalorder %s21, 1
      %s335 = scalar_select %p334, %s21, 1
      %p336 = scmp.lt.s32.totalorder %s24, 0
      %s337 = scalar_select %p336, %s24, 0
      %p338 = scmp.lt.s32.totalorder %s22, 0
      %s339 = scalar_select %p338, %s22, 0
      %s340 = sadd.s32 %s339, %s337
      %s341 = sadd.s32 %s340, %s335
      %s342 = smul.addr %s341, 4
      %s343 = scalar_lea.vmem %s1, %s342
      %p344 = scmp.lt.s32.totalorder %s21, 1
      %s345 = scalar_select %p344, %s21, 1
      %p346 = scmp.lt.s32.totalorder %s24, 0
      %s347 = scalar_select %p346, %s24, 0
      %p348 = scmp.lt.s32.totalorder %s22, 0
      %s349 = scalar_select %p348, %s22, 0
      %s350 = sadd.s32 %s349, %s347
      %s351 = sadd.s32 %s350, %s345
      %s352 = smul.addr %s351, 4
      %s353 = scalar_lea.vmem %s2, %s352
      %p354 = scmp.lt.s32.totalorder %s21, 1
      %s355 = scalar_select %p354, %s21, 1
      %p356 = scmp.lt.s32.totalorder %s23, 0
      %s357 = scalar_select %p356, %s23, 0
      %p358 = scmp.lt.s32.totalorder %s24, 0
      %s359 = scalar_select %p358, %s24, 0
      %s360 = sadd.s32 %s359, %s357
      %s361 = sadd.s32 %s360, %s355
      %s362 = smul.addr %s361, 8
      %s363 = scalar_lea.vmem %s3, %s362
      %p364 = scmp.lt.s32.totalorder %s21, 1
      %s365 = scalar_select %p364, %s21, 1
      %p366 = scmp.lt.s32.totalorder %s23, 0
      %s367 = scalar_select %p366, %s23, 0
      %p368 = scmp.lt.s32.totalorder %s22, 0
      %s369 = scalar_select %p368, %s22, 0
      %s370 = sadd.s32 %s369, %s367
      %s371 = sadd.s32 %s370, %s365
      %s372 = smul.addr %s371, 4
      %s373 = scalar_lea.vmem %s4, %s372
      %p375 = scmp.eq.s32.totalorder %s24, 0
      // Predicated region
      $region37: #{whisper_decoder_layer.9} parent=35 // pred_check
        %p376 = pneg %p375
      $region38: #{whisper_decoder_layer.9} parent=35 // pred_check_branch
        %378 = sbr.rel (%p376) target = $region40
      $region39: #{whisper_decoder_layer.9} parent=35 // pred_region
        %vm379 = vcmask 261120
        %380 = vst.msk [vmem:[#allocation2] sm:$0xff] %vm379, -1e+30
        %381 = vst.msk [vmem:[#allocation3] sm:$0xff] %vm379, 0.0
        %382 = vst.msk [vmem:[#allocation4] sm:$0xff] %vm379, 0.0
      $region40: #{whisper_decoder_layer.9} parent=35 // pred_fallthru
        _
      %v383 = vld [vmem:[%s333] sm:$0xf]
      %v384 = vld [vmem:[%s343] sm:$0xf]
      %v385 = vld [vmem:[%s353] sm:$0xf]
      %v386 = vld [vmem:[%s363] sm:$0xff]
      %vm387 = vcmask 64512
      %v389 = vsel %vm387, %v383, 0
      %v392 = vsel %vm387, %v384, 0
      %394 = vmatprep.subr.bf16.mxu0 0
      %395 = vmatpush1.bf16.xpose.msra.mxu0 %v392
      %396 = vmatprep.subr.bf16.mxu0 0
      %397 = vmatpush1.bf16.xpose.msra.mxu0 0
      %398 = vmatprep.subr.bf16.mxu0 0
      %399 = vmatpush1.bf16.xpose.msra.mxu0 0
      %400 = vmatprep.subr.bf16.mxu0 0
      %401 = vmatpush1.bf16.xpose.msra.mxu0 0
      %402 = vmatprep.subr.bf16.mxu0 0
      %403 = vmatpush1.bf16.xpose.msra.mxu0 0
      %404 = vmatprep.subr.bf16.mxu0 0
      %405 = vmatpush1.bf16.xpose.msra.mxu0 0
      %406 = vmatprep.subr.bf16.mxu0 0
      %407 = vmatpush1.bf16.xpose.msra.mxu0 0
      %408 = vmatprep.subr.bf16.mxu0 0
      %409 = vmatpush1.bf16.xpose.msra.mxu0 0
      %410 = vmatprep.subr.bf16.mxu0 0
      %411 = vmatpush1.bf16.xpose.msra.mxu0 0
      %412 = vmatprep.subr.bf16.mxu0 0
      %413 = vmatpush1.bf16.xpose.msra.mxu0 0
      %414 = vmatprep.subr.bf16.mxu0 0
      %415 = vmatpush1.bf16.xpose.msra.mxu0 0
      %416 = vmatprep.subr.bf16.mxu0 0
      %417 = vmatpush1.bf16.xpose.msra.mxu0 0
      %418 = vmatprep.subr.bf16.mxu0 0
      %419 = vmatpush1.bf16.xpose.msra.mxu0 0
      %420 = vmatprep.subr.bf16.mxu0 0
      %421 = vmatpush1.bf16.xpose.msra.mxu0 0
      %422 = vmatprep.subr.bf16.mxu0 0
      %423 = vmatpush1.bf16.xpose.msra.mxu0 0
      %424 = vmatprep.subr.bf16.mxu0 0
      %425 = vmatpush1.bf16.xpose.msra.mxu0 0
      %426 = vmatprep.mubr.bf16.mxu0 0
      %427 = vmatmul.mubr.bf16.gmra.mrb[0].mxu0 %v389
      %v428 = vpop.f32.mrb[0].mxu0
      %v429 = vadd.f32 %v386, %v428
      %v430 = vpop.f32.mrb[0].mxu0
      %v431 = vpop.f32.mrb[0].mxu0
      %v432 = vpop.f32.mrb[0].mxu0
      %433 = vdwg.mxu0
      %v434 = vld [vmem:[#allocation2] sm:$0xff]
      %v435 = vsel %vm387, %v429, -inf
      %436 = vmax.xlane.f32.xlu0 %v435
      %v437 = vpop.xlane.xlu0 %436
      %v438 = vmax.f32 %v434, %v437
      %v439 = vsub.f32 %v434, %v438
      %v440 = vmul.f32 %v439, 1.442695
      %v441 = vpow.pop %v440
      %443 = vset.pattern.permute.xlu0 0
      %444 = vperm.xlu0 %443, %v438
      %v445 = vpop.permute.xlu0 %444
      %v447 = vsub.f32 %v429, %v445
      %v448 = vmul.f32 %v447, 1.442695
      %v449 = vpow.pop %v448
      %v450 = vld [vmem:[#allocation3] sm:$0xff]
      %v451 = vmul.f32 %v441, %v450
      %v452 = vsel %vm387, %v449, 0.0
      %453 = vadd.xlane.f32.xlu0 %v452
      %v454 = vpop.xlane.xlu0 %453
      %v455 = vadd.f32 %v451, %v454
      %456 = vst.msk [vmem:[#allocation3] sm:$0xff] %vm387, %v455
      %v457 = vld [vmem:[#allocation4] sm:$0xff]
      %v458 = vmul.f32 %v441, %v457
      %v459 = vpack.c.bf16 %v449, %v449
      %v461 = vsel %vm387, %v459, 0
      %vm463 = vcmask 1043456
      %v465 = vsel %vm463, %v385, 0
      %467 = vmatprep.subr.bf16.mxu0 0
      %468 = vmatpush1.bf16.msra.mxu0 %v465
      %469 = vmatprep.subr.bf16.mxu0 0
      %470 = vmatpush1.bf16.msra.mxu0 0
      %471 = vmatprep.subr.bf16.mxu0 0
      %472 = vmatpush1.bf16.msra.mxu0 0
      %473 = vmatprep.subr.bf16.mxu0 0
      %474 = vmatpush1.bf16.msra.mxu0 0
      %475 = vmatprep.subr.bf16.mxu0 0
      %476 = vmatpush1.bf16.msra.mxu0 0
      %477 = vmatprep.subr.bf16.mxu0 0
      %478 = vmatpush1.bf16.msra.mxu0 0
      %479 = vmatprep.subr.bf16.mxu0 0
      %480 = vmatpush1.bf16.msra.mxu0 0
      %481 = vmatprep.subr.bf16.mxu0 0
      %482 = vmatpush1.bf16.msra.mxu0 0
      %483 = vmatprep.subr.bf16.mxu0 0
      %484 = vmatpush1.bf16.msra.mxu0 0
      %485 = vmatprep.subr.bf16.mxu0 0
      %486 = vmatpush1.bf16.msra.mxu0 0
      %487 = vmatprep.subr.bf16.mxu0 0
      %488 = vmatpush1.bf16.msra.mxu0 0
      %489 = vmatprep.subr.bf16.mxu0 0
      %490 = vmatpush1.bf16.msra.mxu0 0
      %491 = vmatprep.subr.bf16.mxu0 0
      %492 = vmatpush1.bf16.msra.mxu0 0
      %493 = vmatprep.subr.bf16.mxu0 0
      %494 = vmatpush1.bf16.msra.mxu0 0
      %495 = vmatprep.subr.bf16.mxu0 0
      %496 = vmatpush1.bf16.msra.mxu0 0
      %497 = vmatprep.subr.bf16.mxu0 0
      %498 = vmatpush1.bf16.msra.mxu0 0
      %499 = vmatprep.mubr.bf16.mxu0 0
      %500 = vmatmul.mubr.bf16.gmra.mrb[0].mxu0 %v461
      %v501 = vpop.f32.mrb[0].mxu0
      %v502 = vadd.f32 0.0, %v501
      %v503 = vpop.f32.mrb[0].mxu0
      %v504 = vpop.f32.mrb[0].mxu0
      %v505 = vpop.f32.mrb[0].mxu0
      %506 = vdwg.mxu0
      %v507 = vadd.f32 %v458, %v502
      %508 = vst.msk [vmem:[#allocation4] sm:$0xff] %vm387, %v507
      %509 = vst.msk [vmem:[#allocation2] sm:$0xff] %vm387, %v438
      %v511 = vunpack.c.l.b16 %v383
      %v512 = vpack.c.b16 %v511, %v511
      %513 = vrot.lane.b32.xlu0 %v512, 120
      %v514 = vpop.permute.xlu0 %513
      %v516 = vunpack.c.l.b16 %v384
      %v517 = vpack.c.b16 %v516, %v516
      %518 = vrot.lane.b32.xlu0 %v517, 120
      %v519 = vpop.permute.xlu0 %518
      %v521 = vsel %vm387, %v514, 0
      %v524 = vsel %vm387, %v519, 0
      %526 = vmatprep.subr.bf16.mxu0 0
      %527 = vmatpush1.bf16.xpose.msra.mxu0 %v524
      %528 = vmatprep.subr.bf16.mxu0 0
      %529 = vmatpush1.bf16.xpose.msra.mxu0 0
      %530 = vmatprep.subr.bf16.mxu0 0
      %531 = vmatpush1.bf16.xpose.msra.mxu0 0
      %532 = vmatprep.subr.bf16.mxu0 0
      %533 = vmatpush1.bf16.xpose.msra.mxu0 0
      %534 = vmatprep.subr.bf16.mxu0 0
      %535 = vmatpush1.bf16.xpose.msra.mxu0 0
      %536 = vmatprep.subr.bf16.mxu0 0
      %537 = vmatpush1.bf16.xpose.msra.mxu0 0
      %538 = vmatprep.subr.bf16.mxu0 0
      %539 = vmatpush1.bf16.xpose.msra.mxu0 0
      %540 = vmatprep.subr.bf16.mxu0 0
      %541 = vmatpush1.bf16.xpose.msra.mxu0 0
      %542 = vmatprep.subr.bf16.mxu0 0
      %543 = vmatpush1.bf16.xpose.msra.mxu0 0
      %544 = vmatprep.subr.bf16.mxu0 0
      %545 = vmatpush1.bf16.xpose.msra.mxu0 0
      %546 = vmatprep.subr.bf16.mxu0 0
      %547 = vmatpush1.bf16.xpose.msra.mxu0 0
      %548 = vmatprep.subr.bf16.mxu0 0
      %549 = vmatpush1.bf16.xpose.msra.mxu0 0
      %550 = vmatprep.subr.bf16.mxu0 0
      %551 = vmatpush1.bf16.xpose.msra.mxu0 0
      %552 = vmatprep.subr.bf16.mxu0 0
      %553 = vmatpush1.bf16.xpose.msra.mxu0 0
      %554 = vmatprep.subr.bf16.mxu0 0
      %555 = vmatpush1.bf16.xpose.msra.mxu0 0
      %556 = vmatprep.subr.bf16.mxu0 0
      %557 = vmatpush1.bf16.xpose.msra.mxu0 0
      %558 = vmatprep.mubr.bf16.mxu0 0
      %559 = vmatmul.mubr.bf16.gmra.mrb[0].mxu0 %v521
      %v560 = vpop.f32.mrb[0].mxu0
      %v561 = vadd.f32 %v386, %v560
      %v562 = vpop.f32.mrb[0].mxu0
      %v563 = vpop.f32.mrb[0].mxu0
      %v564 = vpop.f32.mrb[0].mxu0
      %565 = vdwg.mxu0
      %v566 = vld [vmem:[#allocation2] sm:$0xff]
      %v567 = vsel %vm387, %v561, -inf
      %568 = vmax.xlane.f32.xlu0 %v567
      %v569 = vpop.xlane.xlu0 %568
      %v570 = vmax.f32 %v566, %v569
      %v571 = vsub.f32 %v566, %v570
      %v572 = vmul.f32 %v571, 1.442695
      %v573 = vpow.pop %v572
      %575 = vset.pattern.permute.xlu0 8
      %576 = vperm.xlu0 %575, %v570
      %v577 = vpop.permute.xlu0 %576
      %v579 = vsub.f32 %v561, %v577
      %v580 = vmul.f32 %v579, 1.442695
      %v581 = vpow.pop %v580
      %v582 = vld [vmem:[#allocation3] sm:$0xff]
      %v583 = vmul.f32 %v573, %v582
      %v584 = vsel %vm387, %v581, 0.0
      %585 = vadd.xlane.f32.xlu0 %v584
      %v586 = vpop.xlane.xlu0 %585
      %v587 = vadd.f32 %v583, %v586
      %vm588 = vcmask 130112
      %589 = vst.msk [vmem:[#allocation3] sm:$0xff] %vm588, %v587
      %v590 = vld [vmem:[#allocation4] sm:$0xff]
      %v591 = vmul.f32 %v573, %v590
      %v592 = vpack.c.bf16 %v581, %v581
      %v594 = vunpack.c.l.b16 %v385
      %v595 = vpack.c.b16 %v594, %v594
      %596 = vrot.lane.b32.xlu0 %v595, 120
      %v597 = vpop.permute.xlu0 %596
      %v599 = vsel %vm387, %v592, 0
      %v602 = vsel %vm463, %v597, 0
      %604 = vmatprep.subr.bf16.mxu0 0
      %605 = vmatpush1.bf16.msra.mxu0 %v602
      %606 = vmatprep.subr.bf16.mxu0 0
      %607 = vmatpush1.bf16.msra.mxu0 0
      %608 = vmatprep.subr.bf16.mxu0 0
      %609 = vmatpush1.bf16.msra.mxu0 0
      %610 = vmatprep.subr.bf16.mxu0 0
      %611 = vmatpush1.bf16.msra.mxu0 0
      %612 = vmatprep.subr.bf16.mxu0 0
      %613 = vmatpush1.bf16.msra.mxu0 0
      %614 = vmatprep.subr.bf16.mxu0 0
      %615 = vmatpush1.bf16.msra.mxu0 0
      %616 = vmatprep.subr.bf16.mxu0 0
      %617 = vmatpush1.bf16.msra.mxu0 0
      %618 = vmatprep.subr.bf16.mxu0 0
      %619 = vmatpush1.bf16.msra.mxu0 0
      %620 = vmatprep.subr.bf16.mxu0 0
      %621 = vmatpush1.bf16.msra.mxu0 0
      %622 = vmatprep.subr.bf16.mxu0 0
      %623 = vmatpush1.bf16.msra.mxu0 0
      %624 = vmatprep.subr.bf16.mxu0 0
      %625 = vmatpush1.bf16.msra.mxu0 0
      %626 = vmatprep.subr.bf16.mxu0 0
      %627 = vmatpush1.bf16.msra.mxu0 0
      %628 = vmatprep.subr.bf16.mxu0 0
      %629 = vmatpush1.bf16.msra.mxu0 0
      %630 = vmatprep.subr.bf16.mxu0 0
      %631 = vmatpush1.bf16.msra.mxu0 0
      %632 = vmatprep.subr.bf16.mxu0 0
      %633 = vmatpush1.bf16.msra.mxu0 0
      %634 = vmatprep.subr.bf16.mxu0 0
      %635 = vmatpush1.bf16.msra.mxu0 0
      %636 = vmatprep.mubr.bf16.mxu0 0
      %637 = vmatmul.mubr.bf16.gmra.mrb[0].mxu0 %v599
      %v638 = vpop.f32.mrb[0].mxu0
      %v639 = vadd.f32 0.0, %v638
      %v640 = vpop.f32.mrb[0].mxu0
      %v641 = vpop.f32.mrb[0].mxu0
      %v642 = vpop.f32.mrb[0].mxu0
      %643 = vdwg.mxu0
      %645 = vrot.lane.b32.xlu0 %v639, 8
      %v646 = vpop.permute.xlu0 %645
      %v648 = vadd.f32 %v591, %v646
      %649 = vst.msk [vmem:[#allocation4] sm:$0xff] %vm588, %v648
      %650 = vst.msk [vmem:[#allocation2] sm:$0xff] %vm588, %v570
      %651 = vrot.lane.b32.xlu0 %v512, 112
      %v652 = vpop.permute.xlu0 %651
      %653 = vrot.lane.b32.xlu0 %v517, 112
      %v654 = vpop.permute.xlu0 %653
      %v656 = vsel %vm387, %v652, 0
      %v659 = vsel %vm387, %v654, 0
      %661 = vmatprep.subr.bf16.mxu0 0
      %662 = vmatpush1.bf16.xpose.msra.mxu0 %v659
      %663 = vmatprep.subr.bf16.mxu0 0
      %664 = vmatpush1.bf16.xpose.msra.mxu0 0
      %665 = vmatprep.subr.bf16.mxu0 0
      %666 = vmatpush1.bf16.xpose.msra.mxu0 0
      %667 = vmatprep.subr.bf16.mxu0 0
      %668 = vmatpush1.bf16.xpose.msra.mxu0 0
      %669 = vmatprep.subr.bf16.mxu0 0
      %670 = vmatpush1.bf16.xpose.msra.mxu0 0
      %671 = vmatprep.subr.bf16.mxu0 0
      %672 = vmatpush1.bf16.xpose.msra.mxu0 0
      %673 = vmatprep.subr.bf16.mxu0 0
      %674 = vmatpush1.bf16.xpose.msra.mxu0 0
      %675 = vmatprep.subr.bf16.mxu0 0
      %676 = vmatpush1.bf16.xpose.msra.mxu0 0
      %677 = vmatprep.subr.bf16.mxu0 0
      %678 = vmatpush1.bf16.xpose.msra.mxu0 0
      %679 = vmatprep.subr.bf16.mxu0 0
      %680 = vmatpush1.bf16.xpose.msra.mxu0 0
      %681 = vmatprep.subr.bf16.mxu0 0
      %682 = vmatpush1.bf16.xpose.msra.mxu0 0
      %683 = vmatprep.subr.bf16.mxu0 0
      %684 = vmatpush1.bf16.xpose.msra.mxu0 0
      %685 = vmatprep.subr.bf16.mxu0 0
      %686 = vmatpush1.bf16.xpose.msra.mxu0 0
      %687 = vmatprep.subr.bf16.mxu0 0
      %688 = vmatpush1.bf16.xpose.msra.mxu0 0
      %689 = vmatprep.subr.bf16.mxu0 0
      %690 = vmatpush1.bf16.xpose.msra.mxu0 0
      %691 = vmatprep.subr.bf16.mxu0 0
      %692 = vmatpush1.bf16.xpose.msra.mxu0 0
      %693 = vmatprep.mubr.bf16.mxu0 0
      %694 = vmatmul.mubr.bf16.gmra.mrb[0].mxu0 %v656
      %v695 = vpop.f32.mrb[0].mxu0
      %v696 = vadd.f32 %v386, %v695
      %v697 = vpop.f32.mrb[0].mxu0
      %v698 = vpop.f32.mrb[0].mxu0
      %v699 = vpop.f32.mrb[0].mxu0
      %700 = vdwg.mxu0
      %v701 = vld [vmem:[#allocation2] sm:$0xff]
      %v702 = vsel %vm387, %v696, -inf
      %703 = vmax.xlane.f32.xlu0 %v702
      %v704 = vpop.xlane.xlu0 %703
      %v705 = vmax.f32 %v701, %v704
      %v706 = vsub.f32 %v701, %v705
      %v707 = vmul.f32 %v706, 1.442695
      %v708 = vpow.pop %v707
      %710 = vset.pattern.permute.xlu0 16
      %711 = vperm.xlu0 %710, %v705
      %v712 = vpop.permute.xlu0 %711
      %v714 = vsub.f32 %v696, %v712
      %v715 = vmul.f32 %v714, 1.442695
      %v716 = vpow.pop %v715
      %v717 = vld [vmem:[#allocation3] sm:$0xff]
      %v718 = vmul.f32 %v708, %v717
      %v719 = vsel %vm387, %v716, 0.0
      %720 = vadd.xlane.f32.xlu0 %v719
      %v721 = vpop.xlane.xlu0 %720
      %v722 = vadd.f32 %v718, %v721
      %vm723 = vcmask 195712
      %724 = vst.msk [vmem:[#allocation3] sm:$0xff] %vm723, %v722
      %v725 = vld [vmem:[#allocation4] sm:$0xff]
      %v726 = vmul.f32 %v708, %v725
      %v727 = vpack.c.bf16 %v716, %v716
      %728 = vrot.lane.b32.xlu0 %v595, 112
      %v729 = vpop.permute.xlu0 %728
      %v731 = vsel %vm387, %v727, 0
      %v734 = vsel %vm463, %v729, 0
      %736 = vmatprep.subr.bf16.mxu0 0
      %737 = vmatpush1.bf16.msra.mxu0 %v734
      %738 = vmatprep.subr.bf16.mxu0 0
      %739 = vmatpush1.bf16.msra.mxu0 0
      %740 = vmatprep.subr.bf16.mxu0 0
      %741 = vmatpush1.bf16.msra.mxu0 0
      %742 = vmatprep.subr.bf16.mxu0 0
      %743 = vmatpush1.bf16.msra.mxu0 0
      %744 = vmatprep.subr.bf16.mxu0 0
      %745 = vmatpush1.bf16.msra.mxu0 0
      %746 = vmatprep.subr.bf16.mxu0 0
      %747 = vmatpush1.bf16.msra.mxu0 0
      %748 = vmatprep.subr.bf16.mxu0 0
      %749 = vmatpush1.bf16.msra.mxu0 0
      %750 = vmatprep.subr.bf16.mxu0 0
      %751 = vmatpush1.bf16.msra.mxu0 0
      %752 = vmatprep.subr.bf16.mxu0 0
      %753 = vmatpush1.bf16.msra.mxu0 0
      %754 = vmatprep.subr.bf16.mxu0 0
      %755 = vmatpush1.bf16.msra.mxu0 0
      %756 = vmatprep.subr.bf16.mxu0 0
      %757 = vmatpush1.bf16.msra.mxu0 0
      %758 = vmatprep.subr.bf16.mxu0 0
      %759 = vmatpush1.bf16.msra.mxu0 0
      %760 = vmatprep.subr.bf16.mxu0 0
      %761 = vmatpush1.bf16.msra.mxu0 0
      %762 = vmatprep.subr.bf16.mxu0 0
      %763 = vmatpush1.bf16.msra.mxu0 0
      %764 = vmatprep.subr.bf16.mxu0 0
      %765 = vmatpush1.bf16.msra.mxu0 0
      %766 = vmatprep.subr.bf16.mxu0 0
      %767 = vmatpush1.bf16.msra.mxu0 0
      %768 = vmatprep.mubr.bf16.mxu0 0
      %769 = vmatmul.mubr.bf16.gmra.mrb[0].mxu0 %v731
      %v770 = vpop.f32.mrb[0].mxu0
      %v771 = vadd.f32 0.0, %v770
      %v772 = vpop.f32.mrb[0].mxu0
      %v773 = vpop.f32.mrb[0].mxu0
      %v774 = vpop.f32.mrb[0].mxu0
      %775 = vdwg.mxu0
      %777 = vrot.lane.b32.xlu0 %v771, 16
      %v778 = vpop.permute.xlu0 %777
      %v780 = vadd.f32 %v726, %v778
      %781 = vst.msk [vmem:[#allocation4] sm:$0xff] %vm723, %v780
      %782 = vst.msk [vmem:[#allocation2] sm:$0xff] %vm723, %v705
      %783 = vrot.lane.b32.xlu0 %v512, 104
      %v784 = vpop.permute.xlu0 %783
      %785 = vrot.lane.b32.xlu0 %v517, 104
      %v786 = vpop.permute.xlu0 %785
      %v788 = vsel %vm387, %v784, 0
      %v791 = vsel %vm387, %v786, 0
      %793 = vmatprep.subr.bf16.mxu0 0
      %794 = vmatpush1.bf16.xpose.msra.mxu0 %v791
      %795 = vmatprep.subr.bf16.mxu0 0
      %796 = vmatpush1.bf16.xpose.msra.mxu0 0
      %797 = vmatprep.subr.bf16.mxu0 0
      %798 = vmatpush1.bf16.xpose.msra.mxu0 0
      %799 = vmatprep.subr.bf16.mxu0 0
      %800 = vmatpush1.bf16.xpose.msra.mxu0 0
      %801 = vmatprep.subr.bf16.mxu0 0
      %802 = vmatpush1.bf16.xpose.msra.mxu0 0
      %803 = vmatprep.subr.bf16.mxu0 0
      %804 = vmatpush1.bf16.xpose.msra.mxu0 0
      %805 = vmatprep.subr.bf16.mxu0 0
      %806 = vmatpush1.bf16.xpose.msra.mxu0 0
      %807 = vmatprep.subr.bf16.mxu0 0
      %808 = vmatpush1.bf16.xpose.msra.mxu0 0
      %809 = vmatprep.subr.bf16.mxu0 0
      %810 = vmatpush1.bf16.xpose.msra.mxu0 0
      %811 = vmatprep.subr.bf16.mxu0 0
      %812 = vmatpush1.bf16.xpose.msra.mxu0 0
      %813 = vmatprep.subr.bf16.mxu0 0
      %814 = vmatpush1.bf16.xpose.msra.mxu0 0
      %815 = vmatprep.subr.bf16.mxu0 0
      %816 = vmatpush1.bf16.xpose.msra.mxu0 0
      %817 = vmatprep.subr.bf16.mxu0 0
      %818 = vmatpush1.bf16.xpose.msra.mxu0 0
      %819 = vmatprep.subr.bf16.mxu0 0
      %820 = vmatpush1.bf16.xpose.msra.mxu0 0
      %821 = vmatprep.subr.bf16.mxu0 0
      %822 = vmatpush1.bf16.xpose.msra.mxu0 0
      %823 = vmatprep.subr.bf16.mxu0 0
      %824 = vmatpush1.bf16.xpose.msra.mxu0 0
      %825 = vmatprep.mubr.bf16.mxu0 0
      %826 = vmatmul.mubr.bf16.gmra.mrb[0].mxu0 %v788
      %v827 = vpop.f32.mrb[0].mxu0
      %v828 = vadd.f32 %v386, %v827
      %v829 = vpop.f32.mrb[0].mxu0
      %v830 = vpop.f32.mrb[0].mxu0
      %v831 = vpop.f32.mrb[0].mxu0
      %832 = vdwg.mxu0
      %v833 = vld [vmem:[#allocation2] sm:$0xff]
      %v834 = vsel %vm387, %v828, -inf
      %835 = vmax.xlane.f32.xlu0 %v834
      %v836 = vpop.xlane.xlu0 %835
      %v837 = vmax.f32 %v833, %v836
      %v838 = vsub.f32 %v833, %v837
      %v839 = vmul.f32 %v838, 1.442695
      %v840 = vpow.pop %v839
      %842 = vset.pattern.permute.xlu0 24
      %843 = vperm.xlu0 %842, %v837
      %v844 = vpop.permute.xlu0 %843
      %v846 = vsub.f32 %v828, %v844
      %v847 = vmul.f32 %v846, 1.442695
      %v848 = vpow.pop %v847
      %v849 = vld [vmem:[#allocation3] sm:$0xff]
      %v850 = vmul.f32 %v840, %v849
      %v851 = vsel %vm387, %v848, 0.0
      %852 = vadd.xlane.f32.xlu0 %v851
      %v853 = vpop.xlane.xlu0 %852
      %v854 = vadd.f32 %v850, %v853
      %vm855 = vcmask 261312
      %856 = vst.msk [vmem:[#allocation3] sm:$0xff] %vm855, %v854
      %v857 = vld [vmem:[#allocation4] sm:$0xff]
      %v858 = vmul.f32 %v840, %v857
      %v859 = vpack.c.bf16 %v848, %v848
      %860 = vrot.lane.b32.xlu0 %v595, 104
      %v861 = vpop.permute.xlu0 %860
      %v863 = vsel %vm387, %v859, 0
      %v866 = vsel %vm463, %v861, 0
      %868 = vmatprep.subr.bf16.mxu0 0
      %869 = vmatpush1.bf16.msra.mxu0 %v866
      %870 = vmatprep.subr.bf16.mxu0 0
      %871 = vmatpush1.bf16.msra.mxu0 0
      %872 = vmatprep.subr.bf16.mxu0 0
      %873 = vmatpush1.bf16.msra.mxu0 0
      %874 = vmatprep.subr.bf16.mxu0 0
      %875 = vmatpush1.bf16.msra.mxu0 0
      %876 = vmatprep.subr.bf16.mxu0 0
      %877 = vmatpush1.bf16.msra.mxu0 0
      %878 = vmatprep.subr.bf16.mxu0 0
      %879 = vmatpush1.bf16.msra.mxu0 0
      %880 = vmatprep.subr.bf16.mxu0 0
      %881 = vmatpush1.bf16.msra.mxu0 0
      %882 = vmatprep.subr.bf16.mxu0 0
      %883 = vmatpush1.bf16.msra.mxu0 0
      %884 = vmatprep.subr.bf16.mxu0 0
      %885 = vmatpush1.bf16.msra.mxu0 0
      %886 = vmatprep.subr.bf16.mxu0 0
      %887 = vmatpush1.bf16.msra.mxu0 0
      %888 = vmatprep.subr.bf16.mxu0 0
      %889 = vmatpush1.bf16.msra.mxu0 0
      %890 = vmatprep.subr.bf16.mxu0 0
      %891 = vmatpush1.bf16.msra.mxu0 0
      %892 = vmatprep.subr.bf16.mxu0 0
      %893 = vmatpush1.bf16.msra.mxu0 0
      %894 = vmatprep.subr.bf16.mxu0 0
      %895 = vmatpush1.bf16.msra.mxu0 0
      %896 = vmatprep.subr.bf16.mxu0 0
      %897 = vmatpush1.bf16.msra.mxu0 0
      %898 = vmatprep.subr.bf16.mxu0 0
      %899 = vmatpush1.bf16.msra.mxu0 0
      %900 = vmatprep.mubr.bf16.mxu0 0
      %901 = vmatmul.mubr.bf16.gmra.mrb[0].mxu0 %v863
      %v902 = vpop.f32.mrb[0].mxu0
      %v903 = vadd.f32 0.0, %v902
      %v904 = vpop.f32.mrb[0].mxu0
      %v905 = vpop.f32.mrb[0].mxu0
      %v906 = vpop.f32.mrb[0].mxu0
      %907 = vdwg.mxu0
      %909 = vrot.lane.b32.xlu0 %v903, 24
      %v910 = vpop.permute.xlu0 %909
      %v912 = vadd.f32 %v858, %v910
      %913 = vst.msk [vmem:[#allocation4] sm:$0xff] %vm855, %v912
      %914 = vst.msk [vmem:[#allocation2] sm:$0xff] %vm855, %v837
      // Predicated region
      $region41: #{whisper_decoder_layer.9} parent=35 // pred_check
        %p915 = pneg %p375
      $region42: #{whisper_decoder_layer.9} parent=35 // pred_check_branch
        %917 = sbr.rel (%p915) target = $region44
      $region43: #{whisper_decoder_layer.9} parent=35 // pred_region
        %v918 = vld [vmem:[#allocation4] sm:$0xff]
        %v919 = vld [vmem:[#allocation3] sm:$0xff]
        %v920 = vrcp.pop %v919
        %v921 = vmul.f32 %v918, %v920
        %v922 = vpack.c.bf16 %v921, %v921
        %vm923 = vcmask 257024
        %924 = vst.msk [vmem:[%s373] sm:$0xf] %vm923, %v922
      $region44: #{whisper_decoder_layer.9} parent=35 // pred_fallthru
        _
      %p925 = scmp.lt.s32.totalorder %s21, 1
      %s926 = scalar_select %p925, %s21, 1
      %p927 = scmp.lt.s32.totalorder %s23, 0
      %s928 = scalar_select %p927, %s23, 0
      %p929 = scmp.lt.s32.totalorder %s22, 0
      %s930 = scalar_select %p929, %s22, 0
      %s931 = sadd.s32 %s930, %s928
      %s932 = sadd.s32 %s931, %s926
      %s933 = smul.addr %s932, 4
      %s934 = scalar_lea.vmem %s4, %s933
      // Predicated region
      $region45: #{whisper_decoder_layer.9} parent=35 // pred_check
        %p935 = pneg %p183
      $region46: #{whisper_decoder_layer.9} parent=35 // pred_check_branch
        %937 = sbr.rel (%p935) target = $region48
      $region47: #{whisper_decoder_layer.9} parent=35 // pred_region
        _
      $region48: #{whisper_decoder_layer.9} parent=35 // pred_fallthru
        _
    $region36: #{whisper_decoder_layer.9} parent=5 // pred_fallthru
      _
    %p938 = scmp.le.s32.totalorder 2, %s10
    // Predicated region
    $region49: #{whisper_decoder_layer.9} parent=5 // pred_check
      %p939 = pneg %p938
    $region50: #{whisper_decoder_layer.9} parent=5 // pred_check_branch
      %941 = sbr.rel (%p939) target = $region52
    $region51: #{whisper_decoder_layer.9} parent=5 // pred_region
      %s942 = ssub.s32 %s10, 2
      // Predicated region
      $region53: #{whisper_decoder_layer.9} parent=51 // pred_check
        %p943 = pneg %p189
      $region54: #{whisper_decoder_layer.9} parent=51 // pred_check_branch
        %945 = sbr.rel (%p943) target = $region56
      $region55: #{whisper_decoder_layer.9} parent=51 // pred_region
        %p946 = scmp.lt.s32.totalorder %s25, 1
        %s947 = scalar_select %p946, %s25, 1
        %p948 = scmp.lt.s32.totalorder %s27, 0
        %s949 = scalar_select %p948, %s27, 0
        %p950 = scmp.lt.s32.totalorder %s26, 0
        %s951 = scalar_select %p950, %s26, 0
        %s952 = sadd.s32 %s951, %s949
        %s953 = sadd.s32 %s952, %s947
        %s954 = smul.addr %s953, 4
        %s955 = scalar_lea.vmem %s4, %s954
      $region56: #{whisper_decoder_layer.9} parent=51 // pred_fallthru
        _
    $region52: #{whisper_decoder_layer.9} parent=5 // pred_fallthru
      _
  $region6: #{whisper_decoder_layer.9} parent=0 // loop_footer
    %s14 = sadd.s32 1, %s10
  $region7: #{whisper_decoder_layer.9} parent=0 // loop_footer_branch
    %9 = sbr.rel target = $region3
  $region8: #{whisper_decoder_layer.9} parent=0 // loop_exit
    _

// kernel: whisper_decoder_layer.11
$region0: #{whisper_decoder_layer.11}
  #allocation0 [shape = 'u32[]', space=smem, size = 0x4, offset = 0x4, fixed_abs, tag = 'smem constant byte address 0x4 - core index']
  #allocation1 [shape = 'u32[144,128]{1,0:T(1,128)}', space=vmem, size = 0x12000, scoped, tag = 'internal scratch']
  #allocation2 [shape = 'bf16[16,32]{1,0:T(16,128)(2,1)}', space=vmem, size = 0x1000, scoped, tag = 'scratch operand']
  %s0 = inlined_call_operand.vmem [shape: f32[16,32], index: 0, kind: input, shape index: {}]
  %s1 = inlined_call_operand.vmem [shape: f32[1,32], index: 1, kind: input, shape index: {}]
  %s2 = inlined_call_operand.vmem [shape: f32[1,32], index: 2, kind: input, shape index: {}]
  %s3 = inlined_call_operand.vmem [shape: bf16[32,32], index: 3, kind: input, shape index: {}]
  %s4 = inlined_call_operand.vmem [shape: f32[1,32], index: 4, kind: input, shape index: {}]
  %s5 = inlined_call_operand.vmem [shape: bf16[16,32], index: 5, kind: output, shape index: {}]
  %s6 = sld [smem:[#allocation0]]
  $region34: #{whisper_decoder_layer.11} parent=0
    _
  %s8 = ssub.s32 1, %s6
  %s9 = scalar_select 0, %s8, %s6
  // Predicated region
  $region2: #{whisper_decoder_layer.11} parent=0 // pred_check
    _
  $region3: #{whisper_decoder_layer.11} parent=0 // pred_check_branch
    %11 = sbr.rel (0) target = $region5
  $region4: #{whisper_decoder_layer.11} parent=0 // pred_region
    _
  $region5: #{whisper_decoder_layer.11} parent=0 // pred_fallthru
    _
  // Predicated region
  $region6: #{whisper_decoder_layer.11} parent=0 // pred_check
    _
  $region7: #{whisper_decoder_layer.11} parent=0 // pred_check_branch
    %13 = sbr.rel (0) target = $region9
  $region8: #{whisper_decoder_layer.11} parent=0 // pred_region
    _
  $region9: #{whisper_decoder_layer.11} parent=0 // pred_fallthru
    _
  // Predicated region
  $region10: #{whisper_decoder_layer.11} parent=0 // pred_check
    _
  $region11: #{whisper_decoder_layer.11} parent=0 // pred_check_branch
    %15 = sbr.rel (0) target = $region13
  $region12: #{whisper_decoder_layer.11} parent=0 // pred_region
    _
  $region13: #{whisper_decoder_layer.11} parent=0 // pred_fallthru
    _
  // Predicated region
  $region14: #{whisper_decoder_layer.11} parent=0 // pred_check
    _
  $region15: #{whisper_decoder_layer.11} parent=0 // pred_check_branch
    %17 = sbr.rel (0) target = $region17
  $region16: #{whisper_decoder_layer.11} parent=0 // pred_region
    _
  $region17: #{whisper_decoder_layer.11} parent=0 // pred_fallthru
    _
  // Predicated region
  $region18: #{whisper_decoder_layer.11} parent=0 // pred_check
    _
  $region19: #{whisper_decoder_layer.11} parent=0 // pred_check_branch
    %19 = sbr.rel (0) target = $region21
  $region20: #{whisper_decoder_layer.11} parent=0 // pred_region
    _
  $region21: #{whisper_decoder_layer.11} parent=0 // pred_fallthru
    _
  %p21 = scmp.eq.s32.totalorder 0, 0
  // Predicated region
  $region22: #{whisper_decoder_layer.11} parent=0 // pred_check
    %p22 = pneg %p21
  $region23: #{whisper_decoder_layer.11} parent=0 // pred_check_branch
    %24 = sbr.rel (%p22) target = $region25
  $region24: #{whisper_decoder_layer.11} parent=0 // pred_region
    %v25 = vld [vmem:[%s0] sm:$0xff]
    %v26 = vld [vmem:[%s0 + $0x8] sm:$0xff]
    %v27 = vld [vmem:[%s1] sm:$0x1]
    %v28 = vld [vmem:[%s2] sm:$0x1]
    %vm29 = vcmask 261120
    %v30 = vsel %vm29, %v25, 0.0
    %31 = vadd.xlane.f32.xlu0 %v30
    %v32 = vpop.xlane.xlu0 %31
    %v33 = vsel %vm29, %v26, 0.0
    %34 = vadd.xlane.f32.xlu0 %v33
    %v35 = vpop.xlane.xlu0 %34
    %v36 = vrcp.pop 32.0
    %v37 = vmul.f32 %v32, %v36
    %v38 = vmul.f32 %v35, %v36
    %v39 = vsub.f32 %v25, %v37
    %v40 = vsub.f32 %v26, %v38
    %v41 = vmul.f32 %v39, %v39
    %v42 = vmul.f32 %v40, %v40
    %v43 = vsel %vm29, %v41, 0.0
    %44 = vadd.xlane.f32.xlu0 %v43
    %v45 = vpop.xlane.xlu0 %44
    %v46 = vsel %vm29, %v42, 0.0
    %47 = vadd.xlane.f32.xlu0 %v46
    %v48 = vpop.xlane.xlu0 %47
    %v49 = vmul.f32 %v45, %v36
    %v50 = vmul.f32 %v48, %v36
    %v51 = vadd.f32 %v49, 1e-05
    %v52 = vadd.f32 %v50, 1e-05
    %v53 = vrsqrt.pop %v51
    %v54 = vrsqrt.pop %v52
    %v55 = vmul.f32 %v39, %v53
    %v56 = vmul.f32 %v40, %v54
    %v58 = vlaneseq
    %v59 = vshrl.u32 %v58, 7
    %v60 = vsub.s32 0, %v59
    %v61 = vrot.slane %v27, %v60
    %v63 = vmul.f32 %v55, %v61
    %v64 = vmul.f32 %v56, %v61
    %v66 = vlaneseq
    %v67 = vshrl.u32 %v66, 7
    %v68 = vsub.s32 0, %v67
    %v69 = vrot.slane %v28, %v68
    %v71 = vadd.f32 %v63, %v69
    %v72 = vadd.f32 %v64, %v69
    %v73 = vpack.c.bf16 %v72, %v71
    %74 = vst.msk [vmem:[#allocation2] sm:$0xff] %vm29, %v73
  $region25: #{whisper_decoder_layer.11} parent=0 // pred_fallthru
    _
  %v75 = vld [vmem:[#allocation2] sm:$0xff]
  %v76 = vld [vmem:[%s3] sm:$0xf]
  %v77 = vld [vmem:[%s3 + $0x4] sm:$0xf]
  %v78 = vld [vmem:[%s3 + $0x8] sm:$0xf]
  %v79 = vld [vmem:[%s3 + $0xc] sm:$0xf]
  %v80 = vld [vmem:[%s4] sm:$0x1]
  %v82 = vlaneseq
  %v83 = vshrl.u32 %v82, 7
  %v84 = vsub.s32 0, %v83
  %v85 = vrot.slane %v80, %v84
  %v91 = vunpack.c.l.b16 %v76
  %v92 = vunpack.c.l.b16 %v77
  %v93 = vunpack.c.l.b16 %v78
  %v94 = vunpack.c.l.b16 %v79
  %v95 = vpack.c.b16 %v92, %v91
  %v96 = vpack.c.b16 %v94, %v93
  %vm99 = vcmask 261120
  %v101 = vsel %vm99, %v75, 0
  %103 = vmatprep.subr.bf16.mxu0 0
  %104 = vmatpush1.bf16.msra.mxu0 %v95
  %105 = vmatprep.subr.bf16.mxu0 0
  %106 = vmatpush1.bf16.msra.mxu0 %v96
  %107 = vmatprep.subr.bf16.mxu0 0
  %108 = vmatpush1.bf16.msra.mxu0 0
  %109 = vmatprep.subr.bf16.mxu0 0
  %110 = vmatpush1.bf16.msra.mxu0 0
  %111 = vmatprep.subr.bf16.mxu0 0
  %112 = vmatpush1.bf16.msra.mxu0 0
  %113 = vmatprep.subr.bf16.mxu0 0
  %114 = vmatpush1.bf16.msra.mxu0 0
  %115 = vmatprep.subr.bf16.mxu0 0
  %116 = vmatpush1.bf16.msra.mxu0 0
  %117 = vmatprep.subr.bf16.mxu0 0
  %118 = vmatpush1.bf16.msra.mxu0 0
  %119 = vmatprep.subr.bf16.mxu0 0
  %120 = vmatpush1.bf16.msra.mxu0 0
  %121 = vmatprep.subr.bf16.mxu0 0
  %122 = vmatpush1.bf16.msra.mxu0 0
  %123 = vmatprep.subr.bf16.mxu0 0
  %124 = vmatpush1.bf16.msra.mxu0 0
  %125 = vmatprep.subr.bf16.mxu0 0
  %126 = vmatpush1.bf16.msra.mxu0 0
  %127 = vmatprep.subr.bf16.mxu0 0
  %128 = vmatpush1.bf16.msra.mxu0 0
  %129 = vmatprep.subr.bf16.mxu0 0
  %130 = vmatpush1.bf16.msra.mxu0 0
  %131 = vmatprep.subr.bf16.mxu0 0
  %132 = vmatpush1.bf16.msra.mxu0 0
  %133 = vmatprep.subr.bf16.mxu0 0
  %134 = vmatpush1.bf16.msra.mxu0 0
  %135 = vmatprep.mubr.bf16.mxu0 0
  %136 = vmatmul.mubr.bf16.gmra.mrb[0].mxu0 %v101
  %v137 = vpop.f32.mrb[0].mxu0
  %v138 = vadd.f32 %v85, %v137
  %v139 = vpop.f32.mrb[0].mxu0
  %v140 = vpop.f32.mrb[0].mxu0
  %v141 = vadd.f32 %v85, %v140
  %v142 = vpop.f32.mrb[0].mxu0
  %143 = vdwg.mxu0
  %v144 = vpack.c.bf16 %v141, %v138
  %v146 = vunpack.c.l.b16 %v144
  %v147 = vunpack.c.h.b16 %v144
  %v148 = vpack.c.b16 %v146, %v146
  %v149 = vpack.c.b16 %v147, %v147
  %vm152 = vcmask 257024
  %153 = vst.msk [vmem:[%s5] sm:$0xf] %vm152, %v148
  %154 = vst.msk [vmem:[%s5 + $0x4] sm:$0xf] %vm152, %v149
  // Predicated region
  $region26: #{whisper_decoder_layer.11} parent=0 // pred_check
    _
  $region27: #{whisper_decoder_layer.11} parent=0 // pred_check_branch
    %156 = sbr.rel (0) target = $region29
  $region28: #{whisper_decoder_layer.11} parent=0 // pred_region
    _
  $region29: #{whisper_decoder_layer.11} parent=0 // pred_fallthru
    _
  // Predicated region
  $region30: #{whisper_decoder_layer.11} parent=0 // pred_check
    _
  $region31: #{whisper_decoder_layer.11} parent=0 // pred_check_branch
    %158 = sbr.rel (0) target = $region33
  $region32: #{whisper_decoder_layer.11} parent=0 // pred_region
    _
  $region33: #{whisper_decoder_layer.11} parent=0 // pred_fallthru
    _

// kernel: whisper_decoder_layer.15
$region0: #{whisper_decoder_layer.15}
  #allocation0 [shape = 'u32[]', space=smem, size = 0x4, offset = 0x4, fixed_abs, tag = 'smem constant byte address 0x4 - core index']
  #allocation1 [shape = 'u32[144,128]{1,0:T(1,128)}', space=vmem, size = 0x12000, scoped, tag = 'internal scratch']
  #allocation2 [shape = 'f32[16,32]{1,0:T(8,128)}', space=vmem, size = 0x2000, scoped, tag = 'scratch operand']
  #allocation3 [shape = 'bf16[16,32]{1,0:T(16,128)(2,1)}', space=vmem, size = 0x1000, scoped, tag = 'scratch operand']
  %s0 = inlined_call_operand.vmem [shape: f32[16,32], index: 0, kind: input, shape index: {}, may-alias: {0,1}]
  %s1 = inlined_call_operand.vmem [shape: f32[16,32], index: 1, kind: input, shape index: {}, may-alias: {0,1}]
  %s2 = inlined_call_operand.vmem [shape: f32[1,32], index: 2, kind: input, shape index: {}]
  %s3 = inlined_call_operand.vmem [shape: f32[1,32], index: 3, kind: input, shape index: {}]
  %s4 = inlined_call_operand.vmem [shape: bf16[32,64], index: 4, kind: input, shape index: {}]
  %s5 = inlined_call_operand.vmem [shape: f32[1,64], index: 5, kind: input, shape index: {}]
  %s6 = inlined_call_operand.vmem [shape: bf16[64,32], index: 6, kind: input, shape index: {}]
  %s7 = inlined_call_operand.vmem [shape: f32[1,32], index: 7, kind: input, shape index: {}]
  %s8 = inlined_call_operand.hbm [shape: f32[16,32], index: 8, kind: output, shape index: {}]
  %s9 = sld [smem:[#allocation0]]
  $region50: #{whisper_decoder_layer.15} parent=0
    _
  %s11 = ssub.s32 1, %s9
  %s12 = scalar_select 0, %s11, %s9
  $region1: #{whisper_decoder_layer.15} parent=0
    #allocation4 [shape = 'u8[8192]{0}', space=vmem, size = 0x2000, scoped, tag = 'output window, operand 0, single buffered']
    #allocation5 [shape = 's32[1]{0}', space=sflag, size = 0x4, scoped, tag = 'scoped memory for whisper_decoder_layer.15']
    %13 = vsyncpa [#allocation5], 0
    // Predicated region
    $region2: #{whisper_decoder_layer.15} parent=1 // pred_check
      _
    $region3: #{whisper_decoder_layer.15} parent=1 // pred_check_branch
      %15 = sbr.rel (0) target = $region5
    $region4: #{whisper_decoder_layer.15} parent=1 // pred_region
      _
    $region5: #{whisper_decoder_layer.15} parent=1 // pred_fallthru
      _
    // Predicated region
    $region6: #{whisper_decoder_layer.15} parent=1 // pred_check
      _
    $region7: #{whisper_decoder_layer.15} parent=1 // pred_check_branch
      %17 = sbr.rel (0) target = $region9
    $region8: #{whisper_decoder_layer.15} parent=1 // pred_region
      _
    $region9: #{whisper_decoder_layer.15} parent=1 // pred_fallthru
      _
    // Predicated region
    $region10: #{whisper_decoder_layer.15} parent=1 // pred_check
      _
    $region11: #{whisper_decoder_layer.15} parent=1 // pred_check_branch
      %19 = sbr.rel (0) target = $region13
    $region12: #{whisper_decoder_layer.15} parent=1 // pred_region
      _
    $region13: #{whisper_decoder_layer.15} parent=1 // pred_fallthru
      _
    // Predicated region
    $region14: #{whisper_decoder_layer.15} parent=1 // pred_check
      _
    $region15: #{whisper_decoder_layer.15} parent=1 // pred_check_branch
      %21 = sbr.rel (0) target = $region17
    $region16: #{whisper_decoder_layer.15} parent=1 // pred_region
      _
    $region17: #{whisper_decoder_layer.15} parent=1 // pred_fallthru
      _
    // Predicated region
    $region18: #{whisper_decoder_layer.15} parent=1 // pred_check
      _
    $region19: #{whisper_decoder_layer.15} parent=1 // pred_check_branch
      %23 = sbr.rel (0) target = $region21
    $region20: #{whisper_decoder_layer.15} parent=1 // pred_region
      _
    $region21: #{whisper_decoder_layer.15} parent=1 // pred_fallthru
      _
    // Predicated region
    $region22: #{whisper_decoder_layer.15} parent=1 // pred_check
      _
    $region23: #{whisper_decoder_layer.15} parent=1 // pred_check_branch
      %25 = sbr.rel (0) target = $region25
    $region24: #{whisper_decoder_layer.15} parent=1 // pred_region
      _
    $region25: #{whisper_decoder_layer.15} parent=1 // pred_fallthru
      _
    // Predicated region
    $region26: #{whisper_decoder_layer.15} parent=1 // pred_check
      _
    $region27: #{whisper_decoder_layer.15} parent=1 // pred_check_branch
      %27 = sbr.rel (0) target = $region29
    $region28: #{whisper_decoder_layer.15} parent=1 // pred_region
      _
    $region29: #{whisper_decoder_layer.15} parent=1 // pred_fallthru
      _
    // Predicated region
    $region30: #{whisper_decoder_layer.15} parent=1 // pred_check
      _
    $region31: #{whisper_decoder_layer.15} parent=1 // pred_check_branch
      %29 = sbr.rel (0) target = $region33
    $region32: #{whisper_decoder_layer.15} parent=1 // pred_region
      _
    $region33: #{whisper_decoder_layer.15} parent=1 // pred_fallthru
      _
    %p31 = scmp.eq.s32.totalorder 0, 0
    // Predicated region
    $region34: #{whisper_decoder_layer.15} parent=1 // pred_check
      %p32 = pneg %p31
    $region35: #{whisper_decoder_layer.15} parent=1 // pred_check_branch
      %34 = sbr.rel (%p32) target = $region37
    $region36: #{whisper_decoder_layer.15} parent=1 // pred_region
      %v35 = vld [vmem:[%s0] sm:$0xff]
      %v36 = vld [vmem:[%s0 + $0x8] sm:$0xff]
      %v37 = vld [vmem:[%s2] sm:$0x1]
      %v38 = vld [vmem:[%s3] sm:$0x1]
      %vm39 = vcmask 261120
      %v40 = vsel %vm39, %v35, 0.0
      %41 = vadd.xlane.f32.xlu0 %v40
      %v42 = vpop.xlane.xlu0 %41
      %v43 = vsel %vm39, %v36, 0.0
      %44 = vadd.xlane.f32.xlu0 %v43
      %v45 = vpop.xlane.xlu0 %44
      %v46 = vrcp.pop 32.0
      %v47 = vmul.f32 %v42, %v46
      %v48 = vmul.f32 %v45, %v46
      %v49 = vsub.f32 %v35, %v47
      %v50 = vsub.f32 %v36, %v48
      %v51 = vmul.f32 %v49, %v49
      %v52 = vmul.f32 %v50, %v50
      %v53 = vsel %vm39, %v51, 0.0
      %54 = vadd.xlane.f32.xlu0 %v53
      %v55 = vpop.xlane.xlu0 %54
      %v56 = vsel %vm39, %v52, 0.0
      %57 = vadd.xlane.f32.xlu0 %v56
      %v58 = vpop.xlane.xlu0 %57
      %v59 = vmul.f32 %v55, %v46
      %v60 = vmul.f32 %v58, %v46
      %v61 = vadd.f32 %v59, 1e-05
      %v62 = vadd.f32 %v60, 1e-05
      %v63 = vrsqrt.pop %v61
      %v64 = vrsqrt.pop %v62
      %v65 = vmul.f32 %v49, %v63
      %v66 = vmul.f32 %v50, %v64
      %v68 = vlaneseq
      %v69 = vshrl.u32 %v68, 7
      %v70 = vsub.s32 0, %v69
      %v71 = vrot.slane %v37, %v70
      %v73 = vmul.f32 %v65, %v71
      %v74 = vmul.f32 %v66, %v71
      %v76 = vlaneseq
      %v77 = vshrl.u32 %v76, 7
      %v78 = vsub.s32 0, %v77
      %v79 = vrot.slane %v38, %v78
      %v81 = vadd.f32 %v73, %v79
      %v82 = vadd.f32 %v74, %v79
      %v83 = vpack.c.bf16 %v82, %v81
      %84 = vst.msk [vmem:[#allocation3] sm:$0xff] %vm39, %v83
      %85 = vst.msk [vmem:[#allocation2] sm:$0xff] %vm39, 0.0
      %86 = vst.msk [vmem:[#allocation2 + $0x8] sm:$0xff] %vm39, 0.0
    $region37: #{whisper_decoder_layer.15} parent=1 // pred_fallthru
      _
    %v87 = vld [vmem:[#allocation3] sm:$0xff]
    %v88 = vld [vmem:[%s4] sm:$0xf]
    %v89 = vld [vmem:[%s4 + $0x4] sm:$0xf]
    %v90 = vld [vmem:[%s4 + $0x8] sm:$0xf]
    %v91 = vld [vmem:[%s4 + $0xc] sm:$0xf]
    %v92 = vld [vmem:[%s5] sm:$0x1]
    %v94 = vlaneseq
    %v95 = vshrl.u32 %v94, 7
    %v96 = vsub.s32 0, %v95
    %v97 = vrot.slane %v92, %v96
    %v103 = vunpack.c.l.b16 %v88
    %v104 = vunpack.c.l.b16 %v89
    %v105 = vunpack.c.l.b16 %v90
    %v106 = vunpack.c.l.b16 %v91
    %v107 = vpack.c.b16 %v104, %v103
    %v108 = vpack.c.b16 %v106, %v105
    %vm111 = vcmask 261120
    %v113 = vsel %vm111, %v87, 0
    %115 = vmatprep.subr.bf16.mxu0 0
    %116 = vmatpush1.bf16.msra.mxu0 %v107
    %117 = vmatprep.subr.bf16.mxu0 0
    %118 = vmatpush1.bf16.msra.mxu0 %v108
    %119 = vmatprep.subr.bf16.mxu0 0
    %120 = vmatpush1.bf16.msra.mxu0 0
    %121 = vmatprep.subr.bf16.mxu0 0
    %122 = vmatpush1.bf16.msra.mxu0 0
    %123 = vmatprep.subr.bf16.mxu0 0
    %124 = vmatpush1.bf16.msra.mxu0 0
    %125 = vmatprep.subr.bf16.mxu0 0
    %126 = vmatpush1.bf16.msra.mxu0 0
    %127 = vmatprep.subr.bf16.mxu0 0
    %128 = vmatpush1.bf16.msra.mxu0 0
    %129 = vmatprep.subr.bf16.mxu0 0
    %130 = vmatpush1.bf16.msra.mxu0 0
    %131 = vmatprep.subr.bf16.mxu0 0
    %132 = vmatpush1.bf16.msra.mxu0 0
    %133 = vmatprep.subr.bf16.mxu0 0
    %134 = vmatpush1.bf16.msra.mxu0 0
    %135 = vmatprep.subr.bf16.mxu0 0
    %136 = vmatpush1.bf16.msra.mxu0 0
    %137 = vmatprep.subr.bf16.mxu0 0
    %138 = vmatpush1.bf16.msra.mxu0 0
    %139 = vmatprep.subr.bf16.mxu0 0
    %140 = vmatpush1.bf16.msra.mxu0 0
    %141 = vmatprep.subr.bf16.mxu0 0
    %142 = vmatpush1.bf16.msra.mxu0 0
    %143 = vmatprep.subr.bf16.mxu0 0
    %144 = vmatpush1.bf16.msra.mxu0 0
    %145 = vmatprep.subr.bf16.mxu0 0
    %146 = vmatpush1.bf16.msra.mxu0 0
    %147 = vmatprep.mubr.bf16.mxu0 0
    %148 = vmatmul.mubr.bf16.gmra.mrb[0].mxu0 %v113
    %v149 = vpop.f32.mrb[0].mxu0
    %v150 = vadd.f32 %v97, %v149
    %v151 = vpop.f32.mrb[0].mxu0
    %v152 = vpop.f32.mrb[0].mxu0
    %v153 = vadd.f32 %v97, %v152
    %v154 = vpop.f32.mrb[0].mxu0
    %155 = vdwg.mxu0
    %v156 = vmul.f32 %v150, %v150
    %v157 = vmul.f32 %v153, %v153
    %v158 = vmul.f32 %v150, %v156
    %v159 = vmul.f32 %v153, %v157
    %v160 = vmul.f32 %v158, 0.044715
    %v161 = vmul.f32 %v159, 0.044715
    %v162 = vadd.f32 %v150, %v160
    %v163 = vadd.f32 %v153, %v161
    %v164 = vmul.f32 %v162, 0.7978846
    %v165 = vmul.f32 %v163, 0.7978846
    %v166 = vtanh.pop %v164
    %v167 = vtanh.pop %v165
    %v168 = vadd.f32 %v166, 1.0
    %v169 = vadd.f32 %v167, 1.0
    %v170 = vmul.f32 %v168, 0.5
    %v171 = vmul.f32 %v169, 0.5
    %v172 = vmul.f32 %v150, %v170
    %v173 = vmul.f32 %v153, %v171
    %v174 = vpack.c.bf16 %v173, %v172
    %v175 = vld [vmem:[#allocation2] sm:$0xff]
    %v176 = vld [vmem:[#allocation2 + $0x8] sm:$0xff]
    %v177 = vld [vmem:[%s6] sm:$0xf]
    %v178 = vld [vmem:[%s6 + $0x4] sm:$0xf]
    %v179 = vld [vmem:[%s6 + $0x8] sm:$0xf]
    %v180 = vld [vmem:[%s6 + $0xc] sm:$0xf]
    %v181 = vld [vmem:[%s6 + $0x10] sm:$0xf]
    %v182 = vld [vmem:[%s6 + $0x14] sm:$0xf]
    %v183 = vld [vmem:[%s6 + $0x18] sm:$0xf]
    %v184 = vld [vmem:[%s6 + $0x1c] sm:$0xf]
    %v193 = vunpack.c.l.b16 %v177
    %v194 = vunpack.c.l.b16 %v178
    %v195 = vunpack.c.l.b16 %v179
    %v196 = vunpack.c.l.b16 %v180
    %v197 = vunpack.c.l.b16 %v181
    %v198 = vunpack.c.l.b16 %v182
    %v199 = vunpack.c.l.b16 %v183
    %v200 = vunpack.c.l.b16 %v184
    %v201 = vpack.c.b16 %v194, %v193
    %v202 = vpack.c.b16 %v196, %v195
    %v203 = vpack.c.b16 %v198, %v197
    %v204 = vpack.c.b16 %v200, %v199
    %vm209 = vcmask 523264
    %v211 = vsel %vm209, %v174, 0
    %213 = vmatprep.subr.bf16.mxu0 0
    %214 = vmatpush1.bf16.msra.mxu0 %v201
    %215 = vmatprep.subr.bf16.mxu0 0
    %216 = vmatpush1.bf16.msra.mxu0 %v202
    %217 = vmatprep.subr.bf16.mxu0 0
    %218 = vmatpush1.bf16.msra.mxu0 %v203
    %219 = vmatprep.subr.bf16.mxu0 0
    %220 = vmatpush1.bf16.msra.mxu0 %v204
    %221 = vmatprep.subr.bf16.mxu0 0
    %222 = vmatpush1.bf16.msra.mxu0 0
    %223 = vmatprep.subr.bf16.mxu0 0
    %224 = vmatpush1.bf16.msra.mxu0 0
    %225 = vmatprep.subr.bf16.mxu0 0
    %226 = vmatpush1.bf16.msra.mxu0 0
    %227 = vmatprep.subr.bf16.mxu0 0
    %228 = vmatpush1.bf16.msra.mxu0 0
    %229 = vmatprep.subr.bf16.mxu0 0
    %230 = vmatpush1.bf16.msra.mxu0 0
    %231 = vmatprep.subr.bf16.mxu0 0
    %232 = vmatpush1.bf16.msra.mxu0 0
    %233 = vmatprep.subr.bf16.mxu0 0
    %234 = vmatpush1.bf16.msra.mxu0 0
    %235 = vmatprep.subr.bf16.mxu0 0
    %236 = vmatpush1.bf16.msra.mxu0 0
    %237 = vmatprep.subr.bf16.mxu0 0
    %238 = vmatpush1.bf16.msra.mxu0 0
    %239 = vmatprep.subr.bf16.mxu0 0
    %240 = vmatpush1.bf16.msra.mxu0 0
    %241 = vmatprep.subr.bf16.mxu0 0
    %242 = vmatpush1.bf16.msra.mxu0 0
    %243 = vmatprep.subr.bf16.mxu0 0
    %244 = vmatpush1.bf16.msra.mxu0 0
    %245 = vmatprep.mubr.bf16.mxu0 0
    %246 = vmatmul.mubr.bf16.gmra.mrb[0].mxu0 %v211
    %v247 = vpop.f32.mrb[0].mxu0
    %v248 = vadd.f32 0.0, %v247
    %v249 = vpop.f32.mrb[0].mxu0
    %v250 = vpop.f32.mrb[0].mxu0
    %v251 = vadd.f32 0.0, %v250
    %v252 = vpop.f32.mrb[0].mxu0
    %253 = vdwg.mxu0
    %v254 = vadd.f32 %v175, %v248
    %v255 = vadd.f32 %v176, %v251
    %256 = vst.msk [vmem:[#allocation2] sm:$0xff] %vm111, %v254
    %257 = vst.msk [vmem:[#allocation2 + $0x8] sm:$0xff] %vm111, %v255
    // Predicated region
    $region38: #{whisper_decoder_layer.15} parent=1 // pred_check
      %p258 = pneg %p31
    $region39: #{whisper_decoder_layer.15} parent=1 // pred_check_branch
      %260 = sbr.rel (%p258) target = $region41
    $region40: #{whisper_decoder_layer.15} parent=1 // pred_region
      %v261 = vld [vmem:[#allocation2] sm:$0xff]
      %v262 = vld [vmem:[#allocation2 + $0x8] sm:$0xff]
      %v263 = vld [vmem:[%s7] sm:$0x1]
      %v265 = vlaneseq
      %v266 = vshrl.u32 %v265, 7
      %v267 = vsub.s32 0, %v266
      %v268 = vrot.slane %v263, %v267
      %v270 = vadd.f32 %v261, %v268
      %v271 = vadd.f32 %v262, %v268
      %v272 = vld [vmem:[%s1] sm:$0xff]
      %v273 = vld [vmem:[%s1 + $0x8] sm:$0xff]
      %v274 = vadd.f32 %v270, %v272
      %v275 = vadd.f32 %v271, %v273
      %276 = vst.msk [vmem:[#allocation4] sm:$0xff] %vm111, %v274
      %277 = vst.msk [vmem:[#allocation4 + $0x8] sm:$0xff] %vm111, %v275
    $region41: #{whisper_decoder_layer.15} parent=1 // pred_fallthru
      _
    // Predicated region
    $region42: #{whisper_decoder_layer.15} parent=1 // pred_check
      _
    $region43: #{whisper_decoder_layer.15} parent=1 // pred_check_branch
      %279 = sbr.rel (0) target = $region45
    $region44: #{whisper_decoder_layer.15} parent=1 // pred_region
      %s281 = ssub.s32 256, 256
      %282 = vsyncadd [#allocation5], %s281
      %s283 = sshll.u32 [#allocation4], 4
      %s284 = int_to_ptr.vmem [resolvable:$true] %s283
      %289 = dma.vmem_to_hbm [thread:$0]  %s284, 256, %s8, [#allocation5], 128, 128, 8
    $region45: #{whisper_decoder_layer.15} parent=1 // pred_fallthru
      _
    // Predicated region
    $region46: #{whisper_decoder_layer.15} parent=1 // pred_check
      _
    $region47: #{whisper_decoder_layer.15} parent=1 // pred_check_branch
      %291 = sbr.rel (0) target = $region49
    $region48: #{whisper_decoder_layer.15} parent=1 // pred_region
      %292 = dma.done [#allocation5], 256
    $region49: #{whisper_decoder_layer.15} parent=1 // pred_fallthru
      _
    %293 = vsyncpa [#allocation5], 1

// kernel: whisper_decoder_layer.13
$region0: #{whisper_decoder_layer.13}
  #allocation0 [shape = 'u32[]', space=smem, size = 0x4, offset = 0x4, fixed_abs, tag = 'smem constant byte address 0x4 - core index']
  #allocation1 [shape = 'u32[144,128]{1,0:T(1,128)}', space=vmem, size = 0x12000, scoped, tag = 'internal scratch']
  #allocation2 [shape = 'f32[8,32]{1,0:T(8,128)}', space=vmem, size = 0x1000, scoped, tag = 'scratch operand']
  #allocation3 [shape = 'f32[8,32]{1,0:T(8,128)}', space=vmem, size = 0x1000, scoped, tag = 'scratch operand']
  #allocation4 [shape = 'f32[8,32]{1,0:T(8,128)}', space=vmem, size = 0x1000, scoped, tag = 'scratch operand']
  %s0 = inlined_call_operand.vmem [shape: bf16[2,8,32], index: 0, kind: input, shape index: {}]
  %s1 = inlined_call_operand.vmem [shape: bf16[2,8,32], index: 1, kind: input, shape index: {}]
  %s2 = inlined_call_operand.vmem [shape: bf16[2,8,32], index: 2, kind: input, shape index: {}]
  %s3 = inlined_call_operand.vmem [shape: bf16[2,8,32], index: 3, kind: output, shape index: {}]
  %s4 = sld [smem:[#allocation0]]
  $region53: #{whisper_decoder_layer.13} parent=0
    _
  %s6 = ssub.s32 1, %s4
  %s7 = scalar_select 0, %s6, %s4
  loop: start=0, step=1, limit=4
  $region2: #{whisper_decoder_layer.13} parent=0 // loop_pre_header
    _
  $region3: #{whisper_decoder_layer.13} parent=0 // loop_header
    %s9 = sphi 0, %s13
    %p10 = scmp.ge.s32.totalorder %s9, 4
    %s16 = sphi 0, %s42
    %s17 = sphi 0, %s38
    %s18 = sphi 0, %s34
    %s19 = sphi 0, %s30
    %s20 = sphi 0, %s16
    %s21 = sphi 0, %s17
    %s22 = sphi 0, %s18
    %s23 = sphi 0, %s19
    %s24 = sphi 0, %s20
    %s25 = sphi 0, %s21
    %s26 = sphi 0, %s22
    %s27 = sphi 0, %s23
    %s49 = sphi 0, %s51
    %s52 = sphi 0, %s49
    %s53 = sphi 0, %s52
    %s69 = sphi 0, %s53
    %s79 = sphi 0, %s81
    %s82 = sphi 0, %s79
    %s83 = sphi 0, %s82
    %s99 = sphi 0, %s83
    %s109 = sphi 0, %s111
    %s112 = sphi 0, %s109
    %s113 = sphi 0, %s112
    %s129 = sphi 0, %s113
    %s139 = sphi 0, %s141
    %s142 = sphi 0, %s139
    %s143 = sphi 0, %s142
    %s159 = sphi 0, %s143
  $region4: #{whisper_decoder_layer.13} parent=0 // loop_header_branch
    %12 = sbr.rel (%p10) target = $region8
  $region5: #{whisper_decoder_layer.13} parent=0 // loop_body
    %s14 = ssub.s32 %s9, 1
    %s15 = ssub.s32 %s9, 2
    %s28 = sadd.s32 1, %s19
    %p29 = scmp.ge.s32.totalorder %s28, 1
    %s30 = scalar_select %p29, 0, %s28
    %s31 = sadd.s32 1, %s18
    %s32 = scalar_select %p29, %s31, %s18
    %p33 = scmp.ge.s32.totalorder %s32, 1
    %s34 = scalar_select %p33, 0, %s32
    %s35 = sadd.s32 1, %s17
    %s36 = scalar_select %p33, %s35, %s17
    %p37 = scmp.ge.s32.totalorder %s36, 1
    %s38 = scalar_select %p37, 0, %s36
    %s39 = sadd.s32 1, %s16
    %s40 = scalar_select %p37, %s39, %s16
    %p41 = scmp.ge.s32.totalorder %s40, 2
    %s42 = scalar_select %p41, 0, %s40
    %s43 = ssub.s32 %s16, %s42
    %s44 = ssub.s32 %s18, %s34
    %s45 = sor.u32 %s43, %s44
    %s46 = ssub.s32 %s17, %s38
    %s47 = sor.u32 %s45, %s46
    %p48 = scmp.eq.s32.totalorder %s47, 0
    %s50 = sadd.s32 %s49, 1
    %s51 = scalar_select %p48, %s49, %s50
    %p54 = pneg %p48
    %p55 = scmp.eq.s32.totalorder %s9, 1
    %p56 = por %p54, %p55
    %p57 = scmp.ne.s32.totalorder %s49, %s52
    %p58 = scmp.eq.s32.totalorder %s9, 0
    %p59 = por %p57, %p58
    %p60 = scmp.ne.s32.totalorder %s49, %s52
    %p61 = scmp.eq.s32.totalorder %s14, 1
    %p62 = por %p60, %p61
    %p63 = scmp.ne.s32.totalorder %s52, %s53
    %p64 = scmp.eq.s32.totalorder %s14, 0
    %p65 = por %p63, %p64
    %p66 = scmp.ne.s32.totalorder %s52, %s53
    %p67 = scmp.eq.s32.totalorder %s15, 1
    %p68 = por %p66, %p67
    %p70 = scmp.ne.s32.totalorder %s53, %s69
    %p71 = scmp.eq.s32.totalorder %s15, 0
    %p72 = por %p70, %p71
    %s73 = ssub.s32 %s16, %s42
    %s74 = ssub.s32 %s19, %s30
    %s75 = sor.u32 %s73, %s74
    %s76 = ssub.s32 %s17, %s38
    %s77 = sor.u32 %s75, %s76
    %p78 = scmp.eq.s32.totalorder %s77, 0
    %s80 = sadd.s32 %s79, 1
    %s81 = scalar_select %p78, %s79, %s80
    %p84 = pneg %p78
    %p85 = scmp.eq.s32.totalorder %s9, 1
    %p86 = por %p84, %p85
    %p87 = scmp.ne.s32.totalorder %s79, %s82
    %p88 = scmp.eq.s32.totalorder %s9, 0
    %p89 = por %p87, %p88
    %p90 = scmp.ne.s32.totalorder %s79, %s82
    %p91 = scmp.eq.s32.totalorder %s14, 1
    %p92 = por %p90, %p91
    %p93 = scmp.ne.s32.totalorder %s82, %s83
    %p94 = scmp.eq.s32.totalorder %s14, 0
    %p95 = por %p93, %p94
    %p96 = scmp.ne.s32.totalorder %s82, %s83
    %p97 = scmp.eq.s32.totalorder %s15, 1
    %p98 = por %p96, %p97
    %p100 = scmp.ne.s32.totalorder %s83, %s99
    %p101 = scmp.eq.s32.totalorder %s15, 0
    %p102 = por %p100, %p101
    %s103 = ssub.s32 %s16, %s42
    %s104 = ssub.s32 %s19, %s30
    %s105 = sor.u32 %s103, %s104
    %s106 = ssub.s32 %s17, %s38
    %s107 = sor.u32 %s105, %s106
    %p108 = scmp.eq.s32.totalorder %s107, 0
    %s110 = sadd.s32 %s109, 1
    %s111 = scalar_select %p108, %s109, %s110
    %p114 = pneg %p108
    %p115 = scmp.eq.s32.totalorder %s9, 1
    %p116 = por %p114, %p115
    %p117 = scmp.ne.s32.totalorder %s109, %s112
    %p118 = scmp.eq.s32.totalorder %s9, 0
    %p119 = por %p117, %p118
    %p120 = scmp.ne.s32.totalorder %s109, %s112
    %p121 = scmp.eq.s32.totalorder %s14, 1
    %p122 = por %p120, %p121
    %p123 = scmp.ne.s32.totalorder %s112, %s113
    %p124 = scmp.eq.s32.totalorder %s14, 0
    %p125 = por %p123, %p124
    %p126 = scmp.ne.s32.totalorder %s112, %s113
    %p127 = scmp.eq.s32.totalorder %s15, 1
    %p128 = por %p126, %p127
    %p130 = scmp.ne.s32.totalorder %s113, %s129
    %p131 = scmp.eq.s32.totalorder %s15, 0
    %p132 = por %p130, %p131
    %s133 = ssub.s32 %s16, %s42
    %s134 = ssub.s32 %s18, %s34
    %s135 = sor.u32 %s133, %s134
    %s136 = ssub.s32 %s17, %s38
    %s137 = sor.u32 %s135, %s136
    %p138 = scmp.eq.s32.totalorder %s137, 0
    %s140 = sadd.s32 %s139, 1
    %s141 = scalar_select %p138, %s139, %s140
    %p144 = pneg %p138
    %p145 = scmp.eq.s32.totalorder %s9, 1
    %p146 = por %p144, %p145
    %p147 = scmp.ne.s32.totalorder %s139, %s142
    %p148 = scmp.eq.s32.totalorder %s9, 0
    %p149 = por %p147, %p148
    %p150 = scmp.ne.s32.totalorder %s139, %s142
    %p151 = scmp.eq.s32.totalorder %s14, 1
    %p152 = por %p150, %p151
    %p153 = scmp.ne.s32.totalorder %s142, %s143
    %p154 = scmp.eq.s32.totalorder %s14, 0
    %p155 = por %p153, %p154
    %p156 = scmp.ne.s32.totalorder %s142, %s143
    %p157 = scmp.eq.s32.totalorder %s15, 1
    %p158 = por %p156, %p157
    %p160 = scmp.ne.s32.totalorder %s143, %s159
    %p161 = scmp.eq.s32.totalorder %s15, 0
    %p162 = por %p160, %p161
    %p163 = scmp.le.s32.totalorder 1, %s9
    %p164 = scmp.lt.s32.totalorder %s9, 3
    %p165 = pnand %p163, %p164
    %p166 = pneg %p165
    // Predicated region
    $region9: #{whisper_decoder_layer.13} parent=5 // pred_check
      _
    $region10: #{whisper_decoder_layer.13} parent=5 // pred_check_branch
      %168 = sbr.rel (%p165) target = $region12
    $region11: #{whisper_decoder_layer.13} parent=5 // pred_region
      %s169 = ssub.s32 %s9, 1
    $region12: #{whisper_decoder_layer.13} parent=5 // pred_fallthru
      _
    %p170 = scmp.lt.s32.totalorder %s9, 2
    // Predicated region
    $region13: #{whisper_decoder_layer.13} parent=5 // pred_check
      %p171 = pneg %p170
    $region14: #{whisper_decoder_layer.13} parent=5 // pred_check_branch
      %173 = sbr.rel (%p171) target = $region16
    $region15: #{whisper_decoder_layer.13} parent=5 // pred_region
      // Predicated region
      $region17: #{whisper_decoder_layer.13} parent=15 // pred_check
        %p174 = pneg %p59
      $region18: #{whisper_decoder_layer.13} parent=15 // pred_check_branch
        %176 = sbr.rel (%p174) target = $region20
      $region19: #{whisper_decoder_layer.13} parent=15 // pred_region
        %p177 = scmp.lt.s32.totalorder %s16, 1
        %s178 = scalar_select %p177, %s16, 1
        %p179 = scmp.lt.s32.totalorder %s18, 0
        %s180 = scalar_select %p179, %s18, 0
        %p181 = scmp.lt.s32.totalorder %s17, 0
        %s182 = scalar_select %p181, %s17, 0
        %s183 = sadd.s32 %s182, %s180
        %s184 = sadd.s32 %s183, %s178
        %s185 = smul.addr %s184, 4
        %s186 = scalar_lea.vmem %s0, %s185
      $region20: #{whisper_decoder_layer.13} parent=15 // pred_fallthru
        _
      // Predicated region
      $region21: #{whisper_decoder_layer.13} parent=15 // pred_check
        %p187 = pneg %p89
      $region22: #{whisper_decoder_layer.13} parent=15 // pred_check_branch
        %189 = sbr.rel (%p187) target = $region24
      $region23: #{whisper_decoder_layer.13} parent=15 // pred_region
        %p190 = scmp.lt.s32.totalorder %s16, 1
        %s191 = scalar_select %p190, %s16, 1
        %p192 = scmp.lt.s32.totalorder %s19, 0
        %s193 = scalar_select %p192, %s19, 0
        %p194 = scmp.lt.s32.totalorder %s17, 0
        %s195 = scalar_select %p194, %s17, 0
        %s196 = sadd.s32 %s195, %s193
        %s197 = sadd.s32 %s196, %s191
        %s198 = smul.addr %s197, 4
        %s199 = scalar_lea.vmem %s1, %s198
      $region24: #{whisper_decoder_layer.13} parent=15 // pred_fallthru
        _
      // Predicated region
      $region25: #{whisper_decoder_layer.13} parent=15 // pred_check
        %p200 = pneg %p119
      $region26: #{whisper_decoder_layer.13} parent=15 // pred_check_branch
        %202 = sbr.rel (%p200) target = $region28
      $region27: #{whisper_decoder_layer.13} parent=15 // pred_region
        %p203 = scmp.lt.s32.totalorder %s16, 1
        %s204 = scalar_select %p203, %s16, 1
        %p205 = scmp.lt.s32.totalorder %s19, 0
        %s206 = scalar_select %p205, %s19, 0
        %p207 = scmp.lt.s32.totalorder %s17, 0
        %s208 = scalar_select %p207, %s17, 0
        %s209 = sadd.s32 %s208, %s206
        %s210 = sadd.s32 %s209, %s204
        %s211 = smul.addr %s210, 4
        %s212 = scalar_lea.vmem %s2, %s211
      $region28: #{whisper_decoder_layer.13} parent=15 // pred_fallthru
        _
    $region16: #{whisper_decoder_layer.13} parent=5 // pred_fallthru
      _
    %p213 = scmp.le.s32.totalorder 1, %s9
    %p214 = scmp.lt.s32.totalorder %s9, 3
    %p215 = pnand %p213, %p214
    %p216 = pneg %p215
    // Predicated region
    $region29: #{whisper_decoder_layer.13} parent=5 // pred_check
      _
    $region30: #{whisper_decoder_layer.13} parent=5 // pred_check_branch
      %218 = sbr.rel (%p215) target = $region32
    $region31: #{whisper_decoder_layer.13} parent=5 // pred_region
      %s219 = ssub.s32 %s9, 1
      %p220 = scmp.lt.s32.totalorder %s20, 1
      %s221 = scalar_select %p220, %s20, 1
      %p222 = scmp.lt.s32.totalorder %s22, 0
      %s223 = scalar_select %p222, %s22, 0
      %p224 = scmp.lt.s32.totalorder %s21, 0
      %s225 = scalar_select %p224, %s21, 0
      %s226 = sadd.s32 %s225, %s223
      %s227 = sadd.s32 %s226, %s221
      %s228 = smul.addr %s227, 4
      %s229 = scalar_lea.vmem %s0, %s228
      %p230 = pneg %p65
      %p231 = pneg %p62
      %p232 = scmp.lt.s32.totalorder %s20, 1
      %s233 = scalar_select %p232, %s20, 1
      %p234 = scmp.lt.s32.totalorder %s23, 0
      %s235 = scalar_select %p234, %s23, 0
      %p236 = scmp.lt.s32.totalorder %s21, 0
      %s237 = scalar_select %p236, %s21, 0
      %s238 = sadd.s32 %s237, %s235
      %s239 = sadd.s32 %s238, %s233
      %s240 = smul.addr %s239, 4
      %s241 = scalar_lea.vmem %s1, %s240
      %p242 = pneg %p95
      %p243 = pneg %p92
      %p244 = scmp.lt.s32.totalorder %s20, 1
      %s245 = scalar_select %p244, %s20, 1
      %p246 = scmp.lt.s32.totalorder %s23, 0
      %s247 = scalar_select %p246, %s23, 0
      %p248 = scmp.lt.s32.totalorder %s21, 0
      %s249 = scalar_select %p248, %s21, 0
      %s250 = sadd.s32 %s249, %s247
      %s251 = sadd.s32 %s250, %s245
      %s252 = smul.addr %s251, 4
      %s253 = scalar_lea.vmem %s2, %s252
      %p254 = pneg %p125
      %p255 = pneg %p122
      %p256 = pneg %p155
      %p257 = pneg %p152
      %p258 = scmp.lt.s32.totalorder %s20, 1
      %s259 = scalar_select %p258, %s20, 1
      %p260 = scmp.lt.s32.totalorder %s22, 0
      %s261 = scalar_select %p260, %s22, 0
      %p262 = scmp.lt.s32.totalorder %s21, 0
      %s263 = scalar_select %p262, %s21, 0
      %s264 = sadd.s32 %s263, %s261
      %s265 = sadd.s32 %s264, %s259
      %s266 = smul.addr %s265, 4
      %s267 = scalar_lea.vmem %s3, %s266
      %p268 = scmp.lt.s32.totalorder %s20, 1
      %s269 = scalar_select %p268, %s20, 1
      %p270 = scmp.lt.s32.totalorder %s22, 0
      %s271 = scalar_select %p270, %s22, 0
      %p272 = scmp.lt.s32.totalorder %s21, 0
      %s273 = scalar_select %p272, %s21, 0
      %s274 = sadd.s32 %s273, %s271
      %s275 = sadd.s32 %s274, %s269
      %s276 = smul.addr %s275, 4
      %s277 = scalar_lea.vmem %s0, %s276
      %p278 = scmp.lt.s32.totalorder %s20, 1
      %s279 = scalar_select %p278, %s20, 1
      %p280 = scmp.lt.s32.totalorder %s23, 0
      %s281 = scalar_select %p280, %s23, 0
      %p282 = scmp.lt.s32.totalorder %s21, 0
      %s283 = scalar_select %p282, %s21, 0
      %s284 = sadd.s32 %s283, %s281
      %s285 = sadd.s32 %s284, %s279
      %s286 = smul.addr %s285, 4
      %s287 = scalar_lea.vmem %s1, %s286
      %p288 = scmp.lt.s32.totalorder %s20, 1
      %s289 = scalar_select %p288, %s20, 1
      %p290 = scmp.lt.s32.totalorder %s23, 0
      %s291 = scalar_select %p290, %s23, 0
      %p292 = scmp.lt.s32.totalorder %s21, 0
      %s293 = scalar_select %p292, %s21, 0
      %s294 = sadd.s32 %s293, %s291
      %s295 = sadd.s32 %s294, %s289
      %s296 = smul.addr %s295, 4
      %s297 = scalar_lea.vmem %s2, %s296
      %p298 = scmp.lt.s32.totalorder %s20, 1
      %s299 = scalar_select %p298, %s20, 1
      %p300 = scmp.lt.s32.totalorder %s22, 0
      %s301 = scalar_select %p300, %s22, 0
      %p302 = scmp.lt.s32.totalorder %s21, 0
      %s303 = scalar_select %p302, %s21, 0
      %s304 = sadd.s32 %s303, %s301
      %s305 = sadd.s32 %s304, %s299
      %s306 = smul.addr %s305, 4
      %s307 = scalar_lea.vmem %s3, %s306
      %p309 = scmp.eq.s32.totalorder %s23, 0
      // Predicated region
      $region33: #{whisper_decoder_layer.13} parent=31 // pred_check
        %p310 = pneg %p309
      $region34: #{whisper_decoder_layer.13} parent=31 // pred_check_branch
        %312 = sbr.rel (%p310) target = $region36
      $region35: #{whisper_decoder_layer.13} parent=31 // pred_region
        %vm313 = vcmask 261120
        %314 = vst.msk [vmem:[#allocation2] sm:$0xff] %vm313, -1e+30
        %315 = vst.msk [vmem:[#allocation3] sm:$0xff] %vm313, 0.0
        %316 = vst.msk [vmem:[#allocation4] sm:$0xff] %vm313, 0.0
      $region36: #{whisper_decoder_layer.13} parent=31 // pred_fallthru
        _
      %v317 = vld [vmem:[%s277] sm:$0xf]
      %v318 = vld [vmem:[%s287] sm:$0xf]
      %v319 = vld [vmem:[%s297] sm:$0xf]
      %vm320 = vcmask 64512
      %v322 = vsel %vm320, %v317, 0
      %v325 = vsel %vm320, %v318, 0
      %327 = vmatprep.subr.bf16.mxu0 0
      %328 = vmatpush1.bf16.xpose.msra.mxu0 %v325
      %329 = vmatprep.subr.bf16.mxu0 0
      %330 = vmatpush1.bf16.xpose.msra.mxu0 0
      %331 = vmatprep.subr.bf16.mxu0 0
      %332 = vmatpush1.bf16.xpose.msra.mxu0 0
      %333 = vmatprep.subr.bf16.mxu0 0
      %334 = vmatpush1.bf16.xpose.msra.mxu0 0
      %335 = vmatprep.subr.bf16.mxu0 0
      %336 = vmatpush1.bf16.xpose.msra.mxu0 0
      %337 = vmatprep.subr.bf16.mxu0 0
      %338 = vmatpush1.bf16.xpose.msra.mxu0 0
      %339 = vmatprep.subr.bf16.mxu0 0
      %340 = vmatpush1.bf16.xpose.msra.mxu0 0
      %341 = vmatprep.subr.bf16.mxu0 0
      %342 = vmatpush1.bf16.xpose.msra.mxu0 0
      %343 = vmatprep.subr.bf16.mxu0 0
      %344 = vmatpush1.bf16.xpose.msra.mxu0 0
      %345 = vmatprep.subr.bf16.mxu0 0
      %346 = vmatpush1.bf16.xpose.msra.mxu0 0
      %347 = vmatprep.subr.bf16.mxu0 0
      %348 = vmatpush1.bf16.xpose.msra.mxu0 0
      %349 = vmatprep.subr.bf16.mxu0 0
      %350 = vmatpush1.bf16.xpose.msra.mxu0 0
      %351 = vmatprep.subr.bf16.mxu0 0
      %352 = vmatpush1.bf16.xpose.msra.mxu0 0
      %353 = vmatprep.subr.bf16.mxu0 0
      %354 = vmatpush1.bf16.xpose.msra.mxu0 0
      %355 = vmatprep.subr.bf16.mxu0 0
      %356 = vmatpush1.bf16.xpose.msra.mxu0 0
      %357 = vmatprep.subr.bf16.mxu0 0
      %358 = vmatpush1.bf16.xpose.msra.mxu0 0
      %359 = vmatprep.mubr.bf16.mxu0 0
      %360 = vmatmul.mubr.bf16.gmra.mrb[0].mxu0 %v322
      %v361 = vpop.f32.mrb[0].mxu0
      %v362 = vadd.f32 0.0, %v361
      %v363 = vpop.f32.mrb[0].mxu0
      %v364 = vpop.f32.mrb[0].mxu0
      %v365 = vpop.f32.mrb[0].mxu0
      %366 = vdwg.mxu0
      %v367 = vld [vmem:[#allocation2] sm:$0xff]
      %v368 = vsel %vm320, %v362, -inf
      %369 = vmax.xlane.f32.xlu0 %v368
      %v370 = vpop.xlane.xlu0 %369
      %v371 = vmax.f32 %v367, %v370
      %v372 = vsub.f32 %v367, %v371
      %v373 = vmul.f32 %v372, 1.442695
      %v374 = vpow.pop %v373
      %376 = vset.pattern.permute.xlu0 0
      %377 = vperm.xlu0 %376, %v371
      %v378 = vpop.permute.xlu0 %377
      %v380 = vsub.f32 %v362, %v378
      %v381 = vmul.f32 %v380, 1.442695
      %v382 = vpow.pop %v381
      %v383 = vld [vmem:[#allocation3] sm:$0xff]
      %v384 = vmul.f32 %v374, %v383
      %v385 = vsel %vm320, %v382, 0.0
      %386 = vadd.xlane.f32.xlu0 %v385
      %v387 = vpop.xlane.xlu0 %386
      %v388 = vadd.f32 %v384, %v387
      %389 = vst.msk [vmem:[#allocation3] sm:$0xff] %vm320, %v388
      %v390 = vld [vmem:[#allocation4] sm:$0xff]
      %v391 = vmul.f32 %v374, %v390
      %v392 = vpack.c.bf16 %v382, %v382
      %v394 = vsel %vm320, %v392, 0
      %vm396 = vcmask 1043456
      %v398 = vsel %vm396, %v319, 0
      %400 = vmatprep.subr.bf16.mxu0 0
      %401 = vmatpush1.bf16.msra.mxu0 %v398
      %402 = vmatprep.subr.bf16.mxu0 0
      %403 = vmatpush1.bf16.msra.mxu0 0
      %404 = vmatprep.subr.bf16.mxu0 0
      %405 = vmatpush1.bf16.msra.mxu0 0
      %406 = vmatprep.subr.bf16.mxu0 0
      %407 = vmatpush1.bf16.msra.mxu0 0
      %408 = vmatprep.subr.bf16.mxu0 0
      %409 = vmatpush1.bf16.msra.mxu0 0
      %410 = vmatprep.subr.bf16.mxu0 0
      %411 = vmatpush1.bf16.msra.mxu0 0
      %412 = vmatprep.subr.bf16.mxu0 0
      %413 = vmatpush1.bf16.msra.mxu0 0
      %414 = vmatprep.subr.bf16.mxu0 0
      %415 = vmatpush1.bf16.msra.mxu0 0
      %416 = vmatprep.subr.bf16.mxu0 0
      %417 = vmatpush1.bf16.msra.mxu0 0
      %418 = vmatprep.subr.bf16.mxu0 0
      %419 = vmatpush1.bf16.msra.mxu0 0
      %420 = vmatprep.subr.bf16.mxu0 0
      %421 = vmatpush1.bf16.msra.mxu0 0
      %422 = vmatprep.subr.bf16.mxu0 0
      %423 = vmatpush1.bf16.msra.mxu0 0
      %424 = vmatprep.subr.bf16.mxu0 0
      %425 = vmatpush1.bf16.msra.mxu0 0
      %426 = vmatprep.subr.bf16.mxu0 0
      %427 = vmatpush1.bf16.msra.mxu0 0
      %428 = vmatprep.subr.bf16.mxu0 0
      %429 = vmatpush1.bf16.msra.mxu0 0
      %430 = vmatprep.subr.bf16.mxu0 0
      %431 = vmatpush1.bf16.msra.mxu0 0
      %432 = vmatprep.mubr.bf16.mxu0 0
      %433 = vmatmul.mubr.bf16.gmra.mrb[0].mxu0 %v394
      %v434 = vpop.f32.mrb[0].mxu0
      %v435 = vadd.f32 0.0, %v434
      %v436 = vpop.f32.mrb[0].mxu0
      %v437 = vpop.f32.mrb[0].mxu0
      %v438 = vpop.f32.mrb[0].mxu0
      %439 = vdwg.mxu0
      %v440 = vadd.f32 %v391, %v435
      %441 = vst.msk [vmem:[#allocation4] sm:$0xff] %vm320, %v440
      %442 = vst.msk [vmem:[#allocation2] sm:$0xff] %vm320, %v371
      %v444 = vunpack.c.l.b16 %v317
      %v445 = vpack.c.b16 %v444, %v444
      %446 = vrot.lane.b32.xlu0 %v445, 120
      %v447 = vpop.permute.xlu0 %446
      %v449 = vunpack.c.l.b16 %v318
      %v450 = vpack.c.b16 %v449, %v449
      %451 = vrot.lane.b32.xlu0 %v450, 120
      %v452 = vpop.permute.xlu0 %451
      %v454 = vsel %vm320, %v447, 0
      %v457 = vsel %vm320, %v452, 0
      %459 = vmatprep.subr.bf16.mxu0 0
      %460 = vmatpush1.bf16.xpose.msra.mxu0 %v457
      %461 = vmatprep.subr.bf16.mxu0 0
      %462 = vmatpush1.bf16.xpose.msra.mxu0 0
      %463 = vmatprep.subr.bf16.mxu0 0
      %464 = vmatpush1.bf16.xpose.msra.mxu0 0
      %465 = vmatprep.subr.bf16.mxu0 0
      %466 = vmatpush1.bf16.xpose.msra.mxu0 0
      %467 = vmatprep.subr.bf16.mxu0 0
      %468 = vmatpush1.bf16.xpose.msra.mxu0 0
      %469 = vmatprep.subr.bf16.mxu0 0
      %470 = vmatpush1.bf16.xpose.msra.mxu0 0
      %471 = vmatprep.subr.bf16.mxu0 0
      %472 = vmatpush1.bf16.xpose.msra.mxu0 0
      %473 = vmatprep.subr.bf16.mxu0 0
      %474 = vmatpush1.bf16.xpose.msra.mxu0 0
      %475 = vmatprep.subr.bf16.mxu0 0
      %476 = vmatpush1.bf16.xpose.msra.mxu0 0
      %477 = vmatprep.subr.bf16.mxu0 0
      %478 = vmatpush1.bf16.xpose.msra.mxu0 0
      %479 = vmatprep.subr.bf16.mxu0 0
      %480 = vmatpush1.bf16.xpose.msra.mxu0 0
      %481 = vmatprep.subr.bf16.mxu0 0
      %482 = vmatpush1.bf16.xpose.msra.mxu0 0
      %483 = vmatprep.subr.bf16.mxu0 0
      %484 = vmatpush1.bf16.xpose.msra.mxu0 0
      %485 = vmatprep.subr.bf16.mxu0 0
      %486 = vmatpush1.bf16.xpose.msra.mxu0 0
      %487 = vmatprep.subr.bf16.mxu0 0
      %488 = vmatpush1.bf16.xpose.msra.mxu0 0
      %489 = vmatprep.subr.bf16.mxu0 0
      %490 = vmatpush1.bf16.xpose.msra.mxu0 0
      %491 = vmatprep.mubr.bf16.mxu0 0
      %492 = vmatmul.mubr.bf16.gmra.mrb[0].mxu0 %v454
      %v493 = vpop.f32.mrb[0].mxu0
      %v494 = vadd.f32 0.0, %v493
      %v495 = vpop.f32.mrb[0].mxu0
      %v496 = vpop.f32.mrb[0].mxu0
      %v497 = vpop.f32.mrb[0].mxu0
      %498 = vdwg.mxu0
      %v499 = vld [vmem:[#allocation2] sm:$0xff]
      %v500 = vsel %vm320, %v494, -inf
      %501 = vmax.xlane.f32.xlu0 %v500
      %v502 = vpop.xlane.xlu0 %501
      %v503 = vmax.f32 %v499, %v502
      %v504 = vsub.f32 %v499, %v503
      %v505 = vmul.f32 %v504, 1.442695
      %v506 = vpow.pop %v505
      %508 = vset.pattern.permute.xlu0 8
      %509 = vperm.xlu0 %508, %v503
      %v510 = vpop.permute.xlu0 %509
      %v512 = vsub.f32 %v494, %v510
      %v513 = vmul.f32 %v512, 1.442695
      %v514 = vpow.pop %v513
      %v515 = vld [vmem:[#allocation3] sm:$0xff]
      %v516 = vmul.f32 %v506, %v515
      %v517 = vsel %vm320, %v514, 0.0
      %518 = vadd.xlane.f32.xlu0 %v517
      %v519 = vpop.xlane.xlu0 %518
      %v520 = vadd.f32 %v516, %v519
      %vm521 = vcmask 130112
      %522 = vst.msk [vmem:[#allocation3] sm:$0xff] %vm521, %v520
      %v523 = vld [vmem:[#allocation4] sm:$0xff]
      %v524 = vmul.f32 %v506, %v523
      %v525 = vpack.c.bf16 %v514, %v514
      %v527 = vunpack.c.l.b16 %v319
      %v528 = vpack.c.b16 %v527, %v527
      %529 = vrot.lane.b32.xlu0 %v528, 120
      %v530 = vpop.permute.xlu0 %529
      %v532 = vsel %vm320, %v525, 0
      %v535 = vsel %vm396, %v530, 0
      %537 = vmatprep.subr.bf16.mxu0 0
      %538 = vmatpush1.bf16.msra.mxu0 %v535
      %539 = vmatprep.subr.bf16.mxu0 0
      %540 = vmatpush1.bf16.msra.mxu0 0
      %541 = vmatprep.subr.bf16.mxu0 0
      %542 = vmatpush1.bf16.msra.mxu0 0
      %543 = vmatprep.subr.bf16.mxu0 0
      %544 = vmatpush1.bf16.msra.mxu0 0
      %545 = vmatprep.subr.bf16.mxu0 0
      %546 = vmatpush1.bf16.msra.mxu0 0
      %547 = vmatprep.subr.bf16.mxu0 0
      %548 = vmatpush1.bf16.msra.mxu0 0
      %549 = vmatprep.subr.bf16.mxu0 0
      %550 = vmatpush1.bf16.msra.mxu0 0
      %551 = vmatprep.subr.bf16.mxu0 0
      %552 = vmatpush1.bf16.msra.mxu0 0
      %553 = vmatprep.subr.bf16.mxu0 0
      %554 = vmatpush1.bf16.msra.mxu0 0
      %555 = vmatprep.subr.bf16.mxu0 0
      %556 = vmatpush1.bf16.msra.mxu0 0
      %557 = vmatprep.subr.bf16.mxu0 0
      %558 = vmatpush1.bf16.msra.mxu0 0
      %559 = vmatprep.subr.bf16.mxu0 0
      %560 = vmatpush1.bf16.msra.mxu0 0
      %561 = vmatprep.subr.bf16.mxu0 0
      %562 = vmatpush1.bf16.msra.mxu0 0
      %563 = vmatprep.subr.bf16.mxu0 0
      %564 = vmatpush1.bf16.msra.mxu0 0
      %565 = vmatprep.subr.bf16.mxu0 0
      %566 = vmatpush1.bf16.msra.mxu0 0
      %567 = vmatprep.subr.bf16.mxu0 0
      %568 = vmatpush1.bf16.msra.mxu0 0
      %569 = vmatprep.mubr.bf16.mxu0 0
      %570 = vmatmul.mubr.bf16.gmra.mrb[0].mxu0 %v532
      %v571 = vpop.f32.mrb[0].mxu0
      %v572 = vadd.f32 0.0, %v571
      %v573 = vpop.f32.mrb[0].mxu0
      %v574 = vpop.f32.mrb[0].mxu0
      %v575 = vpop.f32.mrb[0].mxu0
      %576 = vdwg.mxu0
      %578 = vrot.lane.b32.xlu0 %v572, 8
      %v579 = vpop.permute.xlu0 %578
      %v581 = vadd.f32 %v524, %v579
      %582 = vst.msk [vmem:[#allocation4] sm:$0xff] %vm521, %v581
      %583 = vst.msk [vmem:[#allocation2] sm:$0xff] %vm521, %v503
      %584 = vrot.lane.b32.xlu0 %v445, 112
      %v585 = vpop.permute.xlu0 %584
      %586 = vrot.lane.b32.xlu0 %v450, 112
      %v587 = vpop.permute.xlu0 %586
      %v589 = vsel %vm320, %v585, 0
      %v592 = vsel %vm320, %v587, 0
      %594 = vmatprep.subr.bf16.mxu0 0
      %595 = vmatpush1.bf16.xpose.msra.mxu0 %v592
      %596 = vmatprep.subr.bf16.mxu0 0
      %597 = vmatpush1.bf16.xpose.msra.mxu0 0
      %598 = vmatprep.subr.bf16.mxu0 0
      %599 = vmatpush1.bf16.xpose.msra.mxu0 0
      %600 = vmatprep.subr.bf16.mxu0 0
      %601 = vmatpush1.bf16.xpose.msra.mxu0 0
      %602 = vmatprep.subr.bf16.mxu0 0
      %603 = vmatpush1.bf16.xpose.msra.mxu0 0
      %604 = vmatprep.subr.bf16.mxu0 0
      %605 = vmatpush1.bf16.xpose.msra.mxu0 0
      %606 = vmatprep.subr.bf16.mxu0 0
      %607 = vmatpush1.bf16.xpose.msra.mxu0 0
      %608 = vmatprep.subr.bf16.mxu0 0
      %609 = vmatpush1.bf16.xpose.msra.mxu0 0
      %610 = vmatprep.subr.bf16.mxu0 0
      %611 = vmatpush1.bf16.xpose.msra.mxu0 0
      %612 = vmatprep.subr.bf16.mxu0 0
      %613 = vmatpush1.bf16.xpose.msra.mxu0 0
      %614 = vmatprep.subr.bf16.mxu0 0
      %615 = vmatpush1.bf16.xpose.msra.mxu0 0
      %616 = vmatprep.subr.bf16.mxu0 0
      %617 = vmatpush1.bf16.xpose.msra.mxu0 0
      %618 = vmatprep.subr.bf16.mxu0 0
      %619 = vmatpush1.bf16.xpose.msra.mxu0 0
      %620 = vmatprep.subr.bf16.mxu0 0
      %621 = vmatpush1.bf16.xpose.msra.mxu0 0
      %622 = vmatprep.subr.bf16.mxu0 0
      %623 = vmatpush1.bf16.xpose.msra.mxu0 0
      %624 = vmatprep.subr.bf16.mxu0 0
      %625 = vmatpush1.bf16.xpose.msra.mxu0 0
      %626 = vmatprep.mubr.bf16.mxu0 0
      %627 = vmatmul.mubr.bf16.gmra.mrb[0].mxu0 %v589
      %v628 = vpop.f32.mrb[0].mxu0
      %v629 = vadd.f32 0.0, %v628
      %v630 = vpop.f32.mrb[0].mxu0
      %v631 = vpop.f32.mrb[0].mxu0
      %v632 = vpop.f32.mrb[0].mxu0
      %633 = vdwg.mxu0
      %v634 = vld [vmem:[#allocation2] sm:$0xff]
      %v635 = vsel %vm320, %v629, -inf
      %636 = vmax.xlane.f32.xlu0 %v635
      %v637 = vpop.xlane.xlu0 %636
      %v638 = vmax.f32 %v634, %v637
      %v639 = vsub.f32 %v634, %v638
      %v640 = vmul.f32 %v639, 1.442695
      %v641 = vpow.pop %v640
      %643 = vset.pattern.permute.xlu0 16
      %644 = vperm.xlu0 %643, %v638
      %v645 = vpop.permute.xlu0 %644
      %v647 = vsub.f32 %v629, %v645
      %v648 = vmul.f32 %v647, 1.442695
      %v649 = vpow.pop %v648
      %v650 = vld [vmem:[#allocation3] sm:$0xff]
      %v651 = vmul.f32 %v641, %v650
      %v652 = vsel %vm320, %v649, 0.0
      %653 = vadd.xlane.f32.xlu0 %v652
      %v654 = vpop.xlane.xlu0 %653
      %v655 = vadd.f32 %v651, %v654
      %vm656 = vcmask 195712
      %657 = vst.msk [vmem:[#allocation3] sm:$0xff] %vm656, %v655
      %v658 = vld [vmem:[#allocation4] sm:$0xff]
      %v659 = vmul.f32 %v641, %v658
      %v660 = vpack.c.bf16 %v649, %v649
      %661 = vrot.lane.b32.xlu0 %v528, 112
      %v662 = vpop.permute.xlu0 %661
      %v664 = vsel %vm320, %v660, 0
      %v667 = vsel %vm396, %v662, 0
      %669 = vmatprep.subr.bf16.mxu0 0
      %670 = vmatpush1.bf16.msra.mxu0 %v667
      %671 = vmatprep.subr.bf16.mxu0 0
      %672 = vmatpush1.bf16.msra.mxu0 0
      %673 = vmatprep.subr.bf16.mxu0 0
      %674 = vmatpush1.bf16.msra.mxu0 0
      %675 = vmatprep.subr.bf16.mxu0 0
      %676 = vmatpush1.bf16.msra.mxu0 0
      %677 = vmatprep.subr.bf16.mxu0 0
      %678 = vmatpush1.bf16.msra.mxu0 0
      %679 = vmatprep.subr.bf16.mxu0 0
      %680 = vmatpush1.bf16.msra.mxu0 0
      %681 = vmatprep.subr.bf16.mxu0 0
      %682 = vmatpush1.bf16.msra.mxu0 0
      %683 = vmatprep.subr.bf16.mxu0 0
      %684 = vmatpush1.bf16.msra.mxu0 0
      %685 = vmatprep.subr.bf16.mxu0 0
      %686 = vmatpush1.bf16.msra.mxu0 0
      %687 = vmatprep.subr.bf16.mxu0 0
      %688 = vmatpush1.bf16.msra.mxu0 0
      %689 = vmatprep.subr.bf16.mxu0 0
      %690 = vmatpush1.bf16.msra.mxu0 0
      %691 = vmatprep.subr.bf16.mxu0 0
      %692 = vmatpush1.bf16.msra.mxu0 0
      %693 = vmatprep.subr.bf16.mxu0 0
      %694 = vmatpush1.bf16.msra.mxu0 0
      %695 = vmatprep.subr.bf16.mxu0 0
      %696 = vmatpush1.bf16.msra.mxu0 0
      %697 = vmatprep.subr.bf16.mxu0 0
      %698 = vmatpush1.bf16.msra.mxu0 0
      %699 = vmatprep.subr.bf16.mxu0 0
      %700 = vmatpush1.bf16.msra.mxu0 0
      %701 = vmatprep.mubr.bf16.mxu0 0
      %702 = vmatmul.mubr.bf16.gmra.mrb[0].mxu0 %v664
      %v703 = vpop.f32.mrb[0].mxu0
      %v704 = vadd.f32 0.0, %v703
      %v705 = vpop.f32.mrb[0].mxu0
      %v706 = vpop.f32.mrb[0].mxu0
      %v707 = vpop.f32.mrb[0].mxu0
      %708 = vdwg.mxu0
      %710 = vrot.lane.b32.xlu0 %v704, 16
      %v711 = vpop.permute.xlu0 %710
      %v713 = vadd.f32 %v659, %v711
      %714 = vst.msk [vmem:[#allocation4] sm:$0xff] %vm656, %v713
      %715 = vst.msk [vmem:[#allocation2] sm:$0xff] %vm656, %v638
      %716 = vrot.lane.b32.xlu0 %v445, 104
      %v717 = vpop.permute.xlu0 %716
      %718 = vrot.lane.b32.xlu0 %v450, 104
      %v719 = vpop.permute.xlu0 %718
      %v721 = vsel %vm320, %v717, 0
      %v724 = vsel %vm320, %v719, 0
      %726 = vmatprep.subr.bf16.mxu0 0
      %727 = vmatpush1.bf16.xpose.msra.mxu0 %v724
      %728 = vmatprep.subr.bf16.mxu0 0
      %729 = vmatpush1.bf16.xpose.msra.mxu0 0
      %730 = vmatprep.subr.bf16.mxu0 0
      %731 = vmatpush1.bf16.xpose.msra.mxu0 0
      %732 = vmatprep.subr.bf16.mxu0 0
      %733 = vmatpush1.bf16.xpose.msra.mxu0 0
      %734 = vmatprep.subr.bf16.mxu0 0
      %735 = vmatpush1.bf16.xpose.msra.mxu0 0
      %736 = vmatprep.subr.bf16.mxu0 0
      %737 = vmatpush1.bf16.xpose.msra.mxu0 0
      %738 = vmatprep.subr.bf16.mxu0 0
      %739 = vmatpush1.bf16.xpose.msra.mxu0 0
      %740 = vmatprep.subr.bf16.mxu0 0
      %741 = vmatpush1.bf16.xpose.msra.mxu0 0
      %742 = vmatprep.subr.bf16.mxu0 0
      %743 = vmatpush1.bf16.xpose.msra.mxu0 0
      %744 = vmatprep.subr.bf16.mxu0 0
      %745 = vmatpush1.bf16.xpose.msra.mxu0 0
      %746 = vmatprep.subr.bf16.mxu0 0
      %747 = vmatpush1.bf16.xpose.msra.mxu0 0
      %748 = vmatprep.subr.bf16.mxu0 0
      %749 = vmatpush1.bf16.xpose.msra.mxu0 0
      %750 = vmatprep.subr.bf16.mxu0 0
      %751 = vmatpush1.bf16.xpose.msra.mxu0 0
      %752 = vmatprep.subr.bf16.mxu0 0
      %753 = vmatpush1.bf16.xpose.msra.mxu0 0
      %754 = vmatprep.subr.bf16.mxu0 0
      %755 = vmatpush1.bf16.xpose.msra.mxu0 0
      %756 = vmatprep.subr.bf16.mxu0 0
      %757 = vmatpush1.bf16.xpose.msra.mxu0 0
      %758 = vmatprep.mubr.bf16.mxu0 0
      %759 = vmatmul.mubr.bf16.gmra.mrb[0].mxu0 %v721
      %v760 = vpop.f32.mrb[0].mxu0
      %v761 = vadd.f32 0.0, %v760
      %v762 = vpop.f32.mrb[0].mxu0
      %v763 = vpop.f32.mrb[0].mxu0
      %v764 = vpop.f32.mrb[0].mxu0
      %765 = vdwg.mxu0
      %v766 = vld [vmem:[#allocation2] sm:$0xff]
      %v767 = vsel %vm320, %v761, -inf
      %768 = vmax.xlane.f32.xlu0 %v767
      %v769 = vpop.xlane.xlu0 %768
      %v770 = vmax.f32 %v766, %v769
      %v771 = vsub.f32 %v766, %v770
      %v772 = vmul.f32 %v771, 1.442695
      %v773 = vpow.pop %v772
      %775 = vset.pattern.permute.xlu0 24
      %776 = vperm.xlu0 %775, %v770
      %v777 = vpop.permute.xlu0 %776
      %v779 = vsub.f32 %v761, %v777
      %v780 = vmul.f32 %v779, 1.442695
      %v781 = vpow.pop %v780
      %v782 = vld [vmem:[#allocation3] sm:$0xff]
      %v783 = vmul.f32 %v773, %v782
      %v784 = vsel %vm320, %v781, 0.0
      %785 = vadd.xlane.f32.xlu0 %v784
      %v786 = vpop.xlane.xlu0 %785
      %v787 = vadd.f32 %v783, %v786
      %vm788 = vcmask 261312
      %789 = vst.msk [vmem:[#allocation3] sm:$0xff] %vm788, %v787
      %v790 = vld [vmem:[#allocation4] sm:$0xff]
      %v791 = vmul.f32 %v773, %v790
      %v792 = vpack.c.bf16 %v781, %v781
      %793 = vrot.lane.b32.xlu0 %v528, 104
      %v794 = vpop.permute.xlu0 %793
      %v796 = vsel %vm320, %v792, 0
      %v799 = vsel %vm396, %v794, 0
      %801 = vmatprep.subr.bf16.mxu0 0
      %802 = vmatpush1.bf16.msra.mxu0 %v799
      %803 = vmatprep.subr.bf16.mxu0 0
      %804 = vmatpush1.bf16.msra.mxu0 0
      %805 = vmatprep.subr.bf16.mxu0 0
      %806 = vmatpush1.bf16.msra.mxu0 0
      %807 = vmatprep.subr.bf16.mxu0 0
      %808 = vmatpush1.bf16.msra.mxu0 0
      %809 = vmatprep.subr.bf16.mxu0 0
      %810 = vmatpush1.bf16.msra.mxu0 0
      %811 = vmatprep.subr.bf16.mxu0 0
      %812 = vmatpush1.bf16.msra.mxu0 0
      %813 = vmatprep.subr.bf16.mxu0 0
      %814 = vmatpush1.bf16.msra.mxu0 0
      %815 = vmatprep.subr.bf16.mxu0 0
      %816 = vmatpush1.bf16.msra.mxu0 0
      %817 = vmatprep.subr.bf16.mxu0 0
      %818 = vmatpush1.bf16.msra.mxu0 0
      %819 = vmatprep.subr.bf16.mxu0 0
      %820 = vmatpush1.bf16.msra.mxu0 0
      %821 = vmatprep.subr.bf16.mxu0 0
      %822 = vmatpush1.bf16.msra.mxu0 0
      %823 = vmatprep.subr.bf16.mxu0 0
      %824 = vmatpush1.bf16.msra.mxu0 0
      %825 = vmatprep.subr.bf16.mxu0 0
      %826 = vmatpush1.bf16.msra.mxu0 0
      %827 = vmatprep.subr.bf16.mxu0 0
      %828 = vmatpush1.bf16.msra.mxu0 0
      %829 = vmatprep.subr.bf16.mxu0 0
      %830 = vmatpush1.bf16.msra.mxu0 0
      %831 = vmatprep.subr.bf16.mxu0 0
      %832 = vmatpush1.bf16.msra.mxu0 0
      %833 = vmatprep.mubr.bf16.mxu0 0
      %834 = vmatmul.mubr.bf16.gmra.mrb[0].mxu0 %v796
      %v835 = vpop.f32.mrb[0].mxu0
      %v836 = vadd.f32 0.0, %v835
      %v837 = vpop.f32.mrb[0].mxu0
      %v838 = vpop.f32.mrb[0].mxu0
      %v839 = vpop.f32.mrb[0].mxu0
      %840 = vdwg.mxu0
      %842 = vrot.lane.b32.xlu0 %v836, 24
      %v843 = vpop.permute.xlu0 %842
      %v845 = vadd.f32 %v791, %v843
      %846 = vst.msk [vmem:[#allocation4] sm:$0xff] %vm788, %v845
      %847 = vst.msk [vmem:[#allocation2] sm:$0xff] %vm788, %v770
      // Predicated region
      $region37: #{whisper_decoder_layer.13} parent=31 // pred_check
        %p848 = pneg %p309
      $region38: #{whisper_decoder_layer.13} parent=31 // pred_check_branch
        %850 = sbr.rel (%p848) target = $region40
      $region39: #{whisper_decoder_layer.13} parent=31 // pred_region
        %v851 = vld [vmem:[#allocation4] sm:$0xff]
        %v852 = vld [vmem:[#allocation3] sm:$0xff]
        %v853 = vrcp.pop %v852
        %v854 = vmul.f32 %v851, %v853
        %v855 = vpack.c.bf16 %v854, %v854
        %vm856 = vcmask 257024
        %857 = vst.msk [vmem:[%s307] sm:$0xf] %vm856, %v855
      $region40: #{whisper_decoder_layer.13} parent=31 // pred_fallthru
        _
      %p858 = scmp.lt.s32.totalorder %s20, 1
      %s859 = scalar_select %p858, %s20, 1
      %p860 = scmp.lt.s32.totalorder %s22, 0
      %s861 = scalar_select %p860, %s22, 0
      %p862 = scmp.lt.s32.totalorder %s21, 0
      %s863 = scalar_select %p862, %s21, 0
      %s864 = sadd.s32 %s863, %s861
      %s865 = sadd.s32 %s864, %s859
      %s866 = smul.addr %s865, 4
      %s867 = scalar_lea.vmem %s3, %s866
      // Predicated region
      $region41: #{whisper_decoder_layer.13} parent=31 // pred_check
        %p868 = pneg %p152
      $region42: #{whisper_decoder_layer.13} parent=31 // pred_check_branch
        %870 = sbr.rel (%p868) target = $region44
      $region43: #{whisper_decoder_layer.13} parent=31 // pred_region
        _
      $region44: #{whisper_decoder_layer.13} parent=31 // pred_fallthru
        _
    $region32: #{whisper_decoder_layer.13} parent=5 // pred_fallthru
      _
    %p871 = scmp.le.s32.totalorder 2, %s9
    // Predicated region
    $region45: #{whisper_decoder_layer.13} parent=5 // pred_check
      %p872 = pneg %p871
    $region46: #{whisper_decoder_layer.13} parent=5 // pred_check_branch
      %874 = sbr.rel (%p872) target = $region48
    $region47: #{whisper_decoder_layer.13} parent=5 // pred_region
      %s875 = ssub.s32 %s9, 2
      // Predicated region
      $region49: #{whisper_decoder_layer.13} parent=47 // pred_check
        %p876 = pneg %p158
      $region50: #{whisper_decoder_layer.13} parent=47 // pred_check_branch
        %878 = sbr.rel (%p876) target = $region52
      $region51: #{whisper_decoder_layer.13} parent=47 // pred_region
        %p879 = scmp.lt.s32.totalorder %s24, 1
        %s880 = scalar_select %p879, %s24, 1
        %p881 = scmp.lt.s32.totalorder %s26, 0
        %s882 = scalar_select %p881, %s26, 0
        %p883 = scmp.lt.s32.totalorder %s25, 0
        %s884 = scalar_select %p883, %s25, 0
        %s885 = sadd.s32 %s884, %s882
        %s886 = sadd.s32 %s885, %s880
        %s887 = smul.addr %s886, 4
        %s888 = scalar_lea.vmem %s3, %s887
      $region52: #{whisper_decoder_layer.13} parent=47 // pred_fallthru
        _
    $region48: #{whisper_decoder_layer.13} parent=5 // pred_fallthru
      _
  $region6: #{whisper_decoder_layer.13} parent=0 // loop_footer
    %s13 = sadd.s32 1, %s9
  $region7: #{whisper_decoder_layer.13} parent=0 // loop_footer_branch
    %8 = sbr.rel target = $region3
  $region8: #{whisper_decoder_layer.13} parent=0 // loop_exit
    _

</llo_original>
